<compile_context>
chip_gen: v7x
topology: tpu7x:2x2x1
jax: 0.10.0
libtpu: 0.0.40
codegen_flags: <defaults>
</compile_context>

<pallas_src>
import functools

import jax
import jax.numpy as jnp
from jax.experimental import pallas as pl
from jax.experimental.pallas import tpu as pltpu


# ---------------------------------------------------------------------------
# Fused 1x1 conv (channel matmul) + folded-BN bias + optional residual + ReLU.
# Grid: tiles of the flattened (B*H*W) pixel axis. The weight BlockSpec index
# is constant, so the (Cin, Cout) bf16 weight is fetched once and reused.
# ---------------------------------------------------------------------------
def _pointwise_kernel(x_ref, w_ref, b_ref, *rest, relu, has_residual):
    if has_residual:
        res_ref, o_ref = rest
    else:
        (o_ref,) = rest
    x = x_ref[...].astype(jnp.bfloat16)          # bf16 operands, f32 accumulate
    y = jnp.dot(x, w_ref[...], preferred_element_type=jnp.float32)
    y = y + b_ref[...]
    if has_residual:
        y = y + res_ref[...]
    if relu:
        y = jnp.maximum(y, 0.0)
    o_ref[...] = y


def conv1x1_bn(x, w, b, *, relu, residual=None):
    """x: (B,H,W,Cin) f32; w: (Cin,Cout) bf16 (BN scale folded); b: (Cout,) f32."""
    B, H, W, Cin = x.shape
    Cout = w.shape[1]
    M = B * H * W
    tm = min(256, M)
    while tm > 8 and M % tm:
        tm -= 8
    if M % tm:
        tm = M

    xf = x.reshape(M, Cin)
    in_specs = [
        pl.BlockSpec((tm, Cin), lambda i: (i, 0)),
        pl.BlockSpec((Cin, Cout), lambda i: (0, 0)),   # constant -> fetched once
        pl.BlockSpec((1, Cout), lambda i: (0, 0)),
    ]
    args = [xf, w, b.reshape(1, Cout)]
    if residual is not None:
        assert residual.shape == (B, H, W, Cout)
        in_specs.append(pl.BlockSpec((tm, Cout), lambda i: (i, 0)))
        args.append(residual.reshape(M, Cout))

    kernel = functools.partial(_pointwise_kernel, relu=relu,
                               has_residual=residual is not None)
    out = pl.pallas_call(
        kernel,
        out_shape=jax.ShapeDtypeStruct((M, Cout), jnp.float32),
        grid_spec=pltpu.PrefetchScalarGridSpec(
            num_scalar_prefetch=0,
            grid=(M // tm,),
            in_specs=in_specs,
            out_specs=pl.BlockSpec((tm, Cout), lambda i: (i, 0)),
        ),
        compiler_params=pltpu.CompilerParams(
            dimension_semantics=("parallel",)),
    )(*args)
    return out.reshape(B, H, W, Cout)


# ---------------------------------------------------------------------------
# Fused 3x3 "same" conv + folded-BN bias + ReLU.  Grid: (batch,).  The weight
# (3, 3*Cin, Cout) bf16 block index is constant -> DMA'd once, reused across
# the batch.  Per ky, the three kx-shifted windows are concatenated along
# channels so the contraction dim is 3*Cin (one matmul per ky, 3 total).
# ---------------------------------------------------------------------------
def _conv3x3_kernel(x_ref, w_ref, b_ref, o_ref, *, H, W, relu):
    Cin = x_ref.shape[-1]
    Cout = w_ref.shape[-1]
    acc = jnp.zeros((H * W, Cout), jnp.float32)
    for ky in range(3):
        patch = jnp.concatenate(
            [x_ref[0, ky:ky + H, kx:kx + W, :] for kx in range(3)], axis=-1)
        patch = patch.reshape(H * W, 3 * Cin).astype(jnp.bfloat16)
        acc = acc + jnp.dot(patch, w_ref[ky],
                            preferred_element_type=jnp.float32)
    y = acc + b_ref[...]
    if relu:
        y = jnp.maximum(y, 0.0)
    o_ref[0] = y.reshape(H, W, Cout)


def conv3x3_bn(x, w, b, *, relu=True):
    """x: (B,H,W,Cin) f32; w: (3, 3*Cin, Cout) bf16 (BN folded); b: (Cout,) f32."""
    B, H, W, Cin = x.shape
    Cout = w.shape[-1]
    xp = jnp.pad(x, ((0, 0), (1, 1), (1, 1), (0, 0)))      # "same" padding
    kernel = functools.partial(_conv3x3_kernel, H=H, W=W, relu=relu)
    return pl.pallas_call(
        kernel,
        out_shape=jax.ShapeDtypeStruct((B, H, W, Cout), jnp.float32),
        grid_spec=pltpu.PrefetchScalarGridSpec(
            num_scalar_prefetch=0,
            grid=(B,),
            in_specs=[
                pl.BlockSpec((1, H + 2, W + 2, Cin), lambda bi: (bi, 0, 0, 0)),
                pl.BlockSpec((3, 3 * Cin, Cout), lambda bi: (0, 0, 0)),  # reused
                pl.BlockSpec((1, Cout), lambda bi: (0, 0)),
            ],
            out_specs=pl.BlockSpec((1, H, W, Cout), lambda bi: (bi, 0, 0, 0)),
        ),
        compiler_params=pltpu.CompilerParams(
            dimension_semantics=("parallel",)),
    )(xp, w, b.reshape(1, Cout))


# ---------------------------------------------------------------------------
# Full Bottleneck forward (NCHW in / NCHW out, like the PyTorch module).
# ---------------------------------------------------------------------------
def bottleneck_forward(x_nchw, params):
    x = jnp.transpose(x_nchw, (0, 2, 3, 1))               # NCHW -> NHWC
    out = conv1x1_bn(x, params["w1"], params["b1"], relu=True)
    out = conv3x3_bn(out, params["w2"], params["b2"], relu=True)
    out = conv1x1_bn(out, params["w3"], params["b3"], relu=True, residual=x)
    return jnp.transpose(out, (0, 3, 1, 2))               # NHWC -> NCHW


# ---------------------------------------------------------------------------
# Parameter construction: raw f32 conv weights + BN stats, folded once into
# bf16 weights + f32 fused biases for the kernels.
# ---------------------------------------------------------------------------
def make_params(key, inplanes, planes, expansion=4, eps=1e-5):
    outplanes = planes * expansion
    ks = jax.random.split(key, 6)

    def bn_params(k, c):
        k1, k2, k3, k4 = jax.random.split(k, 4)
        gamma = jax.random.uniform(k1, (c,), jnp.float32, 0.5, 1.5)
        beta = 0.1 * jax.random.normal(k2, (c,), jnp.float32)
        mean = 0.1 * jax.random.normal(k3, (c,), jnp.float32)
        var = jax.random.uniform(k4, (c,), jnp.float32, 0.5, 1.5)
        return gamma, beta, mean, var

    raw = {
        "w1": (2.0 / inplanes) ** 0.5
              * jax.random.normal(ks[0], (inplanes, planes), jnp.float32),
        "w2": (2.0 / (9 * planes)) ** 0.5
              * jax.random.normal(ks[1], (3, 3, planes, planes), jnp.float32),
        "w3": (2.0 / planes) ** 0.5
              * jax.random.normal(ks[2], (planes, outplanes), jnp.float32),
        "bn1": bn_params(ks[3], planes),
        "bn2": bn_params(ks[4], planes),
        "bn3": bn_params(ks[5], outplanes),
    }

    def fold(w, bn):
        gamma, beta, mean, var = bn
        scale = gamma * jax.lax.rsqrt(var + eps)           # per-output-channel
        return ((w * scale).astype(jnp.bfloat16),
                (beta - mean * scale).astype(jnp.float32))

    w1, b1 = fold(raw["w1"], raw["bn1"])
    w2, b2 = fold(raw["w2"], raw["bn2"])
    w3, b3 = fold(raw["w3"], raw["bn3"])
    params = {
        "w1": w1, "b1": b1,
        # (3,3,Cin,Cout) -> (3, 3*Cin, Cout): (kx, c) flattened to match the
        # in-kernel channel-concatenation of kx-shifted windows.
        "w2": w2.reshape(3, 3 * planes, planes), "b2": b2,
        "w3": w3, "b3": b3,
    }
    return params, raw


# ---------------------------------------------------------------------------
# Pure-JAX f32 reference (eval-mode BatchNorm), mirrors the PyTorch forward.
# ---------------------------------------------------------------------------
def _bn_eval(y, bn, eps=1e-5):
    gamma, beta, mean, var = bn
    return (y - mean) * (gamma * jax.lax.rsqrt(var + eps)) + beta


def bottleneck_reference(x_nchw, raw):
    x = jnp.transpose(x_nchw, (0, 2, 3, 1))
    hi = jax.lax.Precision.HIGHEST
    y = jnp.einsum("bhwc,cd->bhwd", x, raw["w1"], precision=hi)
    y = jax.nn.relu(_bn_eval(y, raw["bn1"]))
    y = jax.lax.conv_general_dilated(
        y, raw["w2"], window_strides=(1, 1), padding="SAME",
        dimension_numbers=("NHWC", "HWIO", "NHWC"), precision=hi)
    y = jax.nn.relu(_bn_eval(y, raw["bn2"]))
    y = jnp.einsum("bhwc,cd->bhwd", y, raw["w3"], precision=hi)
    y = jax.nn.relu(_bn_eval(y, raw["bn3"]) + x)
    return jnp.transpose(y, (0, 3, 1, 2))


if __name__ == "__main__":
    # Small shapes consistent with the module: identity shortcut requires
    # inplanes == planes * expansion (downsample=None, stride=1).
    B, inplanes, planes, H, W = 2, 128, 32, 16, 16
    kx, kp = jax.random.split(jax.random.PRNGKey(0))
    x = jax.random.normal(kx, (B, inplanes, H, W), jnp.float32)
    params, raw = make_params(kp, inplanes, planes)

    out = jax.jit(bottleneck_forward)(x, params)
    jax.block_until_ready(out)

    assert out.shape == (B, inplanes, H, W) and out.dtype == jnp.float32
    assert bool(jnp.all(jnp.isfinite(out)))

    ref = bottleneck_reference(x, raw)
    err = float(jnp.max(jnp.abs(out - ref)))
    tol = 2e-2 * float(jnp.max(jnp.abs(ref))) + 2e-2   # bf16-operand tolerance
    assert err < tol, f"max abs err {err} (tol {tol})"
    print("KERNEL_OK")
</pallas_src>

<mosaic_0001>
module attributes {stable_mosaic.version = 11 : i64} {
  func.func @_pointwise_kernel(%arg0: i32, %arg1: memref<256x128xf32, #tpu.memory_space<vmem>>, %arg2: memref<128x32xbf16, #tpu.memory_space<vmem>>, %arg3: memref<1x32xf32, #tpu.memory_space<vmem>>, %arg4: memref<256x32xf32, #tpu.memory_space<vmem>>) attributes {dimension_semantics = [#tpu.dimension_semantics<parallel>], iteration_bounds = array<i64: 2>, scalar_prefetch = 0 : i64, scratch_operands = 0 : i64, tpu.core_type = #tpu.core_type<tc>, window_params = [{transform_indices = @transform_0, window_bounds = array<i64: 256, 128>}, {pipeline_mode = #tpu.pipeline_mode<synchronous>, transform_indices = @transform_1, window_bounds = array<i64: 128, 32>}, {pipeline_mode = #tpu.pipeline_mode<synchronous>, transform_indices = @transform_2, window_bounds = array<i64: 1, 32>}, {transform_indices = @transform_3, window_bounds = array<i64: 256, 32>}]} {
    %c0 = arith.constant 0 : index
    %c0_0 = arith.constant 0 : index
    %0 = vector.load %arg1[%c0, %c0_0] : memref<256x128xf32, #tpu.memory_space<vmem>>, vector<256x128xf32>
    %1 = arith.truncf %0 : vector<256x128xf32> to vector<256x128xbf16>
    %c0_1 = arith.constant 0 : index
    %c0_2 = arith.constant 0 : index
    %2 = vector.load %arg2[%c0_1, %c0_2] : memref<128x32xbf16, #tpu.memory_space<vmem>>, vector<128x32xbf16>
    %cst = arith.constant dense<0.000000e+00> : vector<256x32xf32>
    %3 = tpu.matmul %1, %2, %cst {dimension_numbers = #tpu.dot_dimension_numbers<[1], [0], [0], [1], [0, 0, 1, 1], [], []>} : vector<256x128xbf16>, vector<128x32xbf16>, vector<256x32xf32> -> vector<256x32xf32>
    %c0_3 = arith.constant 0 : index
    %c0_4 = arith.constant 0 : index
    %4 = vector.load %arg3[%c0_3, %c0_4] : memref<1x32xf32, #tpu.memory_space<vmem>>, vector<1x32xf32>
    %5 = vector.broadcast %4 : vector<1x32xf32> to vector<256x32xf32>
    %6 = arith.addf %3, %5 : vector<256x32xf32>
    %cst_5 = arith.constant 0.000000e+00 : f32
    %7 = vector.broadcast %cst_5 : f32 to vector<256x32xf32>
    %8 = arith.maximumf %6, %7 : vector<256x32xf32>
    %c0_6 = arith.constant 0 : index
    %c0_7 = arith.constant 0 : index
    %9 = vector.load %arg4[%c0_6, %c0_7] : memref<256x32xf32, #tpu.memory_space<vmem>>, vector<256x32xf32>
    tpu.vector_store %arg4[%c0_6, %c0_7], %8 {strides = array<i32>} : memref<256x32xf32, #tpu.memory_space<vmem>>, vector<256x32xf32>,
    return
  }
  func.func @transform_0(%arg0: i32) -> (i32, i32) {
    %c0_i32 = arith.constant 0 : i32
    %c0_i32_0 = arith.constant 0 : i32
    return %arg0, %c0_i32 : i32, i32
  }
  func.func @transform_1(%arg0: i32) -> (i32, i32) {
    %c0_i32 = arith.constant 0 : i32
    %c0_i32_0 = arith.constant 0 : i32
    %c0_i32_1 = arith.constant 0 : i32
    return %c0_i32, %c0_i32_0 : i32, i32
  }
  func.func @transform_2(%arg0: i32) -> (i32, i32) {
    %c0_i32 = arith.constant 0 : i32
    %c0_i32_0 = arith.constant 0 : i32
    %c0_i32_1 = arith.constant 0 : i32
    return %c0_i32, %c0_i32_0 : i32, i32
  }
  func.func @transform_3(%arg0: i32) -> (i32, i32) {
    %c0_i32 = arith.constant 0 : i32
    %c0_i32_0 = arith.constant 0 : i32
    return %arg0, %c0_i32 : i32, i32
  }
}

module attributes {stable_mosaic.version = 11 : i64} {
  func.func @_pointwise_kernel(%arg0: i32, %arg1: memref<256x32xf32, #tpu.memory_space<vmem>>, %arg2: memref<32x128xbf16, #tpu.memory_space<vmem>>, %arg3: memref<1x128xf32, #tpu.memory_space<vmem>>, %arg4: memref<256x128xf32, #tpu.memory_space<vmem>>, %arg5: memref<256x128xf32, #tpu.memory_space<vmem>>) attributes {dimension_semantics = [#tpu.dimension_semantics<parallel>], iteration_bounds = array<i64: 2>, scalar_prefetch = 0 : i64, scratch_operands = 0 : i64, tpu.core_type = #tpu.core_type<tc>, window_params = [{transform_indices = @transform_0, window_bounds = array<i64: 256, 32>}, {pipeline_mode = #tpu.pipeline_mode<synchronous>, transform_indices = @transform_1, window_bounds = array<i64: 32, 128>}, {pipeline_mode = #tpu.pipeline_mode<synchronous>, transform_indices = @transform_2, window_bounds = array<i64: 1, 128>}, {transform_indices = @transform_3, window_bounds = array<i64: 256, 128>}, {transform_indices = @transform_4, window_bounds = array<i64: 256, 128>}]} {
    %c0 = arith.constant 0 : index
    %c0_0 = arith.constant 0 : index
    %0 = vector.load %arg1[%c0, %c0_0] : memref<256x32xf32, #tpu.memory_space<vmem>>, vector<256x32xf32>
    %1 = arith.truncf %0 : vector<256x32xf32> to vector<256x32xbf16>
    %c0_1 = arith.constant 0 : index
    %c0_2 = arith.constant 0 : index
    %2 = vector.load %arg2[%c0_1, %c0_2] : memref<32x128xbf16, #tpu.memory_space<vmem>>, vector<32x128xbf16>
    %cst = arith.constant dense<0.000000e+00> : vector<256x128xf32>
    %3 = tpu.matmul %1, %2, %cst {dimension_numbers = #tpu.dot_dimension_numbers<[1], [0], [0], [1], [0, 0, 1, 1], [], []>} : vector<256x32xbf16>, vector<32x128xbf16>, vector<256x128xf32> -> vector<256x128xf32>
    %c0_3 = arith.constant 0 : index
    %c0_4 = arith.constant 0 : index
    %4 = vector.load %arg3[%c0_3, %c0_4] : memref<1x128xf32, #tpu.memory_space<vmem>>, vector<1x128xf32>
    %5 = vector.broadcast %4 : vector<1x128xf32> to vector<256x128xf32>
    %6 = arith.addf %3, %5 : vector<256x128xf32>
    %c0_5 = arith.constant 0 : index
    %c0_6 = arith.constant 0 : index
    %7 = vector.load %arg4[%c0_5, %c0_6] : memref<256x128xf32, #tpu.memory_space<vmem>>, vector<256x128xf32>
    %8 = arith.addf %6, %7 : vector<256x128xf32>
    %cst_7 = arith.constant 0.000000e+00 : f32
    %9 = vector.broadcast %cst_7 : f32 to vector<256x128xf32>
    %10 = arith.maximumf %8, %9 : vector<256x128xf32>
    %c0_8 = arith.constant 0 : index
    %c0_9 = arith.constant 0 : index
    %11 = vector.load %arg5[%c0_8, %c0_9] : memref<256x128xf32, #tpu.memory_space<vmem>>, vector<256x128xf32>
    tpu.vector_store %arg5[%c0_8, %c0_9], %10 {strides = array<i32>} : memref<256x128xf32, #tpu.memory_space<vmem>>, vector<256x128xf32>,
    return
  }
  func.func @transform_0(%arg0: i32) -> (i32, i32) {
    %c0_i32 = arith.constant 0 : i32
    %c0_i32_0 = arith.constant 0 : i32
    return %arg0, %c0_i32 : i32, i32
  }
  func.func @transform_1(%arg0: i32) -> (i32, i32) {
    %c0_i32 = arith.constant 0 : i32
    %c0_i32_0 = arith.constant 0 : i32
    %c0_i32_1 = arith.constant 0 : i32
    return %c0_i32, %c0_i32_0 : i32, i32
  }
  func.func @transform_2(%arg0: i32) -> (i32, i32) {
    %c0_i32 = arith.constant 0 : i32
    %c0_i32_0 = arith.constant 0 : i32
    %c0_i32_1 = arith.constant 0 : i32
    return %c0_i32, %c0_i32_0 : i32, i32
  }
  func.func @transform_3(%arg0: i32) -> (i32, i32) {
    %c0_i32 = arith.constant 0 : i32
    %c0_i32_0 = arith.constant 0 : i32
    return %arg0, %c0_i32 : i32, i32
  }
  func.func @transform_4(%arg0: i32) -> (i32, i32) {
    %c0_i32 = arith.constant 0 : i32
    %c0_i32_0 = arith.constant 0 : i32
    return %arg0, %c0_i32 : i32, i32
  }
}

module attributes {stable_mosaic.version = 11 : i64} {
  func.func @_conv3x3_kernel(%arg0: i32, %arg1: memref<1x18x18x32xf32, #tpu.memory_space<vmem>>, %arg2: memref<3x96x32xbf16, #tpu.memory_space<vmem>>, %arg3: memref<1x32xf32, #tpu.memory_space<vmem>>, %arg4: memref<1x16x16x32xf32, #tpu.memory_space<vmem>>) attributes {dimension_semantics = [#tpu.dimension_semantics<parallel>], iteration_bounds = array<i64: 2>, scalar_prefetch = 0 : i64, scratch_operands = 0 : i64, tpu.core_type = #tpu.core_type<tc>, window_params = [{transform_indices = @transform_0, window_bounds = array<i64: 1, 18, 18, 32>}, {pipeline_mode = #tpu.pipeline_mode<synchronous>, transform_indices = @transform_1, window_bounds = array<i64: 3, 96, 32>}, {pipeline_mode = #tpu.pipeline_mode<synchronous>, transform_indices = @transform_2, window_bounds = array<i64: 1, 32>}, {transform_indices = @transform_3, window_bounds = array<i64: 1, 16, 16, 32>}]} {
    %cst = arith.constant 0.000000e+00 : f32
    %0 = vector.broadcast %cst : f32 to vector<256x32xf32>
    %c0 = arith.constant 0 : index
    %c0_0 = arith.constant 0 : index
    %c0_1 = arith.constant 0 : index
    %c0_2 = arith.constant 0 : index
    %1 = vector.load %arg1[%c0, %c0_0, %c0_1, %c0_2] : memref<1x18x18x32xf32, #tpu.memory_space<vmem>>, vector<1x16x16x32xf32>
    %2 = vector.shape_cast %1 : vector<1x16x16x32xf32> to vector<16x16x32xf32>
    %c0_3 = arith.constant 0 : index
    %c0_4 = arith.constant 0 : index
    %c1 = arith.constant 1 : index
    %c0_5 = arith.constant 0 : index
    %3 = vector.load %arg1[%c0_3, %c0_4, %c1, %c0_5] : memref<1x18x18x32xf32, #tpu.memory_space<vmem>>, vector<1x16x16x32xf32>
    %4 = vector.shape_cast %3 : vector<1x16x16x32xf32> to vector<16x16x32xf32>
    %c0_6 = arith.constant 0 : index
    %c0_7 = arith.constant 0 : index
    %c2 = arith.constant 2 : index
    %c0_8 = arith.constant 0 : index
    %5 = vector.load %arg1[%c0_6, %c0_7, %c2, %c0_8] : memref<1x18x18x32xf32, #tpu.memory_space<vmem>>, vector<1x16x16x32xf32>
    %6 = vector.shape_cast %5 : vector<1x16x16x32xf32> to vector<16x16x32xf32>
    %7 = tpu.concatenate %2, %4, %6 in 2 : vector<16x16x32xf32>, vector<16x16x32xf32>, vector<16x16x32xf32> -> vector<16x16x96xf32>
    %8 = vector.shape_cast %7 : vector<16x16x96xf32> to vector<256x96xf32>
    %9 = arith.truncf %8 : vector<256x96xf32> to vector<256x96xbf16>
    %c0_9 = arith.constant 0 : index
    %c0_10 = arith.constant 0 : index
    %c0_11 = arith.constant 0 : index
    %10 = vector.load %arg2[%c0_9, %c0_10, %c0_11] : memref<3x96x32xbf16, #tpu.memory_space<vmem>>, vector<1x96x32xbf16>
    %11 = vector.shape_cast %10 : vector<1x96x32xbf16> to vector<96x32xbf16>
    %cst_12 = arith.constant dense<0.000000e+00> : vector<256x32xf32>
    %12 = tpu.matmul %9, %11, %cst_12 {dimension_numbers = #tpu.dot_dimension_numbers<[1], [0], [0], [1], [0, 0, 1, 1], [], []>} : vector<256x96xbf16>, vector<96x32xbf16>, vector<256x32xf32> -> vector<256x32xf32>
    %13 = arith.addf %0, %12 : vector<256x32xf32>
    %c0_13 = arith.constant 0 : index
    %c1_14 = arith.constant 1 : index
    %c0_15 = arith.constant 0 : index
    %c0_16 = arith.constant 0 : index
    %14 = vector.load %arg1[%c0_13, %c1_14, %c0_15, %c0_16] : memref<1x18x18x32xf32, #tpu.memory_space<vmem>>, vector<1x16x16x32xf32>
    %15 = vector.shape_cast %14 : vector<1x16x16x32xf32> to vector<16x16x32xf32>
    %c0_17 = arith.constant 0 : index
    %c1_18 = arith.constant 1 : index
    %c1_19 = arith.constant 1 : index
    %c0_20 = arith.constant 0 : index
    %16 = vector.load %arg1[%c0_17, %c1_18, %c1_19, %c0_20] : memref<1x18x18x32xf32, #tpu.memory_space<vmem>>, vector<1x16x16x32xf32>
    %17 = vector.shape_cast %16 : vector<1x16x16x32xf32> to vector<16x16x32xf32>
    %c0_21 = arith.constant 0 : index
    %c1_22 = arith.constant 1 : index
    %c2_23 = arith.constant 2 : index
    %c0_24 = arith.constant 0 : index
    %18 = vector.load %arg1[%c0_21, %c1_22, %c2_23, %c0_24] : memref<1x18x18x32xf32, #tpu.memory_space<vmem>>, vector<1x16x16x32xf32>
    %19 = vector.shape_cast %18 : vector<1x16x16x32xf32> to vector<16x16x32xf32>
    %20 = tpu.concatenate %15, %17, %19 in 2 : vector<16x16x32xf32>, vector<16x16x32xf32>, vector<16x16x32xf32> -> vector<16x16x96xf32>
    %21 = vector.shape_cast %20 : vector<16x16x96xf32> to vector<256x96xf32>
    %22 = arith.truncf %21 : vector<256x96xf32> to vector<256x96xbf16>
    %c1_25 = arith.constant 1 : index
    %c0_26 = arith.constant 0 : index
    %c0_27 = arith.constant 0 : index
    %23 = vector.load %arg2[%c1_25, %c0_26, %c0_27] : memref<3x96x32xbf16, #tpu.memory_space<vmem>>, vector<1x96x32xbf16>
    %24 = vector.shape_cast %23 : vector<1x96x32xbf16> to vector<96x32xbf16>
    %cst_28 = arith.constant dense<0.000000e+00> : vector<256x32xf32>
    %25 = tpu.matmul %22, %24, %cst_28 {dimension_numbers = #tpu.dot_dimension_numbers<[1], [0], [0], [1], [0, 0, 1, 1], [], []>} : vector<256x96xbf16>, vector<96x32xbf16>, vector<256x32xf32> -> vector<256x32xf32>
    %26 = arith.addf %13, %25 : vector<256x32xf32>
    %c0_29 = arith.constant 0 : index
    %c2_30 = arith.constant 2 : index
    %c0_31 = arith.constant 0 : index
    %c0_32 = arith.constant 0 : index
    %27 = vector.load %arg1[%c0_29, %c2_30, %c0_31, %c0_32] : memref<1x18x18x32xf32, #tpu.memory_space<vmem>>, vector<1x16x16x32xf32>
    %28 = vector.shape_cast %27 : vector<1x16x16x32xf32> to vector<16x16x32xf32>
    %c0_33 = arith.constant 0 : index
    %c2_34 = arith.constant 2 : index
    %c1_35 = arith.constant 1 : index
    %c0_36 = arith.constant 0 : index
    %29 = vector.load %arg1[%c0_33, %c2_34, %c1_35, %c0_36] : memref<1x18x18x32xf32, #tpu.memory_space<vmem>>, vector<1x16x16x32xf32>
    %30 = vector.shape_cast %29 : vector<1x16x16x32xf32> to vector<16x16x32xf32>
    %c0_37 = arith.constant 0 : index
    %c2_38 = arith.constant 2 : index
    %c2_39 = arith.constant 2 : index
    %c0_40 = arith.constant 0 : index
    %31 = vector.load %arg1[%c0_37, %c2_38, %c2_39, %c0_40] : memref<1x18x18x32xf32, #tpu.memory_space<vmem>>, vector<1x16x16x32xf32>
    %32 = vector.shape_cast %31 : vector<1x16x16x32xf32> to vector<16x16x32xf32>
    %33 = tpu.concatenate %28, %30, %32 in 2 : vector<16x16x32xf32>, vector<16x16x32xf32>, vector<16x16x32xf32> -> vector<16x16x96xf32>
    %34 = vector.shape_cast %33 : vector<16x16x96xf32> to vector<256x96xf32>
    %35 = arith.truncf %34 : vector<256x96xf32> to vector<256x96xbf16>
    %c2_41 = arith.constant 2 : index
    %c0_42 = arith.constant 0 : index
    %c0_43 = arith.constant 0 : index
    %36 = vector.load %arg2[%c2_41, %c0_42, %c0_43] : memref<3x96x32xbf16, #tpu.memory_space<vmem>>, vector<1x96x32xbf16>
    %37 = vector.shape_cast %36 : vector<1x96x32xbf16> to vector<96x32xbf16>
    %cst_44 = arith.constant dense<0.000000e+00> : vector<256x32xf32>
    %38 = tpu.matmul %35, %37, %cst_44 {dimension_numbers = #tpu.dot_dimension_numbers<[1], [0], [0], [1], [0, 0, 1, 1], [], []>} : vector<256x96xbf16>, vector<96x32xbf16>, vector<256x32xf32> -> vector<256x32xf32>
    %39 = arith.addf %26, %38 : vector<256x32xf32>
    %c0_45 = arith.constant 0 : index
    %c0_46 = arith.constant 0 : index
    %40 = vector.load %arg3[%c0_45, %c0_46] : memref<1x32xf32, #tpu.memory_space<vmem>>, vector<1x32xf32>
    %41 = vector.broadcast %40 : vector<1x32xf32> to vector<256x32xf32>
    %42 = arith.addf %39, %41 : vector<256x32xf32>
    %cst_47 = arith.constant 0.000000e+00 : f32
    %43 = vector.broadcast %cst_47 : f32 to vector<256x32xf32>
    %44 = arith.maximumf %42, %43 : vector<256x32xf32>
    %45 = vector.shape_cast %44 : vector<256x32xf32> to vector<16x16x32xf32>
    %c0_48 = arith.constant 0 : index
    %c0_49 = arith.constant 0 : index
    %c0_50 = arith.constant 0 : index
    %c0_51 = arith.constant 0 : index
    %46 = vector.load %arg4[%c0_48, %c0_49, %c0_50, %c0_51] : memref<1x16x16x32xf32, #tpu.memory_space<vmem>>, vector<1x16x16x32xf32>
    %47 = vector.shape_cast %46 : vector<1x16x16x32xf32> to vector<16x16x32xf32>
    %48 = vector.shape_cast %45 : vector<16x16x32xf32> to vector<1x16x16x32xf32>
    tpu.vector_store %arg4[%c0_48, %c0_49, %c0_50, %c0_51], %48 {strides = array<i32>} : memref<1x16x16x32xf32, #tpu.memory_space<vmem>>, vector<1x16x16x32xf32>,
    return
  }
  func.func @transform_0(%arg0: i32) -> (i32, i32, i32, i32) {
    %c0_i32 = arith.constant 0 : i32
    %c0_i32_0 = arith.constant 0 : i32
    %c0_i32_1 = arith.constant 0 : i32
    %c0_i32_2 = arith.constant 0 : i32
    return %arg0, %c0_i32, %c0_i32_0, %c0_i32_1 : i32, i32, i32, i32
  }
  func.func @transform_1(%arg0: i32) -> (i32, i32, i32) {
    %c0_i32 = arith.constant 0 : i32
    %c0_i32_0 = arith.constant 0 : i32
    %c0_i32_1 = arith.constant 0 : i32
    %c0_i32_2 = arith.constant 0 : i32
    return %c0_i32, %c0_i32_0, %c0_i32_1 : i32, i32, i32
  }
  func.func @transform_2(%arg0: i32) -> (i32, i32) {
    %c0_i32 = arith.constant 0 : i32
    %c0_i32_0 = arith.constant 0 : i32
    %c0_i32_1 = arith.constant 0 : i32
    return %c0_i32, %c0_i32_0 : i32, i32
  }
  func.func @transform_3(%arg0: i32) -> (i32, i32, i32, i32) {
    %c0_i32 = arith.constant 0 : i32
    %c0_i32_0 = arith.constant 0 : i32
    %c0_i32_1 = arith.constant 0 : i32
    %c0_i32_2 = arith.constant 0 : i32
    return %arg0, %c0_i32, %c0_i32_0, %c0_i32_1 : i32, i32, i32, i32
  }
}

</mosaic_0001>

<llo_original>
// kernel: bottleneck_forward.3
$region0: #{bottleneck_forward.3}
  #allocation0 [shape = 'u32[]', space=smem, size = 0x4, offset = 0x4, fixed_abs, tag = 'smem constant byte address 0x4 - core index']
  #allocation1 [shape = 'u32[144,128]{1,0:T(1,128)}', space=vmem, size = 0x12000, scoped, tag = 'internal scratch']
  %s0 = inlined_call_operand.hbm [shape: f32[512,128], index: 0, kind: input, shape index: {}]
  %s1 = inlined_call_operand.vmem [shape: bf16[128,32], index: 1, kind: input, shape index: {}]
  %s2 = inlined_call_operand.vmem [shape: f32[1,32], index: 2, kind: input, shape index: {}]
  %s3 = inlined_call_operand.vmem [shape: f32[512,32], index: 3, kind: output, shape index: {}]
  %s4 = sld [smem:[#allocation0]]
  $region49: #{bottleneck_forward.3} parent=0
    _
  %s6 = ssub.s32 1, %s4
  %s7 = scalar_select 0, %s6, %s4
  $region1: #{bottleneck_forward.3} parent=0
    #allocation2 [shape = 'u8[262144]{0}', space=vmem, size = 0x40000, scoped, tag = 'input window, operand 0']
    #allocation3 [shape = 's32[2]{0}', space=sflag, size = 0x8, scoped, tag = 'scoped memory for bottleneck_forward.3']
    %8 = vsyncpa [#allocation3], 0
    %s9 = scalar_lea.sflag [#allocation3], 1
    %10 = vsyncpa %s9, 0
    loop: start=0, step=1, limit=4
    $region2: #{bottleneck_forward.3} parent=1 // loop_pre_header
      _
    $region3: #{bottleneck_forward.3} parent=1 // loop_header
      %s12 = sphi 0, %s16
      %p13 = scmp.ge.s32.totalorder %s12, 4
      %s22 = sphi 0, %s24
      %s25 = sphi 0, %s22
      %s26 = sphi 0, %s25
      %s42 = sphi 0, %s26
      %s46 = sphi 0, %s46
      %s48 = sphi 0, %s46
      %s49 = sphi 0, %s48
      %s63 = sphi 0, %s49
      %s67 = sphi 0, %s67
      %s69 = sphi 0, %s67
      %s70 = sphi 0, %s69
      %s84 = sphi 0, %s70
      %s90 = sphi 0, %s92
      %s93 = sphi 0, %s90
      %s94 = sphi 0, %s93
      %s110 = sphi 0, %s94
    $region4: #{bottleneck_forward.3} parent=1 // loop_header_branch
      %15 = sbr.rel (%p13) target = $region8
    $region5: #{bottleneck_forward.3} parent=1 // loop_body
      %s17 = ssub.s32 %s12, 1
      %s18 = ssub.s32 %s12, 2
      %s19 = sadd.s32 %s12, 1
      %s20 = ssub.s32 %s12, %s19
      %p21 = scmp.eq.s32.totalorder %s20, 0
      %s23 = sadd.s32 %s22, 1
      %s24 = scalar_select %p21, %s22, %s23
      %p27 = pneg %p21
      %p28 = scmp.eq.s32.totalorder %s12, 1
      %p29 = por %p27, %p28
      %p30 = scmp.ne.s32.totalorder %s22, %s25
      %p31 = scmp.eq.s32.totalorder %s12, 0
      %p32 = por %p30, %p31
      %p33 = scmp.ne.s32.totalorder %s22, %s25
      %p34 = scmp.eq.s32.totalorder %s17, 1
      %p35 = por %p33, %p34
      %p36 = scmp.ne.s32.totalorder %s25, %s26
      %p37 = scmp.eq.s32.totalorder %s17, 0
      %p38 = por %p36, %p37
      %p39 = scmp.ne.s32.totalorder %s25, %s26
      %p40 = scmp.eq.s32.totalorder %s18, 1
      %p41 = por %p39, %p40
      %p43 = scmp.ne.s32.totalorder %s26, %s42
      %p44 = scmp.eq.s32.totalorder %s18, 0
      %p45 = por %p43, %p44
      %s47 = sadd.s32 %s46, 1
      %p50 = scmp.eq.s32.totalorder %s12, 1
      %p51 = scmp.ne.s32.totalorder %s46, %s48
      %p52 = scmp.eq.s32.totalorder %s12, 0
      %p53 = por %p51, %p52
      %p54 = scmp.ne.s32.totalorder %s46, %s48
      %p55 = scmp.eq.s32.totalorder %s17, 1
      %p56 = por %p54, %p55
      %p57 = scmp.ne.s32.totalorder %s48, %s49
      %p58 = scmp.eq.s32.totalorder %s17, 0
      %p59 = por %p57, %p58
      %p60 = scmp.ne.s32.totalorder %s48, %s49
      %p61 = scmp.eq.s32.totalorder %s18, 1
      %p62 = por %p60, %p61
      %p64 = scmp.ne.s32.totalorder %s49, %s63
      %p65 = scmp.eq.s32.totalorder %s18, 0
      %p66 = por %p64, %p65
      %s68 = sadd.s32 %s67, 1
      %p71 = scmp.eq.s32.totalorder %s12, 1
      %p72 = scmp.ne.s32.totalorder %s67, %s69
      %p73 = scmp.eq.s32.totalorder %s12, 0
      %p74 = por %p72, %p73
      %p75 = scmp.ne.s32.totalorder %s67, %s69
      %p76 = scmp.eq.s32.totalorder %s17, 1
      %p77 = por %p75, %p76
      %p78 = scmp.ne.s32.totalorder %s69, %s70
      %p79 = scmp.eq.s32.totalorder %s17, 0
      %p80 = por %p78, %p79
      %p81 = scmp.ne.s32.totalorder %s69, %s70
      %p82 = scmp.eq.s32.totalorder %s18, 1
      %p83 = por %p81, %p82
      %p85 = scmp.ne.s32.totalorder %s70, %s84
      %p86 = scmp.eq.s32.totalorder %s18, 0
      %p87 = por %p85, %p86
      %s88 = ssub.s32 %s12, %s19
      %p89 = scmp.eq.s32.totalorder %s88, 0
      %s91 = sadd.s32 %s90, 1
      %s92 = scalar_select %p89, %s90, %s91
      %p95 = pneg %p89
      %p96 = scmp.eq.s32.totalorder %s12, 1
      %p97 = por %p95, %p96
      %p98 = scmp.ne.s32.totalorder %s90, %s93
      %p99 = scmp.eq.s32.totalorder %s12, 0
      %p100 = por %p98, %p99
      %p101 = scmp.ne.s32.totalorder %s90, %s93
      %p102 = scmp.eq.s32.totalorder %s17, 1
      %p103 = por %p101, %p102
      %p104 = scmp.ne.s32.totalorder %s93, %s94
      %p105 = scmp.eq.s32.totalorder %s17, 0
      %p106 = por %p104, %p105
      %p107 = scmp.ne.s32.totalorder %s93, %s94
      %p108 = scmp.eq.s32.totalorder %s18, 1
      %p109 = por %p107, %p108
      %p111 = scmp.ne.s32.totalorder %s94, %s110
      %p112 = scmp.eq.s32.totalorder %s18, 0
      %p113 = por %p111, %p112
      %p114 = scmp.le.s32.totalorder 1, %s12
      %p115 = scmp.lt.s32.totalorder %s12, 3
      %p116 = pnand %p114, %p115
      %p117 = pneg %p116
      // Predicated region
      $region9: #{bottleneck_forward.3} parent=5 // pred_check
        _
      $region10: #{bottleneck_forward.3} parent=5 // pred_check_branch
        %119 = sbr.rel (%p116) target = $region12
      $region11: #{bottleneck_forward.3} parent=5 // pred_region
        %s120 = ssub.s32 %s12, 1
        // Predicated region
        $region13: #{bottleneck_forward.3} parent=11 // pred_check
          %p121 = pneg %p59
        $region14: #{bottleneck_forward.3} parent=11 // pred_check_branch
          %123 = sbr.rel (%p121) target = $region16
        $region15: #{bottleneck_forward.3} parent=11 // pred_region
          _
        $region16: #{bottleneck_forward.3} parent=11 // pred_fallthru
          _
        // Predicated region
        $region17: #{bottleneck_forward.3} parent=11 // pred_check
          %p124 = pneg %p80
        $region18: #{bottleneck_forward.3} parent=11 // pred_check_branch
          %126 = sbr.rel (%p124) target = $region20
        $region19: #{bottleneck_forward.3} parent=11 // pred_region
          _
        $region20: #{bottleneck_forward.3} parent=11 // pred_fallthru
          _
      $region12: #{bottleneck_forward.3} parent=5 // pred_fallthru
        _
      %p127 = scmp.lt.s32.totalorder %s12, 2
      // Predicated region
      $region21: #{bottleneck_forward.3} parent=5 // pred_check
        %p128 = pneg %p127
      $region22: #{bottleneck_forward.3} parent=5 // pred_check_branch
        %130 = sbr.rel (%p128) target = $region24
      $region23: #{bottleneck_forward.3} parent=5 // pred_region
        // Predicated region
        $region25: #{bottleneck_forward.3} parent=23 // pred_check
          %p131 = pneg %p32
        $region26: #{bottleneck_forward.3} parent=23 // pred_check_branch
          %133 = sbr.rel (%p131) target = $region28
        $region27: #{bottleneck_forward.3} parent=23 // pred_region
          %s134 = sand.u32 %s22, 1
          %s135 = scalar_lea.sflag [#allocation3], %s134
          %s136 = sand.u32 %s22, 1
          %s137 = smul.addr %s136, 256
          %s138 = scalar_lea.vmem [#allocation2], %s137
          %s139 = smul.u32 32, %s12
          %s141 = ssub.s32 4096, 4096
          %142 = vsyncadd %s135, %s141
          %s143 = smul.addr %s139, 128
          %s144 = scalar_lea.hbm %s0, %s143
          %s145 = sshll.u32 %s138, 4
          %s146 = int_to_ptr.vmem [resolvable:$true] %s145
          %151 = dma.hbm_to_vmem [thread:$0]  %s144, 4096, %s146, %s135, 128, 128, 8
        $region28: #{bottleneck_forward.3} parent=23 // pred_fallthru
          _
      $region24: #{bottleneck_forward.3} parent=5 // pred_fallthru
        _
      %p152 = scmp.le.s32.totalorder 1, %s12
      %p153 = scmp.lt.s32.totalorder %s12, 3
      %p154 = pnand %p152, %p153
      %p155 = pneg %p154
      // Predicated region
      $region29: #{bottleneck_forward.3} parent=5 // pred_check
        _
      $region30: #{bottleneck_forward.3} parent=5 // pred_check_branch
        %157 = sbr.rel (%p154) target = $region32
      $region31: #{bottleneck_forward.3} parent=5 // pred_region
        %s158 = ssub.s32 %s12, 1
        %s159 = sand.u32 %s25, 1
        %s160 = scalar_lea.sflag [#allocation3], %s159
        %s161 = sand.u32 %s25, 1
        %s162 = smul.addr %s161, 256
        %s163 = scalar_lea.vmem [#allocation2], %s162
        // Predicated region
        $region33: #{bottleneck_forward.3} parent=31 // pred_check
          %p164 = pneg %p38
        $region34: #{bottleneck_forward.3} parent=31 // pred_check_branch
          %166 = sbr.rel (%p164) target = $region36
        $region35: #{bottleneck_forward.3} parent=31 // pred_region
          %167 = dma.done %s160, 4096
        $region36: #{bottleneck_forward.3} parent=31 // pred_fallthru
          _
        %s168 = sand.u32 %s25, 1
        %s169 = scalar_lea.sflag [#allocation3], %s168
        %s170 = sand.u32 %s25, 1
        %s171 = smul.addr %s170, 256
        %s172 = scalar_lea.vmem [#allocation2], %s171
        %p173 = pneg %p38
        %p174 = pneg %p35
        %p175 = pneg %p59
        %p176 = pneg %p56
        %p177 = pneg %p80
        %p178 = pneg %p77
        %p179 = pneg %p106
        %p180 = pneg %p103
        %s181 = smul.u32 32, %s17
        %p182 = scmp.lt.s32.totalorder %s181, 63
        %s183 = scalar_select %p182, %s181, 63
        %s184 = smul.addr %s183, 8
        %s185 = scalar_lea.vmem %s3, %s184
        %s186 = smul.u32 32, %s17
        %s187 = smul.u32 32, %s17
        %p188 = scmp.lt.s32.totalorder %s187, 63
        %s189 = scalar_select %p188, %s187, 63
        %s190 = smul.addr %s189, 8
        %s191 = scalar_lea.vmem %s3, %s190
        %s192 = smul.u32 32, %s17
        %v194 = vld [vmem:[%s163] sm:$0xff]
        %v195 = vld [vmem:[%s163 + $0x8] sm:$0xff]
        %v196 = vld [vmem:[%s163 + $0x10] sm:$0xff]
        %v197 = vld [vmem:[%s163 + $0x18] sm:$0xff]
        %v198 = vld [vmem:[%s163 + $0x20] sm:$0xff]
        %v199 = vld [vmem:[%s163 + $0x28] sm:$0xff]
        %v200 = vld [vmem:[%s163 + $0x30] sm:$0xff]
        %v201 = vld [vmem:[%s163 + $0x38] sm:$0xff]
        %v202 = vld [vmem:[%s163 + $0x40] sm:$0xff]
        %v203 = vld [vmem:[%s163 + $0x48] sm:$0xff]
        %v204 = vld [vmem:[%s163 + $0x50] sm:$0xff]
        %v205 = vld [vmem:[%s163 + $0x58] sm:$0xff]
        %v206 = vld [vmem:[%s163 + $0x60] sm:$0xff]
        %v207 = vld [vmem:[%s163 + $0x68] sm:$0xff]
        %v208 = vld [vmem:[%s163 + $0x70] sm:$0xff]
        %v209 = vld [vmem:[%s163 + $0x78] sm:$0xff]
        %v210 = vld [vmem:[%s163 + $0x80] sm:$0xff]
        %v211 = vld [vmem:[%s163 + $0x88] sm:$0xff]
        %v212 = vld [vmem:[%s163 + $0x90] sm:$0xff]
        %v213 = vld [vmem:[%s163 + $0x98] sm:$0xff]
        %v214 = vld [vmem:[%s163 + $0xa0] sm:$0xff]
        %v215 = vld [vmem:[%s163 + $0xa8] sm:$0xff]
        %v216 = vld [vmem:[%s163 + $0xb0] sm:$0xff]
        %v217 = vld [vmem:[%s163 + $0xb8] sm:$0xff]
        %v218 = vld [vmem:[%s163 + $0xc0] sm:$0xff]
        %v219 = vld [vmem:[%s163 + $0xc8] sm:$0xff]
        %v220 = vld [vmem:[%s163 + $0xd0] sm:$0xff]
        %v221 = vld [vmem:[%s163 + $0xd8] sm:$0xff]
        %v222 = vld [vmem:[%s163 + $0xe0] sm:$0xff]
        %v223 = vld [vmem:[%s163 + $0xe8] sm:$0xff]
        %v224 = vld [vmem:[%s163 + $0xf0] sm:$0xff]
        %v225 = vld [vmem:[%s163 + $0xf8] sm:$0xff]
        %v226 = vpack.c.bf16 %v195, %v194
        %v227 = vpack.c.bf16 %v197, %v196
        %v228 = vpack.c.bf16 %v199, %v198
        %v229 = vpack.c.bf16 %v201, %v200
        %v230 = vpack.c.bf16 %v203, %v202
        %v231 = vpack.c.bf16 %v205, %v204
        %v232 = vpack.c.bf16 %v207, %v206
        %v233 = vpack.c.bf16 %v209, %v208
        %v234 = vpack.c.bf16 %v211, %v210
        %v235 = vpack.c.bf16 %v213, %v212
        %v236 = vpack.c.bf16 %v215, %v214
        %v237 = vpack.c.bf16 %v217, %v216
        %v238 = vpack.c.bf16 %v219, %v218
        %v239 = vpack.c.bf16 %v221, %v220
        %v240 = vpack.c.bf16 %v223, %v222
        %v241 = vpack.c.bf16 %v225, %v224
        %v242 = vld [vmem:[%s1] sm:$0xf]
        %v243 = vld [vmem:[%s1 + $0x4] sm:$0xf]
        %v244 = vld [vmem:[%s1 + $0x8] sm:$0xf]
        %v245 = vld [vmem:[%s1 + $0xc] sm:$0xf]
        %v246 = vld [vmem:[%s1 + $0x10] sm:$0xf]
        %v247 = vld [vmem:[%s1 + $0x14] sm:$0xf]
        %v248 = vld [vmem:[%s1 + $0x18] sm:$0xf]
        %v249 = vld [vmem:[%s1 + $0x1c] sm:$0xf]
        %v250 = vld [vmem:[%s1 + $0x20] sm:$0xf]
        %v251 = vld [vmem:[%s1 + $0x24] sm:$0xf]
        %v252 = vld [vmem:[%s1 + $0x28] sm:$0xf]
        %v253 = vld [vmem:[%s1 + $0x2c] sm:$0xf]
        %v254 = vld [vmem:[%s1 + $0x30] sm:$0xf]
        %v255 = vld [vmem:[%s1 + $0x34] sm:$0xf]
        %v256 = vld [vmem:[%s1 + $0x38] sm:$0xf]
        %v257 = vld [vmem:[%s1 + $0x3c] sm:$0xf]
        %v258 = vld [vmem:[%s2] sm:$0x1]
        %v260 = vlaneseq
        %v261 = vshrl.u32 %v260, 7
        %v262 = vsub.s32 0, %v261
        %v263 = vrot.slane %v258, %v262
        %v281 = vunpack.c.l.b16 %v242
        %v282 = vunpack.c.l.b16 %v243
        %v283 = vunpack.c.l.b16 %v244
        %v284 = vunpack.c.l.b16 %v245
        %v285 = vunpack.c.l.b16 %v246
        %v286 = vunpack.c.l.b16 %v247
        %v287 = vunpack.c.l.b16 %v248
        %v288 = vunpack.c.l.b16 %v249
        %v289 = vunpack.c.l.b16 %v250
        %v290 = vunpack.c.l.b16 %v251
        %v291 = vunpack.c.l.b16 %v252
        %v292 = vunpack.c.l.b16 %v253
        %v293 = vunpack.c.l.b16 %v254
        %v294 = vunpack.c.l.b16 %v255
        %v295 = vunpack.c.l.b16 %v256
        %v296 = vunpack.c.l.b16 %v257
        %v297 = vpack.c.b16 %v282, %v281
        %v298 = vpack.c.b16 %v284, %v283
        %v299 = vpack.c.b16 %v286, %v285
        %v300 = vpack.c.b16 %v288, %v287
        %v301 = vpack.c.b16 %v290, %v289
        %v302 = vpack.c.b16 %v292, %v291
        %v303 = vpack.c.b16 %v294, %v293
        %v304 = vpack.c.b16 %v296, %v295
        %313 = vmatprep.subr.bf16.mxu0 0
        %314 = vmatpush1.bf16.msra.mxu0 %v297
        %315 = vmatprep.subr.bf16.mxu0 0
        %316 = vmatpush1.bf16.msra.mxu0 %v298
        %317 = vmatprep.subr.bf16.mxu0 0
        %318 = vmatpush1.bf16.msra.mxu0 %v299
        %319 = vmatprep.subr.bf16.mxu0 0
        %320 = vmatpush1.bf16.msra.mxu0 %v300
        %321 = vmatprep.subr.bf16.mxu0 0
        %322 = vmatpush1.bf16.msra.mxu0 %v301
        %323 = vmatprep.subr.bf16.mxu0 0
        %324 = vmatpush1.bf16.msra.mxu0 %v302
        %325 = vmatprep.subr.bf16.mxu0 0
        %326 = vmatpush1.bf16.msra.mxu0 %v303
        %327 = vmatprep.subr.bf16.mxu0 0
        %328 = vmatpush1.bf16.msra.mxu0 %v304
        %329 = vmatprep.subr.bf16.mxu0 0
        %330 = vmatpush1.bf16.msra.mxu0 0
        %331 = vmatprep.subr.bf16.mxu0 0
        %332 = vmatpush1.bf16.msra.mxu0 0
        %333 = vmatprep.subr.bf16.mxu0 0
        %334 = vmatpush1.bf16.msra.mxu0 0
        %335 = vmatprep.subr.bf16.mxu0 0
        %336 = vmatpush1.bf16.msra.mxu0 0
        %337 = vmatprep.subr.bf16.mxu0 0
        %338 = vmatpush1.bf16.msra.mxu0 0
        %339 = vmatprep.subr.bf16.mxu0 0
        %340 = vmatpush1.bf16.msra.mxu0 0
        %341 = vmatprep.subr.bf16.mxu0 0
        %342 = vmatpush1.bf16.msra.mxu0 0
        %343 = vmatprep.subr.bf16.mxu0 0
        %344 = vmatpush1.bf16.msra.mxu0 0
        %345 = vmatprep.mubr.bf16.mxu0 0
        %346 = vmatmul.mubr.bf16.gmra.mrb[0].mxu0 %v226
        %v347 = vpop.f32.mrb[0].mxu0
        %v348 = vadd.f32 %v263, %v347
        %v349 = vpop.f32.mrb[0].mxu0
        %v350 = vpop.f32.mrb[0].mxu0
        %v351 = vadd.f32 %v263, %v350
        %v352 = vpop.f32.mrb[0].mxu0
        %353 = vmatprep.mubr.bf16.mxu0 0
        %354 = vmatmul.mubr.bf16.gmra.mrb[0].mxu0 %v227
        %v355 = vpop.f32.mrb[0].mxu0
        %v356 = vadd.f32 %v263, %v355
        %v357 = vpop.f32.mrb[0].mxu0
        %v358 = vpop.f32.mrb[0].mxu0
        %v359 = vadd.f32 %v263, %v358
        %v360 = vpop.f32.mrb[0].mxu0
        %361 = vmatprep.mubr.bf16.mxu0 0
        %362 = vmatmul.mubr.bf16.gmra.mrb[0].mxu0 %v228
        %v363 = vpop.f32.mrb[0].mxu0
        %v364 = vadd.f32 %v263, %v363
        %v365 = vpop.f32.mrb[0].mxu0
        %v366 = vpop.f32.mrb[0].mxu0
        %v367 = vadd.f32 %v263, %v366
        %v368 = vpop.f32.mrb[0].mxu0
        %369 = vmatprep.mubr.bf16.mxu0 0
        %370 = vmatmul.mubr.bf16.gmra.mrb[0].mxu0 %v229
        %v371 = vpop.f32.mrb[0].mxu0
        %v372 = vadd.f32 %v263, %v371
        %v373 = vpop.f32.mrb[0].mxu0
        %v374 = vpop.f32.mrb[0].mxu0
        %v375 = vadd.f32 %v263, %v374
        %v376 = vpop.f32.mrb[0].mxu0
        %377 = vmatprep.mubr.bf16.mxu0 0
        %378 = vmatmul.mubr.bf16.gmra.mrb[0].mxu0 %v230
        %v379 = vpop.f32.mrb[0].mxu0
        %v380 = vadd.f32 %v263, %v379
        %v381 = vpop.f32.mrb[0].mxu0
        %v382 = vpop.f32.mrb[0].mxu0
        %v383 = vadd.f32 %v263, %v382
        %v384 = vpop.f32.mrb[0].mxu0
        %385 = vmatprep.mubr.bf16.mxu0 0
        %386 = vmatmul.mubr.bf16.gmra.mrb[0].mxu0 %v231
        %v387 = vpop.f32.mrb[0].mxu0
        %v388 = vadd.f32 %v263, %v387
        %v389 = vpop.f32.mrb[0].mxu0
        %v390 = vpop.f32.mrb[0].mxu0
        %v391 = vadd.f32 %v263, %v390
        %v392 = vpop.f32.mrb[0].mxu0
        %393 = vmatprep.mubr.bf16.mxu0 0
        %394 = vmatmul.mubr.bf16.gmra.mrb[0].mxu0 %v232
        %v395 = vpop.f32.mrb[0].mxu0
        %v396 = vadd.f32 %v263, %v395
        %v397 = vpop.f32.mrb[0].mxu0
        %v398 = vpop.f32.mrb[0].mxu0
        %v399 = vadd.f32 %v263, %v398
        %v400 = vpop.f32.mrb[0].mxu0
        %401 = vmatprep.mubr.bf16.mxu0 0
        %402 = vmatmul.mubr.bf16.gmra.mrb[0].mxu0 %v233
        %v403 = vpop.f32.mrb[0].mxu0
        %v404 = vadd.f32 %v263, %v403
        %v405 = vpop.f32.mrb[0].mxu0
        %v406 = vpop.f32.mrb[0].mxu0
        %v407 = vadd.f32 %v263, %v406
        %v408 = vpop.f32.mrb[0].mxu0
        %409 = vmatprep.mubr.bf16.mxu0 0
        %410 = vmatmul.mubr.bf16.gmra.mrb[0].mxu0 %v234
        %v411 = vpop.f32.mrb[0].mxu0
        %v412 = vadd.f32 %v263, %v411
        %v413 = vpop.f32.mrb[0].mxu0
        %v414 = vpop.f32.mrb[0].mxu0
        %v415 = vadd.f32 %v263, %v414
        %v416 = vpop.f32.mrb[0].mxu0
        %417 = vmatprep.mubr.bf16.mxu0 0
        %418 = vmatmul.mubr.bf16.gmra.mrb[0].mxu0 %v235
        %v419 = vpop.f32.mrb[0].mxu0
        %v420 = vadd.f32 %v263, %v419
        %v421 = vpop.f32.mrb[0].mxu0
        %v422 = vpop.f32.mrb[0].mxu0
        %v423 = vadd.f32 %v263, %v422
        %v424 = vpop.f32.mrb[0].mxu0
        %425 = vmatprep.mubr.bf16.mxu0 0
        %426 = vmatmul.mubr.bf16.gmra.mrb[0].mxu0 %v236
        %v427 = vpop.f32.mrb[0].mxu0
        %v428 = vadd.f32 %v263, %v427
        %v429 = vpop.f32.mrb[0].mxu0
        %v430 = vpop.f32.mrb[0].mxu0
        %v431 = vadd.f32 %v263, %v430
        %v432 = vpop.f32.mrb[0].mxu0
        %433 = vmatprep.mubr.bf16.mxu0 0
        %434 = vmatmul.mubr.bf16.gmra.mrb[0].mxu0 %v237
        %v435 = vpop.f32.mrb[0].mxu0
        %v436 = vadd.f32 %v263, %v435
        %v437 = vpop.f32.mrb[0].mxu0
        %v438 = vpop.f32.mrb[0].mxu0
        %v439 = vadd.f32 %v263, %v438
        %v440 = vpop.f32.mrb[0].mxu0
        %441 = vmatprep.mubr.bf16.mxu0 0
        %442 = vmatmul.mubr.bf16.gmra.mrb[0].mxu0 %v238
        %v443 = vpop.f32.mrb[0].mxu0
        %v444 = vadd.f32 %v263, %v443
        %v445 = vpop.f32.mrb[0].mxu0
        %v446 = vpop.f32.mrb[0].mxu0
        %v447 = vadd.f32 %v263, %v446
        %v448 = vpop.f32.mrb[0].mxu0
        %449 = vmatprep.mubr.bf16.mxu0 0
        %450 = vmatmul.mubr.bf16.gmra.mrb[0].mxu0 %v239
        %v451 = vpop.f32.mrb[0].mxu0
        %v452 = vadd.f32 %v263, %v451
        %v453 = vpop.f32.mrb[0].mxu0
        %v454 = vpop.f32.mrb[0].mxu0
        %v455 = vadd.f32 %v263, %v454
        %v456 = vpop.f32.mrb[0].mxu0
        %457 = vmatprep.mubr.bf16.mxu0 0
        %458 = vmatmul.mubr.bf16.gmra.mrb[0].mxu0 %v240
        %v459 = vpop.f32.mrb[0].mxu0
        %v460 = vadd.f32 %v263, %v459
        %v461 = vpop.f32.mrb[0].mxu0
        %v462 = vpop.f32.mrb[0].mxu0
        %v463 = vadd.f32 %v263, %v462
        %v464 = vpop.f32.mrb[0].mxu0
        %465 = vmatprep.mubr.bf16.mxu0 0
        %466 = vmatmul.mubr.bf16.gmra.mrb[0].mxu0 %v241
        %v467 = vpop.f32.mrb[0].mxu0
        %v468 = vadd.f32 %v263, %v467
        %v469 = vpop.f32.mrb[0].mxu0
        %v470 = vpop.f32.mrb[0].mxu0
        %v471 = vadd.f32 %v263, %v470
        %v472 = vpop.f32.mrb[0].mxu0
        %473 = vdwg.mxu0
        %v474 = vmax.f32 %v348, 0.0
        %v475 = vmax.f32 %v351, 0.0
        %v476 = vmax.f32 %v356, 0.0
        %v477 = vmax.f32 %v359, 0.0
        %v478 = vmax.f32 %v364, 0.0
        %v479 = vmax.f32 %v367, 0.0
        %v480 = vmax.f32 %v372, 0.0
        %v481 = vmax.f32 %v375, 0.0
        %v482 = vmax.f32 %v380, 0.0
        %v483 = vmax.f32 %v383, 0.0
        %v484 = vmax.f32 %v388, 0.0
        %v485 = vmax.f32 %v391, 0.0
        %v486 = vmax.f32 %v396, 0.0
        %v487 = vmax.f32 %v399, 0.0
        %v488 = vmax.f32 %v404, 0.0
        %v489 = vmax.f32 %v407, 0.0
        %v490 = vmax.f32 %v412, 0.0
        %v491 = vmax.f32 %v415, 0.0
        %v492 = vmax.f32 %v420, 0.0
        %v493 = vmax.f32 %v423, 0.0
        %v494 = vmax.f32 %v428, 0.0
        %v495 = vmax.f32 %v431, 0.0
        %v496 = vmax.f32 %v436, 0.0
        %v497 = vmax.f32 %v439, 0.0
        %v498 = vmax.f32 %v444, 0.0
        %v499 = vmax.f32 %v447, 0.0
        %v500 = vmax.f32 %v452, 0.0
        %v501 = vmax.f32 %v455, 0.0
        %v502 = vmax.f32 %v460, 0.0
        %v503 = vmax.f32 %v463, 0.0
        %v504 = vmax.f32 %v468, 0.0
        %v505 = vmax.f32 %v471, 0.0
        %vm506 = vcmask 261120
        %507 = vst.msk [vmem:[%s191] sm:$0xff] %vm506, %v474
        %508 = vst.msk [vmem:[%s191 + $0x8] sm:$0xff] %vm506, %v475
        %509 = vst.msk [vmem:[%s191 + $0x10] sm:$0xff] %vm506, %v476
        %510 = vst.msk [vmem:[%s191 + $0x18] sm:$0xff] %vm506, %v477
        %511 = vst.msk [vmem:[%s191 + $0x20] sm:$0xff] %vm506, %v478
        %512 = vst.msk [vmem:[%s191 + $0x28] sm:$0xff] %vm506, %v479
        %513 = vst.msk [vmem:[%s191 + $0x30] sm:$0xff] %vm506, %v480
        %514 = vst.msk [vmem:[%s191 + $0x38] sm:$0xff] %vm506, %v481
        %515 = vst.msk [vmem:[%s191 + $0x40] sm:$0xff] %vm506, %v482
        %516 = vst.msk [vmem:[%s191 + $0x48] sm:$0xff] %vm506, %v483
        %517 = vst.msk [vmem:[%s191 + $0x50] sm:$0xff] %vm506, %v484
        %518 = vst.msk [vmem:[%s191 + $0x58] sm:$0xff] %vm506, %v485
        %519 = vst.msk [vmem:[%s191 + $0x60] sm:$0xff] %vm506, %v486
        %520 = vst.msk [vmem:[%s191 + $0x68] sm:$0xff] %vm506, %v487
        %521 = vst.msk [vmem:[%s191 + $0x70] sm:$0xff] %vm506, %v488
        %522 = vst.msk [vmem:[%s191 + $0x78] sm:$0xff] %vm506, %v489
        %523 = vst.msk [vmem:[%s191 + $0x80] sm:$0xff] %vm506, %v490
        %524 = vst.msk [vmem:[%s191 + $0x88] sm:$0xff] %vm506, %v491
        %525 = vst.msk [vmem:[%s191 + $0x90] sm:$0xff] %vm506, %v492
        %526 = vst.msk [vmem:[%s191 + $0x98] sm:$0xff] %vm506, %v493
        %527 = vst.msk [vmem:[%s191 + $0xa0] sm:$0xff] %vm506, %v494
        %528 = vst.msk [vmem:[%s191 + $0xa8] sm:$0xff] %vm506, %v495
        %529 = vst.msk [vmem:[%s191 + $0xb0] sm:$0xff] %vm506, %v496
        %530 = vst.msk [vmem:[%s191 + $0xb8] sm:$0xff] %vm506, %v497
        %531 = vst.msk [vmem:[%s191 + $0xc0] sm:$0xff] %vm506, %v498
        %532 = vst.msk [vmem:[%s191 + $0xc8] sm:$0xff] %vm506, %v499
        %533 = vst.msk [vmem:[%s191 + $0xd0] sm:$0xff] %vm506, %v500
        %534 = vst.msk [vmem:[%s191 + $0xd8] sm:$0xff] %vm506, %v501
        %535 = vst.msk [vmem:[%s191 + $0xe0] sm:$0xff] %vm506, %v502
        %536 = vst.msk [vmem:[%s191 + $0xe8] sm:$0xff] %vm506, %v503
        %537 = vst.msk [vmem:[%s191 + $0xf0] sm:$0xff] %vm506, %v504
        %538 = vst.msk [vmem:[%s191 + $0xf8] sm:$0xff] %vm506, %v505
        %s539 = smul.u32 32, %s17
        %p540 = scmp.lt.s32.totalorder %s539, 63
        %s541 = scalar_select %p540, %s539, 63
        %s542 = smul.addr %s541, 8
        %s543 = scalar_lea.vmem %s3, %s542
        // Predicated region
        $region37: #{bottleneck_forward.3} parent=31 // pred_check
          %p544 = pneg %p103
        $region38: #{bottleneck_forward.3} parent=31 // pred_check_branch
          %546 = sbr.rel (%p544) target = $region40
        $region39: #{bottleneck_forward.3} parent=31 // pred_region
          %s547 = smul.u32 32, %s17
        $region40: #{bottleneck_forward.3} parent=31 // pred_fallthru
          _
      $region32: #{bottleneck_forward.3} parent=5 // pred_fallthru
        _
      %p548 = scmp.le.s32.totalorder 2, %s12
      // Predicated region
      $region41: #{bottleneck_forward.3} parent=5 // pred_check
        %p549 = pneg %p548
      $region42: #{bottleneck_forward.3} parent=5 // pred_check_branch
        %551 = sbr.rel (%p549) target = $region44
      $region43: #{bottleneck_forward.3} parent=5 // pred_region
        %s552 = ssub.s32 %s12, 2
        // Predicated region
        $region45: #{bottleneck_forward.3} parent=43 // pred_check
          %p553 = pneg %p109
        $region46: #{bottleneck_forward.3} parent=43 // pred_check_branch
          %555 = sbr.rel (%p553) target = $region48
        $region47: #{bottleneck_forward.3} parent=43 // pred_region
          %s556 = smul.u32 32, %s18
          %p557 = scmp.lt.s32.totalorder %s556, 63
          %s558 = scalar_select %p557, %s556, 63
          %s559 = smul.addr %s558, 8
          %s560 = scalar_lea.vmem %s3, %s559
        $region48: #{bottleneck_forward.3} parent=43 // pred_fallthru
          _
      $region44: #{bottleneck_forward.3} parent=5 // pred_fallthru
        _
    $region6: #{bottleneck_forward.3} parent=1 // loop_footer
      %s16 = sadd.s32 1, %s12
    $region7: #{bottleneck_forward.3} parent=1 // loop_footer_branch
      %11 = sbr.rel target = $region3
    $region8: #{bottleneck_forward.3} parent=1 // loop_exit
      _
    %561 = vsyncpa [#allocation3], 1
    %s562 = scalar_lea.sflag [#allocation3], 1
    %563 = vsyncpa %s562, 1

// kernel: bottleneck_forward.5
$region0: #{bottleneck_forward.5}
  #allocation0 [shape = 'u32[]', space=smem, size = 0x4, offset = 0x4, fixed_abs, tag = 'smem constant byte address 0x4 - core index']
  #allocation1 [shape = 'u32[144,128]{1,0:T(1,128)}', space=vmem, size = 0x12000, scoped, tag = 'internal scratch']
  %s0 = inlined_call_operand.vmem [shape: f32[512,32], index: 0, kind: input, shape index: {}]
  %s1 = inlined_call_operand.vmem [shape: bf16[32,128], index: 1, kind: input, shape index: {}]
  %s2 = inlined_call_operand.vmem [shape: f32[1,128], index: 2, kind: input, shape index: {}]
  %s3 = inlined_call_operand.vmem [shape: f32[512,128], index: 3, kind: input, shape index: {}]
  %s4 = inlined_call_operand.hbm [shape: f32[512,128], index: 4, kind: output, shape index: {}]
  %s5 = sld [smem:[#allocation0]]
  $region49: #{bottleneck_forward.5} parent=0
    _
  %s7 = ssub.s32 1, %s5
  %s8 = scalar_select 0, %s7, %s5
  $region1: #{bottleneck_forward.5} parent=0
    #allocation2 [shape = 'u8[262144]{0}', space=vmem, size = 0x40000, scoped, tag = 'output window, operand 0']
    #allocation3 [shape = 's32[2]{0}', space=sflag, size = 0x8, scoped, tag = 'scoped memory for bottleneck_forward.5']
    %9 = vsyncpa [#allocation3], 0
    %s10 = scalar_lea.sflag [#allocation3], 1
    %11 = vsyncpa %s10, 0
    loop: start=0, step=1, limit=4
    $region2: #{bottleneck_forward.5} parent=1 // loop_pre_header
      _
    $region3: #{bottleneck_forward.5} parent=1 // loop_header
      %s13 = sphi 0, %s17
      %p14 = scmp.ge.s32.totalorder %s13, 4
      %s23 = sphi 0, %s25
      %s26 = sphi 0, %s23
      %s27 = sphi 0, %s26
      %s43 = sphi 0, %s27
      %s47 = sphi 0, %s47
      %s49 = sphi 0, %s47
      %s50 = sphi 0, %s49
      %s64 = sphi 0, %s50
      %s68 = sphi 0, %s68
      %s70 = sphi 0, %s68
      %s71 = sphi 0, %s70
      %s85 = sphi 0, %s71
      %s91 = sphi 0, %s93
      %s94 = sphi 0, %s91
      %s95 = sphi 0, %s94
      %s111 = sphi 0, %s95
      %s117 = sphi 0, %s119
      %s120 = sphi 0, %s117
      %s121 = sphi 0, %s120
      %s137 = sphi 0, %s121
    $region4: #{bottleneck_forward.5} parent=1 // loop_header_branch
      %16 = sbr.rel (%p14) target = $region8
    $region5: #{bottleneck_forward.5} parent=1 // loop_body
      %s18 = ssub.s32 %s13, 1
      %s19 = ssub.s32 %s13, 2
      %s20 = sadd.s32 %s13, 1
      %s21 = ssub.s32 %s13, %s20
      %p22 = scmp.eq.s32.totalorder %s21, 0
      %s24 = sadd.s32 %s23, 1
      %s25 = scalar_select %p22, %s23, %s24
      %p28 = pneg %p22
      %p29 = scmp.eq.s32.totalorder %s13, 1
      %p30 = por %p28, %p29
      %p31 = scmp.ne.s32.totalorder %s23, %s26
      %p32 = scmp.eq.s32.totalorder %s13, 0
      %p33 = por %p31, %p32
      %p34 = scmp.ne.s32.totalorder %s23, %s26
      %p35 = scmp.eq.s32.totalorder %s18, 1
      %p36 = por %p34, %p35
      %p37 = scmp.ne.s32.totalorder %s26, %s27
      %p38 = scmp.eq.s32.totalorder %s18, 0
      %p39 = por %p37, %p38
      %p40 = scmp.ne.s32.totalorder %s26, %s27
      %p41 = scmp.eq.s32.totalorder %s19, 1
      %p42 = por %p40, %p41
      %p44 = scmp.ne.s32.totalorder %s27, %s43
      %p45 = scmp.eq.s32.totalorder %s19, 0
      %p46 = por %p44, %p45
      %s48 = sadd.s32 %s47, 1
      %p51 = scmp.eq.s32.totalorder %s13, 1
      %p52 = scmp.ne.s32.totalorder %s47, %s49
      %p53 = scmp.eq.s32.totalorder %s13, 0
      %p54 = por %p52, %p53
      %p55 = scmp.ne.s32.totalorder %s47, %s49
      %p56 = scmp.eq.s32.totalorder %s18, 1
      %p57 = por %p55, %p56
      %p58 = scmp.ne.s32.totalorder %s49, %s50
      %p59 = scmp.eq.s32.totalorder %s18, 0
      %p60 = por %p58, %p59
      %p61 = scmp.ne.s32.totalorder %s49, %s50
      %p62 = scmp.eq.s32.totalorder %s19, 1
      %p63 = por %p61, %p62
      %p65 = scmp.ne.s32.totalorder %s50, %s64
      %p66 = scmp.eq.s32.totalorder %s19, 0
      %p67 = por %p65, %p66
      %s69 = sadd.s32 %s68, 1
      %p72 = scmp.eq.s32.totalorder %s13, 1
      %p73 = scmp.ne.s32.totalorder %s68, %s70
      %p74 = scmp.eq.s32.totalorder %s13, 0
      %p75 = por %p73, %p74
      %p76 = scmp.ne.s32.totalorder %s68, %s70
      %p77 = scmp.eq.s32.totalorder %s18, 1
      %p78 = por %p76, %p77
      %p79 = scmp.ne.s32.totalorder %s70, %s71
      %p80 = scmp.eq.s32.totalorder %s18, 0
      %p81 = por %p79, %p80
      %p82 = scmp.ne.s32.totalorder %s70, %s71
      %p83 = scmp.eq.s32.totalorder %s19, 1
      %p84 = por %p82, %p83
      %p86 = scmp.ne.s32.totalorder %s71, %s85
      %p87 = scmp.eq.s32.totalorder %s19, 0
      %p88 = por %p86, %p87
      %s89 = ssub.s32 %s13, %s20
      %p90 = scmp.eq.s32.totalorder %s89, 0
      %s92 = sadd.s32 %s91, 1
      %s93 = scalar_select %p90, %s91, %s92
      %p96 = pneg %p90
      %p97 = scmp.eq.s32.totalorder %s13, 1
      %p98 = por %p96, %p97
      %p99 = scmp.ne.s32.totalorder %s91, %s94
      %p100 = scmp.eq.s32.totalorder %s13, 0
      %p101 = por %p99, %p100
      %p102 = scmp.ne.s32.totalorder %s91, %s94
      %p103 = scmp.eq.s32.totalorder %s18, 1
      %p104 = por %p102, %p103
      %p105 = scmp.ne.s32.totalorder %s94, %s95
      %p106 = scmp.eq.s32.totalorder %s18, 0
      %p107 = por %p105, %p106
      %p108 = scmp.ne.s32.totalorder %s94, %s95
      %p109 = scmp.eq.s32.totalorder %s19, 1
      %p110 = por %p108, %p109
      %p112 = scmp.ne.s32.totalorder %s95, %s111
      %p113 = scmp.eq.s32.totalorder %s19, 0
      %p114 = por %p112, %p113
      %s115 = ssub.s32 %s13, %s20
      %p116 = scmp.eq.s32.totalorder %s115, 0
      %s118 = sadd.s32 %s117, 1
      %s119 = scalar_select %p116, %s117, %s118
      %p122 = pneg %p116
      %p123 = scmp.eq.s32.totalorder %s13, 1
      %p124 = por %p122, %p123
      %p125 = scmp.ne.s32.totalorder %s117, %s120
      %p126 = scmp.eq.s32.totalorder %s13, 0
      %p127 = por %p125, %p126
      %p128 = scmp.ne.s32.totalorder %s117, %s120
      %p129 = scmp.eq.s32.totalorder %s18, 1
      %p130 = por %p128, %p129
      %p131 = scmp.ne.s32.totalorder %s120, %s121
      %p132 = scmp.eq.s32.totalorder %s18, 0
      %p133 = por %p131, %p132
      %p134 = scmp.ne.s32.totalorder %s120, %s121
      %p135 = scmp.eq.s32.totalorder %s19, 1
      %p136 = por %p134, %p135
      %p138 = scmp.ne.s32.totalorder %s121, %s137
      %p139 = scmp.eq.s32.totalorder %s19, 0
      %p140 = por %p138, %p139
      %p141 = scmp.le.s32.totalorder 1, %s13
      %p142 = scmp.lt.s32.totalorder %s13, 3
      %p143 = pnand %p141, %p142
      %p144 = pneg %p143
      // Predicated region
      $region9: #{bottleneck_forward.5} parent=5 // pred_check
        _
      $region10: #{bottleneck_forward.5} parent=5 // pred_check_branch
        %146 = sbr.rel (%p143) target = $region12
      $region11: #{bottleneck_forward.5} parent=5 // pred_region
        %s147 = ssub.s32 %s13, 1
        // Predicated region
        $region13: #{bottleneck_forward.5} parent=11 // pred_check
          %p148 = pneg %p60
        $region14: #{bottleneck_forward.5} parent=11 // pred_check_branch
          %150 = sbr.rel (%p148) target = $region16
        $region15: #{bottleneck_forward.5} parent=11 // pred_region
          _
        $region16: #{bottleneck_forward.5} parent=11 // pred_fallthru
          _
        // Predicated region
        $region17: #{bottleneck_forward.5} parent=11 // pred_check
          %p151 = pneg %p81
        $region18: #{bottleneck_forward.5} parent=11 // pred_check_branch
          %153 = sbr.rel (%p151) target = $region20
        $region19: #{bottleneck_forward.5} parent=11 // pred_region
          _
        $region20: #{bottleneck_forward.5} parent=11 // pred_fallthru
          _
      $region12: #{bottleneck_forward.5} parent=5 // pred_fallthru
        _
      %p154 = scmp.lt.s32.totalorder %s13, 2
      // Predicated region
      $region21: #{bottleneck_forward.5} parent=5 // pred_check
        %p155 = pneg %p154
      $region22: #{bottleneck_forward.5} parent=5 // pred_check_branch
        %157 = sbr.rel (%p155) target = $region24
      $region23: #{bottleneck_forward.5} parent=5 // pred_region
        // Predicated region
        $region25: #{bottleneck_forward.5} parent=23 // pred_check
          %p158 = pneg %p33
        $region26: #{bottleneck_forward.5} parent=23 // pred_check_branch
          %160 = sbr.rel (%p158) target = $region28
        $region27: #{bottleneck_forward.5} parent=23 // pred_region
          %s161 = smul.u32 32, %s13
          %p162 = scmp.lt.s32.totalorder %s161, 63
          %s163 = scalar_select %p162, %s161, 63
          %s164 = smul.addr %s163, 8
          %s165 = scalar_lea.vmem %s0, %s164
          %s166 = smul.u32 32, %s13
        $region28: #{bottleneck_forward.5} parent=23 // pred_fallthru
          _
        // Predicated region
        $region29: #{bottleneck_forward.5} parent=23 // pred_check
          %p167 = pneg %p101
        $region30: #{bottleneck_forward.5} parent=23 // pred_check_branch
          %169 = sbr.rel (%p167) target = $region32
        $region31: #{bottleneck_forward.5} parent=23 // pred_region
          %s170 = smul.u32 32, %s13
          %p171 = scmp.lt.s32.totalorder %s170, 63
          %s172 = scalar_select %p171, %s170, 63
          %s173 = smul.addr %s172, 8
          %s174 = scalar_lea.vmem %s3, %s173
          %s175 = smul.u32 32, %s13
        $region32: #{bottleneck_forward.5} parent=23 // pred_fallthru
          _
      $region24: #{bottleneck_forward.5} parent=5 // pred_fallthru
        _
      %p176 = scmp.le.s32.totalorder 1, %s13
      %p177 = scmp.lt.s32.totalorder %s13, 3
      %p178 = pnand %p176, %p177
      %p179 = pneg %p178
      // Predicated region
      $region33: #{bottleneck_forward.5} parent=5 // pred_check
        _
      $region34: #{bottleneck_forward.5} parent=5 // pred_check_branch
        %181 = sbr.rel (%p178) target = $region36
      $region35: #{bottleneck_forward.5} parent=5 // pred_region
        %s182 = ssub.s32 %s13, 1
        %s183 = smul.u32 32, %s18
        %p184 = scmp.lt.s32.totalorder %s183, 63
        %s185 = scalar_select %p184, %s183, 63
        %s186 = smul.addr %s185, 8
        %s187 = scalar_lea.vmem %s0, %s186
        %p188 = pneg %p39
        %p189 = pneg %p36
        %p190 = pneg %p60
        %p191 = pneg %p57
        %p192 = pneg %p81
        %p193 = pneg %p78
        %s194 = smul.u32 32, %s18
        %p195 = scmp.lt.s32.totalorder %s194, 63
        %s196 = scalar_select %p195, %s194, 63
        %s197 = smul.addr %s196, 8
        %s198 = scalar_lea.vmem %s3, %s197
        %p199 = pneg %p107
        %p200 = pneg %p104
        %p201 = pneg %p133
        %p202 = pneg %p130
        %s203 = sand.u32 %s120, 1
        %s204 = scalar_lea.sflag [#allocation3], %s203
        %s205 = sand.u32 %s120, 1
        %s206 = smul.addr %s205, 256
        %s207 = scalar_lea.vmem [#allocation2], %s206
        %s208 = smul.u32 32, %s18
        %p209 = scmp.lt.s32.totalorder %s208, 63
        %s210 = scalar_select %p209, %s208, 63
        %s211 = smul.addr %s210, 8
        %s212 = scalar_lea.vmem %s0, %s211
        %s213 = smul.u32 32, %s18
        %s214 = smul.u32 32, %s18
        %p215 = scmp.lt.s32.totalorder %s214, 63
        %s216 = scalar_select %p215, %s214, 63
        %s217 = smul.addr %s216, 8
        %s218 = scalar_lea.vmem %s3, %s217
        %s219 = smul.u32 32, %s18
        %s220 = smul.u32 32, %s18
        %v222 = vld [vmem:[%s212] sm:$0xff]
        %v223 = vld [vmem:[%s212 + $0x8] sm:$0xff]
        %v224 = vld [vmem:[%s212 + $0x10] sm:$0xff]
        %v225 = vld [vmem:[%s212 + $0x18] sm:$0xff]
        %v226 = vld [vmem:[%s212 + $0x20] sm:$0xff]
        %v227 = vld [vmem:[%s212 + $0x28] sm:$0xff]
        %v228 = vld [vmem:[%s212 + $0x30] sm:$0xff]
        %v229 = vld [vmem:[%s212 + $0x38] sm:$0xff]
        %v230 = vld [vmem:[%s212 + $0x40] sm:$0xff]
        %v231 = vld [vmem:[%s212 + $0x48] sm:$0xff]
        %v232 = vld [vmem:[%s212 + $0x50] sm:$0xff]
        %v233 = vld [vmem:[%s212 + $0x58] sm:$0xff]
        %v234 = vld [vmem:[%s212 + $0x60] sm:$0xff]
        %v235 = vld [vmem:[%s212 + $0x68] sm:$0xff]
        %v236 = vld [vmem:[%s212 + $0x70] sm:$0xff]
        %v237 = vld [vmem:[%s212 + $0x78] sm:$0xff]
        %v238 = vld [vmem:[%s212 + $0x80] sm:$0xff]
        %v239 = vld [vmem:[%s212 + $0x88] sm:$0xff]
        %v240 = vld [vmem:[%s212 + $0x90] sm:$0xff]
        %v241 = vld [vmem:[%s212 + $0x98] sm:$0xff]
        %v242 = vld [vmem:[%s212 + $0xa0] sm:$0xff]
        %v243 = vld [vmem:[%s212 + $0xa8] sm:$0xff]
        %v244 = vld [vmem:[%s212 + $0xb0] sm:$0xff]
        %v245 = vld [vmem:[%s212 + $0xb8] sm:$0xff]
        %v246 = vld [vmem:[%s212 + $0xc0] sm:$0xff]
        %v247 = vld [vmem:[%s212 + $0xc8] sm:$0xff]
        %v248 = vld [vmem:[%s212 + $0xd0] sm:$0xff]
        %v249 = vld [vmem:[%s212 + $0xd8] sm:$0xff]
        %v250 = vld [vmem:[%s212 + $0xe0] sm:$0xff]
        %v251 = vld [vmem:[%s212 + $0xe8] sm:$0xff]
        %v252 = vld [vmem:[%s212 + $0xf0] sm:$0xff]
        %v253 = vld [vmem:[%s212 + $0xf8] sm:$0xff]
        %v254 = vpack.c.bf16 %v223, %v222
        %v255 = vpack.c.bf16 %v225, %v224
        %v256 = vpack.c.bf16 %v227, %v226
        %v257 = vpack.c.bf16 %v229, %v228
        %v258 = vpack.c.bf16 %v231, %v230
        %v259 = vpack.c.bf16 %v233, %v232
        %v260 = vpack.c.bf16 %v235, %v234
        %v261 = vpack.c.bf16 %v237, %v236
        %v262 = vpack.c.bf16 %v239, %v238
        %v263 = vpack.c.bf16 %v241, %v240
        %v264 = vpack.c.bf16 %v243, %v242
        %v265 = vpack.c.bf16 %v245, %v244
        %v266 = vpack.c.bf16 %v247, %v246
        %v267 = vpack.c.bf16 %v249, %v248
        %v268 = vpack.c.bf16 %v251, %v250
        %v269 = vpack.c.bf16 %v253, %v252
        %v270 = vld [vmem:[%s1] sm:$0xf]
        %v271 = vld [vmem:[%s1 + $0x4] sm:$0xf]
        %v272 = vld [vmem:[%s1 + $0x8] sm:$0xf]
        %v273 = vld [vmem:[%s1 + $0xc] sm:$0xf]
        %v274 = vld [vmem:[%s2] sm:$0x1]
        %v276 = vlaneseq
        %v277 = vshrl.u32 %v276, 7
        %v278 = vsub.s32 0, %v277
        %v279 = vrot.slane %v274, %v278
        %v285 = vunpack.c.l.b16 %v270
        %v286 = vunpack.c.l.b16 %v271
        %v287 = vunpack.c.l.b16 %v272
        %v288 = vunpack.c.l.b16 %v273
        %v289 = vpack.c.b16 %v286, %v285
        %v290 = vpack.c.b16 %v288, %v287
        %vm293 = vcmask 261120
        %v295 = vsel %vm293, %v254, 0
        %v298 = vsel %vm293, %v255, 0
        %v301 = vsel %vm293, %v256, 0
        %v304 = vsel %vm293, %v257, 0
        %v307 = vsel %vm293, %v258, 0
        %v310 = vsel %vm293, %v259, 0
        %v313 = vsel %vm293, %v260, 0
        %v316 = vsel %vm293, %v261, 0
        %v319 = vsel %vm293, %v262, 0
        %v322 = vsel %vm293, %v263, 0
        %v325 = vsel %vm293, %v264, 0
        %v328 = vsel %vm293, %v265, 0
        %v331 = vsel %vm293, %v266, 0
        %v334 = vsel %vm293, %v267, 0
        %v337 = vsel %vm293, %v268, 0
        %v340 = vsel %vm293, %v269, 0
        %342 = vmatprep.subr.bf16.mxu0 0
        %343 = vmatpush1.bf16.msra.mxu0 %v289
        %344 = vmatprep.subr.bf16.mxu0 0
        %345 = vmatpush1.bf16.msra.mxu0 %v290
        %346 = vmatprep.subr.bf16.mxu0 0
        %347 = vmatpush1.bf16.msra.mxu0 0
        %348 = vmatprep.subr.bf16.mxu0 0
        %349 = vmatpush1.bf16.msra.mxu0 0
        %350 = vmatprep.subr.bf16.mxu0 0
        %351 = vmatpush1.bf16.msra.mxu0 0
        %352 = vmatprep.subr.bf16.mxu0 0
        %353 = vmatpush1.bf16.msra.mxu0 0
        %354 = vmatprep.subr.bf16.mxu0 0
        %355 = vmatpush1.bf16.msra.mxu0 0
        %356 = vmatprep.subr.bf16.mxu0 0
        %357 = vmatpush1.bf16.msra.mxu0 0
        %358 = vmatprep.subr.bf16.mxu0 0
        %359 = vmatpush1.bf16.msra.mxu0 0
        %360 = vmatprep.subr.bf16.mxu0 0
        %361 = vmatpush1.bf16.msra.mxu0 0
        %362 = vmatprep.subr.bf16.mxu0 0
        %363 = vmatpush1.bf16.msra.mxu0 0
        %364 = vmatprep.subr.bf16.mxu0 0
        %365 = vmatpush1.bf16.msra.mxu0 0
        %366 = vmatprep.subr.bf16.mxu0 0
        %367 = vmatpush1.bf16.msra.mxu0 0
        %368 = vmatprep.subr.bf16.mxu0 0
        %369 = vmatpush1.bf16.msra.mxu0 0
        %370 = vmatprep.subr.bf16.mxu0 0
        %371 = vmatpush1.bf16.msra.mxu0 0
        %372 = vmatprep.subr.bf16.mxu0 0
        %373 = vmatpush1.bf16.msra.mxu0 0
        %374 = vmatprep.mubr.bf16.mxu0 0
        %375 = vmatmul.mubr.bf16.gmra.mrb[0].mxu0 %v295
        %v376 = vpop.f32.mrb[0].mxu0
        %v377 = vadd.f32 %v279, %v376
        %v378 = vpop.f32.mrb[0].mxu0
        %v379 = vpop.f32.mrb[0].mxu0
        %v380 = vadd.f32 %v279, %v379
        %v381 = vpop.f32.mrb[0].mxu0
        %382 = vmatprep.mubr.bf16.mxu0 0
        %383 = vmatmul.mubr.bf16.gmra.mrb[0].mxu0 %v298
        %v384 = vpop.f32.mrb[0].mxu0
        %v385 = vadd.f32 %v279, %v384
        %v386 = vpop.f32.mrb[0].mxu0
        %v387 = vpop.f32.mrb[0].mxu0
        %v388 = vadd.f32 %v279, %v387
        %v389 = vpop.f32.mrb[0].mxu0
        %390 = vmatprep.mubr.bf16.mxu0 0
        %391 = vmatmul.mubr.bf16.gmra.mrb[0].mxu0 %v301
        %v392 = vpop.f32.mrb[0].mxu0
        %v393 = vadd.f32 %v279, %v392
        %v394 = vpop.f32.mrb[0].mxu0
        %v395 = vpop.f32.mrb[0].mxu0
        %v396 = vadd.f32 %v279, %v395
        %v397 = vpop.f32.mrb[0].mxu0
        %398 = vmatprep.mubr.bf16.mxu0 0
        %399 = vmatmul.mubr.bf16.gmra.mrb[0].mxu0 %v304
        %v400 = vpop.f32.mrb[0].mxu0
        %v401 = vadd.f32 %v279, %v400
        %v402 = vpop.f32.mrb[0].mxu0
        %v403 = vpop.f32.mrb[0].mxu0
        %v404 = vadd.f32 %v279, %v403
        %v405 = vpop.f32.mrb[0].mxu0
        %406 = vmatprep.mubr.bf16.mxu0 0
        %407 = vmatmul.mubr.bf16.gmra.mrb[0].mxu0 %v307
        %v408 = vpop.f32.mrb[0].mxu0
        %v409 = vadd.f32 %v279, %v408
        %v410 = vpop.f32.mrb[0].mxu0
        %v411 = vpop.f32.mrb[0].mxu0
        %v412 = vadd.f32 %v279, %v411
        %v413 = vpop.f32.mrb[0].mxu0
        %414 = vmatprep.mubr.bf16.mxu0 0
        %415 = vmatmul.mubr.bf16.gmra.mrb[0].mxu0 %v310
        %v416 = vpop.f32.mrb[0].mxu0
        %v417 = vadd.f32 %v279, %v416
        %v418 = vpop.f32.mrb[0].mxu0
        %v419 = vpop.f32.mrb[0].mxu0
        %v420 = vadd.f32 %v279, %v419
        %v421 = vpop.f32.mrb[0].mxu0
        %422 = vmatprep.mubr.bf16.mxu0 0
        %423 = vmatmul.mubr.bf16.gmra.mrb[0].mxu0 %v313
        %v424 = vpop.f32.mrb[0].mxu0
        %v425 = vadd.f32 %v279, %v424
        %v426 = vpop.f32.mrb[0].mxu0
        %v427 = vpop.f32.mrb[0].mxu0
        %v428 = vadd.f32 %v279, %v427
        %v429 = vpop.f32.mrb[0].mxu0
        %430 = vmatprep.mubr.bf16.mxu0 0
        %431 = vmatmul.mubr.bf16.gmra.mrb[0].mxu0 %v316
        %v432 = vpop.f32.mrb[0].mxu0
        %v433 = vadd.f32 %v279, %v432
        %v434 = vpop.f32.mrb[0].mxu0
        %v435 = vpop.f32.mrb[0].mxu0
        %v436 = vadd.f32 %v279, %v435
        %v437 = vpop.f32.mrb[0].mxu0
        %438 = vmatprep.mubr.bf16.mxu0 0
        %439 = vmatmul.mubr.bf16.gmra.mrb[0].mxu0 %v319
        %v440 = vpop.f32.mrb[0].mxu0
        %v441 = vadd.f32 %v279, %v440
        %v442 = vpop.f32.mrb[0].mxu0
        %v443 = vpop.f32.mrb[0].mxu0
        %v444 = vadd.f32 %v279, %v443
        %v445 = vpop.f32.mrb[0].mxu0
        %446 = vmatprep.mubr.bf16.mxu0 0
        %447 = vmatmul.mubr.bf16.gmra.mrb[0].mxu0 %v322
        %v448 = vpop.f32.mrb[0].mxu0
        %v449 = vadd.f32 %v279, %v448
        %v450 = vpop.f32.mrb[0].mxu0
        %v451 = vpop.f32.mrb[0].mxu0
        %v452 = vadd.f32 %v279, %v451
        %v453 = vpop.f32.mrb[0].mxu0
        %454 = vmatprep.mubr.bf16.mxu0 0
        %455 = vmatmul.mubr.bf16.gmra.mrb[0].mxu0 %v325
        %v456 = vpop.f32.mrb[0].mxu0
        %v457 = vadd.f32 %v279, %v456
        %v458 = vpop.f32.mrb[0].mxu0
        %v459 = vpop.f32.mrb[0].mxu0
        %v460 = vadd.f32 %v279, %v459
        %v461 = vpop.f32.mrb[0].mxu0
        %462 = vmatprep.mubr.bf16.mxu0 0
        %463 = vmatmul.mubr.bf16.gmra.mrb[0].mxu0 %v328
        %v464 = vpop.f32.mrb[0].mxu0
        %v465 = vadd.f32 %v279, %v464
        %v466 = vpop.f32.mrb[0].mxu0
        %v467 = vpop.f32.mrb[0].mxu0
        %v468 = vadd.f32 %v279, %v467
        %v469 = vpop.f32.mrb[0].mxu0
        %470 = vmatprep.mubr.bf16.mxu0 0
        %471 = vmatmul.mubr.bf16.gmra.mrb[0].mxu0 %v331
        %v472 = vpop.f32.mrb[0].mxu0
        %v473 = vadd.f32 %v279, %v472
        %v474 = vpop.f32.mrb[0].mxu0
        %v475 = vpop.f32.mrb[0].mxu0
        %v476 = vadd.f32 %v279, %v475
        %v477 = vpop.f32.mrb[0].mxu0
        %478 = vmatprep.mubr.bf16.mxu0 0
        %479 = vmatmul.mubr.bf16.gmra.mrb[0].mxu0 %v334
        %v480 = vpop.f32.mrb[0].mxu0
        %v481 = vadd.f32 %v279, %v480
        %v482 = vpop.f32.mrb[0].mxu0
        %v483 = vpop.f32.mrb[0].mxu0
        %v484 = vadd.f32 %v279, %v483
        %v485 = vpop.f32.mrb[0].mxu0
        %486 = vmatprep.mubr.bf16.mxu0 0
        %487 = vmatmul.mubr.bf16.gmra.mrb[0].mxu0 %v337
        %v488 = vpop.f32.mrb[0].mxu0
        %v489 = vadd.f32 %v279, %v488
        %v490 = vpop.f32.mrb[0].mxu0
        %v491 = vpop.f32.mrb[0].mxu0
        %v492 = vadd.f32 %v279, %v491
        %v493 = vpop.f32.mrb[0].mxu0
        %494 = vmatprep.mubr.bf16.mxu0 0
        %495 = vmatmul.mubr.bf16.gmra.mrb[0].mxu0 %v340
        %v496 = vpop.f32.mrb[0].mxu0
        %v497 = vadd.f32 %v279, %v496
        %v498 = vpop.f32.mrb[0].mxu0
        %v499 = vpop.f32.mrb[0].mxu0
        %v500 = vadd.f32 %v279, %v499
        %v501 = vpop.f32.mrb[0].mxu0
        %502 = vdwg.mxu0
        %v503 = vld [vmem:[%s218] sm:$0xff]
        %v504 = vld [vmem:[%s218 + $0x8] sm:$0xff]
        %v505 = vld [vmem:[%s218 + $0x10] sm:$0xff]
        %v506 = vld [vmem:[%s218 + $0x18] sm:$0xff]
        %v507 = vld [vmem:[%s218 + $0x20] sm:$0xff]
        %v508 = vld [vmem:[%s218 + $0x28] sm:$0xff]
        %v509 = vld [vmem:[%s218 + $0x30] sm:$0xff]
        %v510 = vld [vmem:[%s218 + $0x38] sm:$0xff]
        %v511 = vld [vmem:[%s218 + $0x40] sm:$0xff]
        %v512 = vld [vmem:[%s218 + $0x48] sm:$0xff]
        %v513 = vld [vmem:[%s218 + $0x50] sm:$0xff]
        %v514 = vld [vmem:[%s218 + $0x58] sm:$0xff]
        %v515 = vld [vmem:[%s218 + $0x60] sm:$0xff]
        %v516 = vld [vmem:[%s218 + $0x68] sm:$0xff]
        %v517 = vld [vmem:[%s218 + $0x70] sm:$0xff]
        %v518 = vld [vmem:[%s218 + $0x78] sm:$0xff]
        %v519 = vld [vmem:[%s218 + $0x80] sm:$0xff]
        %v520 = vld [vmem:[%s218 + $0x88] sm:$0xff]
        %v521 = vld [vmem:[%s218 + $0x90] sm:$0xff]
        %v522 = vld [vmem:[%s218 + $0x98] sm:$0xff]
        %v523 = vld [vmem:[%s218 + $0xa0] sm:$0xff]
        %v524 = vld [vmem:[%s218 + $0xa8] sm:$0xff]
        %v525 = vld [vmem:[%s218 + $0xb0] sm:$0xff]
        %v526 = vld [vmem:[%s218 + $0xb8] sm:$0xff]
        %v527 = vld [vmem:[%s218 + $0xc0] sm:$0xff]
        %v528 = vld [vmem:[%s218 + $0xc8] sm:$0xff]
        %v529 = vld [vmem:[%s218 + $0xd0] sm:$0xff]
        %v530 = vld [vmem:[%s218 + $0xd8] sm:$0xff]
        %v531 = vld [vmem:[%s218 + $0xe0] sm:$0xff]
        %v532 = vld [vmem:[%s218 + $0xe8] sm:$0xff]
        %v533 = vld [vmem:[%s218 + $0xf0] sm:$0xff]
        %v534 = vld [vmem:[%s218 + $0xf8] sm:$0xff]
        %v535 = vadd.f32 %v377, %v503
        %v536 = vadd.f32 %v380, %v504
        %v537 = vadd.f32 %v385, %v505
        %v538 = vadd.f32 %v388, %v506
        %v539 = vadd.f32 %v393, %v507
        %v540 = vadd.f32 %v396, %v508
        %v541 = vadd.f32 %v401, %v509
        %v542 = vadd.f32 %v404, %v510
        %v543 = vadd.f32 %v409, %v511
        %v544 = vadd.f32 %v412, %v512
        %v545 = vadd.f32 %v417, %v513
        %v546 = vadd.f32 %v420, %v514
        %v547 = vadd.f32 %v425, %v515
        %v548 = vadd.f32 %v428, %v516
        %v549 = vadd.f32 %v433, %v517
        %v550 = vadd.f32 %v436, %v518
        %v551 = vadd.f32 %v441, %v519
        %v552 = vadd.f32 %v444, %v520
        %v553 = vadd.f32 %v449, %v521
        %v554 = vadd.f32 %v452, %v522
        %v555 = vadd.f32 %v457, %v523
        %v556 = vadd.f32 %v460, %v524
        %v557 = vadd.f32 %v465, %v525
        %v558 = vadd.f32 %v468, %v526
        %v559 = vadd.f32 %v473, %v527
        %v560 = vadd.f32 %v476, %v528
        %v561 = vadd.f32 %v481, %v529
        %v562 = vadd.f32 %v484, %v530
        %v563 = vadd.f32 %v489, %v531
        %v564 = vadd.f32 %v492, %v532
        %v565 = vadd.f32 %v497, %v533
        %v566 = vadd.f32 %v500, %v534
        %v567 = vmax.f32 %v535, 0.0
        %v568 = vmax.f32 %v536, 0.0
        %v569 = vmax.f32 %v537, 0.0
        %v570 = vmax.f32 %v538, 0.0
        %v571 = vmax.f32 %v539, 0.0
        %v572 = vmax.f32 %v540, 0.0
        %v573 = vmax.f32 %v541, 0.0
        %v574 = vmax.f32 %v542, 0.0
        %v575 = vmax.f32 %v543, 0.0
        %v576 = vmax.f32 %v544, 0.0
        %v577 = vmax.f32 %v545, 0.0
        %v578 = vmax.f32 %v546, 0.0
        %v579 = vmax.f32 %v547, 0.0
        %v580 = vmax.f32 %v548, 0.0
        %v581 = vmax.f32 %v549, 0.0
        %v582 = vmax.f32 %v550, 0.0
        %v583 = vmax.f32 %v551, 0.0
        %v584 = vmax.f32 %v552, 0.0
        %v585 = vmax.f32 %v553, 0.0
        %v586 = vmax.f32 %v554, 0.0
        %v587 = vmax.f32 %v555, 0.0
        %v588 = vmax.f32 %v556, 0.0
        %v589 = vmax.f32 %v557, 0.0
        %v590 = vmax.f32 %v558, 0.0
        %v591 = vmax.f32 %v559, 0.0
        %v592 = vmax.f32 %v560, 0.0
        %v593 = vmax.f32 %v561, 0.0
        %v594 = vmax.f32 %v562, 0.0
        %v595 = vmax.f32 %v563, 0.0
        %v596 = vmax.f32 %v564, 0.0
        %v597 = vmax.f32 %v565, 0.0
        %v598 = vmax.f32 %v566, 0.0
        %599 = vst [vmem:[%s207] sm:$0xff] %v567
        %600 = vst [vmem:[%s207 + $0x8] sm:$0xff] %v568
        %601 = vst [vmem:[%s207 + $0x10] sm:$0xff] %v569
        %602 = vst [vmem:[%s207 + $0x18] sm:$0xff] %v570
        %603 = vst [vmem:[%s207 + $0x20] sm:$0xff] %v571
        %604 = vst [vmem:[%s207 + $0x28] sm:$0xff] %v572
        %605 = vst [vmem:[%s207 + $0x30] sm:$0xff] %v573
        %606 = vst [vmem:[%s207 + $0x38] sm:$0xff] %v574
        %607 = vst [vmem:[%s207 + $0x40] sm:$0xff] %v575
        %608 = vst [vmem:[%s207 + $0x48] sm:$0xff] %v576
        %609 = vst [vmem:[%s207 + $0x50] sm:$0xff] %v577
        %610 = vst [vmem:[%s207 + $0x58] sm:$0xff] %v578
        %611 = vst [vmem:[%s207 + $0x60] sm:$0xff] %v579
        %612 = vst [vmem:[%s207 + $0x68] sm:$0xff] %v580
        %613 = vst [vmem:[%s207 + $0x70] sm:$0xff] %v581
        %614 = vst [vmem:[%s207 + $0x78] sm:$0xff] %v582
        %615 = vst [vmem:[%s207 + $0x80] sm:$0xff] %v583
        %616 = vst [vmem:[%s207 + $0x88] sm:$0xff] %v584
        %617 = vst [vmem:[%s207 + $0x90] sm:$0xff] %v585
        %618 = vst [vmem:[%s207 + $0x98] sm:$0xff] %v586
        %619 = vst [vmem:[%s207 + $0xa0] sm:$0xff] %v587
        %620 = vst [vmem:[%s207 + $0xa8] sm:$0xff] %v588
        %621 = vst [vmem:[%s207 + $0xb0] sm:$0xff] %v589
        %622 = vst [vmem:[%s207 + $0xb8] sm:$0xff] %v590
        %623 = vst [vmem:[%s207 + $0xc0] sm:$0xff] %v591
        %624 = vst [vmem:[%s207 + $0xc8] sm:$0xff] %v592
        %625 = vst [vmem:[%s207 + $0xd0] sm:$0xff] %v593
        %626 = vst [vmem:[%s207 + $0xd8] sm:$0xff] %v594
        %627 = vst [vmem:[%s207 + $0xe0] sm:$0xff] %v595
        %628 = vst [vmem:[%s207 + $0xe8] sm:$0xff] %v596
        %629 = vst [vmem:[%s207 + $0xf0] sm:$0xff] %v597
        %630 = vst [vmem:[%s207 + $0xf8] sm:$0xff] %v598
        %s631 = sand.u32 %s120, 1
        %s632 = scalar_lea.sflag [#allocation3], %s631
        %s633 = sand.u32 %s120, 1
        %s634 = smul.addr %s633, 256
        %s635 = scalar_lea.vmem [#allocation2], %s634
        // Predicated region
        $region37: #{bottleneck_forward.5} parent=35 // pred_check
          %p636 = pneg %p130
        $region38: #{bottleneck_forward.5} parent=35 // pred_check_branch
          %638 = sbr.rel (%p636) target = $region40
        $region39: #{bottleneck_forward.5} parent=35 // pred_region
          %s639 = smul.u32 32, %s18
          %s641 = ssub.s32 4096, 4096
          %642 = vsyncadd %s632, %s641
          %s643 = smul.addr %s639, 128
          %s644 = scalar_lea.hbm %s4, %s643
          %s645 = sshll.u32 %s635, 4
          %s646 = int_to_ptr.vmem [resolvable:$true] %s645
          %651 = dma.vmem_to_hbm [thread:$0]  %s646, 4096, %s644, %s632, 128, 128, 8
        $region40: #{bottleneck_forward.5} parent=35 // pred_fallthru
          _
      $region36: #{bottleneck_forward.5} parent=5 // pred_fallthru
        _
      %p652 = scmp.le.s32.totalorder 2, %s13
      // Predicated region
      $region41: #{bottleneck_forward.5} parent=5 // pred_check
        %p653 = pneg %p652
      $region42: #{bottleneck_forward.5} parent=5 // pred_check_branch
        %655 = sbr.rel (%p653) target = $region44
      $region43: #{bottleneck_forward.5} parent=5 // pred_region
        %s656 = ssub.s32 %s13, 2
        // Predicated region
        $region45: #{bottleneck_forward.5} parent=43 // pred_check
          %p657 = pneg %p136
        $region46: #{bottleneck_forward.5} parent=43 // pred_check_branch
          %659 = sbr.rel (%p657) target = $region48
        $region47: #{bottleneck_forward.5} parent=43 // pred_region
          %s660 = sand.u32 %s121, 1
          %s661 = scalar_lea.sflag [#allocation3], %s660
          %s662 = sand.u32 %s121, 1
          %s663 = smul.addr %s662, 256
          %s664 = scalar_lea.vmem [#allocation2], %s663
          %665 = dma.done %s661, 4096
        $region48: #{bottleneck_forward.5} parent=43 // pred_fallthru
          _
      $region44: #{bottleneck_forward.5} parent=5 // pred_fallthru
        _
    $region6: #{bottleneck_forward.5} parent=1 // loop_footer
      %s17 = sadd.s32 1, %s13
    $region7: #{bottleneck_forward.5} parent=1 // loop_footer_branch
      %12 = sbr.rel target = $region3
    $region8: #{bottleneck_forward.5} parent=1 // loop_exit
      _
    %666 = vsyncpa [#allocation3], 1
    %s667 = scalar_lea.sflag [#allocation3], 1
    %668 = vsyncpa %s667, 1

// kernel: bottleneck_forward.4
$region0: #{bottleneck_forward.4}
  #allocation0 [shape = 'u32[]', space=smem, size = 0x4, offset = 0x4, fixed_abs, tag = 'smem constant byte address 0x4 - core index']
  #allocation1 [shape = 'u32[144,128]{1,0:T(1,128)}', space=vmem, size = 0x12000, scoped, tag = 'internal scratch']
  %s0 = inlined_call_operand.vmem [shape: f32[2,18,18,32], index: 0, kind: input, shape index: {}]
  %s1 = inlined_call_operand.vmem [shape: bf16[3,96,32], index: 1, kind: input, shape index: {}]
  %s2 = inlined_call_operand.vmem [shape: f32[1,32], index: 2, kind: input, shape index: {}]
  %s3 = inlined_call_operand.vmem [shape: f32[2,16,16,32], index: 3, kind: output, shape index: {}]
  %s4 = sld [smem:[#allocation0]]
  $region45: #{bottleneck_forward.4} parent=0
    _
  %s6 = ssub.s32 1, %s4
  %s7 = scalar_select 0, %s6, %s4
  loop: start=0, step=1, limit=4
  $region2: #{bottleneck_forward.4} parent=0 // loop_pre_header
    _
  $region3: #{bottleneck_forward.4} parent=0 // loop_header
    %s9 = sphi 0, %s13
    %p10 = scmp.ge.s32.totalorder %s9, 4
    %s19 = sphi 0, %s21
    %s22 = sphi 0, %s19
    %s23 = sphi 0, %s22
    %s39 = sphi 0, %s23
    %s43 = sphi 0, %s43
    %s45 = sphi 0, %s43
    %s46 = sphi 0, %s45
    %s60 = sphi 0, %s46
    %s64 = sphi 0, %s64
    %s66 = sphi 0, %s64
    %s67 = sphi 0, %s66
    %s81 = sphi 0, %s67
    %s87 = sphi 0, %s89
    %s90 = sphi 0, %s87
    %s91 = sphi 0, %s90
    %s107 = sphi 0, %s91
  $region4: #{bottleneck_forward.4} parent=0 // loop_header_branch
    %12 = sbr.rel (%p10) target = $region8
  $region5: #{bottleneck_forward.4} parent=0 // loop_body
    %s14 = ssub.s32 %s9, 1
    %s15 = ssub.s32 %s9, 2
    %s16 = sadd.s32 %s9, 1
    %s17 = ssub.s32 %s9, %s16
    %p18 = scmp.eq.s32.totalorder %s17, 0
    %s20 = sadd.s32 %s19, 1
    %s21 = scalar_select %p18, %s19, %s20
    %p24 = pneg %p18
    %p25 = scmp.eq.s32.totalorder %s9, 1
    %p26 = por %p24, %p25
    %p27 = scmp.ne.s32.totalorder %s19, %s22
    %p28 = scmp.eq.s32.totalorder %s9, 0
    %p29 = por %p27, %p28
    %p30 = scmp.ne.s32.totalorder %s19, %s22
    %p31 = scmp.eq.s32.totalorder %s14, 1
    %p32 = por %p30, %p31
    %p33 = scmp.ne.s32.totalorder %s22, %s23
    %p34 = scmp.eq.s32.totalorder %s14, 0
    %p35 = por %p33, %p34
    %p36 = scmp.ne.s32.totalorder %s22, %s23
    %p37 = scmp.eq.s32.totalorder %s15, 1
    %p38 = por %p36, %p37
    %p40 = scmp.ne.s32.totalorder %s23, %s39
    %p41 = scmp.eq.s32.totalorder %s15, 0
    %p42 = por %p40, %p41
    %s44 = sadd.s32 %s43, 1
    %p47 = scmp.eq.s32.totalorder %s9, 1
    %p48 = scmp.ne.s32.totalorder %s43, %s45
    %p49 = scmp.eq.s32.totalorder %s9, 0
    %p50 = por %p48, %p49
    %p51 = scmp.ne.s32.totalorder %s43, %s45
    %p52 = scmp.eq.s32.totalorder %s14, 1
    %p53 = por %p51, %p52
    %p54 = scmp.ne.s32.totalorder %s45, %s46
    %p55 = scmp.eq.s32.totalorder %s14, 0
    %p56 = por %p54, %p55
    %p57 = scmp.ne.s32.totalorder %s45, %s46
    %p58 = scmp.eq.s32.totalorder %s15, 1
    %p59 = por %p57, %p58
    %p61 = scmp.ne.s32.totalorder %s46, %s60
    %p62 = scmp.eq.s32.totalorder %s15, 0
    %p63 = por %p61, %p62
    %s65 = sadd.s32 %s64, 1
    %p68 = scmp.eq.s32.totalorder %s9, 1
    %p69 = scmp.ne.s32.totalorder %s64, %s66
    %p70 = scmp.eq.s32.totalorder %s9, 0
    %p71 = por %p69, %p70
    %p72 = scmp.ne.s32.totalorder %s64, %s66
    %p73 = scmp.eq.s32.totalorder %s14, 1
    %p74 = por %p72, %p73
    %p75 = scmp.ne.s32.totalorder %s66, %s67
    %p76 = scmp.eq.s32.totalorder %s14, 0
    %p77 = por %p75, %p76
    %p78 = scmp.ne.s32.totalorder %s66, %s67
    %p79 = scmp.eq.s32.totalorder %s15, 1
    %p80 = por %p78, %p79
    %p82 = scmp.ne.s32.totalorder %s67, %s81
    %p83 = scmp.eq.s32.totalorder %s15, 0
    %p84 = por %p82, %p83
    %s85 = ssub.s32 %s9, %s16
    %p86 = scmp.eq.s32.totalorder %s85, 0
    %s88 = sadd.s32 %s87, 1
    %s89 = scalar_select %p86, %s87, %s88
    %p92 = pneg %p86
    %p93 = scmp.eq.s32.totalorder %s9, 1
    %p94 = por %p92, %p93
    %p95 = scmp.ne.s32.totalorder %s87, %s90
    %p96 = scmp.eq.s32.totalorder %s9, 0
    %p97 = por %p95, %p96
    %p98 = scmp.ne.s32.totalorder %s87, %s90
    %p99 = scmp.eq.s32.totalorder %s14, 1
    %p100 = por %p98, %p99
    %p101 = scmp.ne.s32.totalorder %s90, %s91
    %p102 = scmp.eq.s32.totalorder %s14, 0
    %p103 = por %p101, %p102
    %p104 = scmp.ne.s32.totalorder %s90, %s91
    %p105 = scmp.eq.s32.totalorder %s15, 1
    %p106 = por %p104, %p105
    %p108 = scmp.ne.s32.totalorder %s91, %s107
    %p109 = scmp.eq.s32.totalorder %s15, 0
    %p110 = por %p108, %p109
    %p111 = scmp.le.s32.totalorder 1, %s9
    %p112 = scmp.lt.s32.totalorder %s9, 3
    %p113 = pnand %p111, %p112
    %p114 = pneg %p113
    // Predicated region
    $region9: #{bottleneck_forward.4} parent=5 // pred_check
      _
    $region10: #{bottleneck_forward.4} parent=5 // pred_check_branch
      %116 = sbr.rel (%p113) target = $region12
    $region11: #{bottleneck_forward.4} parent=5 // pred_region
      %s117 = ssub.s32 %s9, 1
      // Predicated region
      $region13: #{bottleneck_forward.4} parent=11 // pred_check
        %p118 = pneg %p56
      $region14: #{bottleneck_forward.4} parent=11 // pred_check_branch
        %120 = sbr.rel (%p118) target = $region16
      $region15: #{bottleneck_forward.4} parent=11 // pred_region
        _
      $region16: #{bottleneck_forward.4} parent=11 // pred_fallthru
        _
      // Predicated region
      $region17: #{bottleneck_forward.4} parent=11 // pred_check
        %p121 = pneg %p77
      $region18: #{bottleneck_forward.4} parent=11 // pred_check_branch
        %123 = sbr.rel (%p121) target = $region20
      $region19: #{bottleneck_forward.4} parent=11 // pred_region
        _
      $region20: #{bottleneck_forward.4} parent=11 // pred_fallthru
        _
    $region12: #{bottleneck_forward.4} parent=5 // pred_fallthru
      _
    %p124 = scmp.lt.s32.totalorder %s9, 2
    // Predicated region
    $region21: #{bottleneck_forward.4} parent=5 // pred_check
      %p125 = pneg %p124
    $region22: #{bottleneck_forward.4} parent=5 // pred_check_branch
      %127 = sbr.rel (%p125) target = $region24
    $region23: #{bottleneck_forward.4} parent=5 // pred_region
      // Predicated region
      $region25: #{bottleneck_forward.4} parent=23 // pred_check
        %p128 = pneg %p29
      $region26: #{bottleneck_forward.4} parent=23 // pred_check_branch
        %130 = sbr.rel (%p128) target = $region28
      $region27: #{bottleneck_forward.4} parent=23 // pred_region
        %p131 = scmp.lt.s32.totalorder %s9, 1
        %s132 = scalar_select %p131, %s9, 1
        %s133 = smul.addr %s132, 54
        %s134 = smul.addr %s133, 8
        %s135 = scalar_lea.vmem %s0, %s134
      $region28: #{bottleneck_forward.4} parent=23 // pred_fallthru
        _
    $region24: #{bottleneck_forward.4} parent=5 // pred_fallthru
      _
    %p136 = scmp.le.s32.totalorder 1, %s9
    %p137 = scmp.lt.s32.totalorder %s9, 3
    %p138 = pnand %p136, %p137
    %p139 = pneg %p138
    // Predicated region
    $region29: #{bottleneck_forward.4} parent=5 // pred_check
      _
    $region30: #{bottleneck_forward.4} parent=5 // pred_check_branch
      %141 = sbr.rel (%p138) target = $region32
    $region31: #{bottleneck_forward.4} parent=5 // pred_region
      %s142 = ssub.s32 %s9, 1
      %p143 = scmp.lt.s32.totalorder %s14, 1
      %s144 = scalar_select %p143, %s14, 1
      %s145 = smul.addr %s144, 54
      %s146 = smul.addr %s145, 8
      %s147 = scalar_lea.vmem %s0, %s146
      %p148 = pneg %p35
      %p149 = pneg %p32
      %p150 = pneg %p56
      %p151 = pneg %p53
      %p152 = pneg %p77
      %p153 = pneg %p74
      %p154 = pneg %p103
      %p155 = pneg %p100
      %p156 = scmp.lt.s32.totalorder %s14, 1
      %s157 = scalar_select %p156, %s14, 1
      %s158 = smul.addr %s157, 32
      %s159 = smul.addr %s158, 8
      %s160 = scalar_lea.vmem %s3, %s159
      %p161 = scmp.lt.s32.totalorder %s14, 1
      %s162 = scalar_select %p161, %s14, 1
      %s163 = smul.addr %s162, 54
      %s164 = smul.addr %s163, 8
      %s165 = scalar_lea.vmem %s0, %s164
      %p166 = scmp.lt.s32.totalorder %s14, 1
      %s167 = scalar_select %p166, %s14, 1
      %s168 = smul.addr %s167, 32
      %s169 = smul.addr %s168, 8
      %s170 = scalar_lea.vmem %s3, %s169
      %v172 = vld [vmem:[%s165] sm:$0xff]
      %v173 = vld [vmem:[%s165 + $0x8] sm:$0xff]
      %v174 = vld [vmem:[%s165 + $0x18] sm:$0xff]
      %v175 = vld [vmem:[%s165 + $0x20] sm:$0xff]
      %v176 = vld [vmem:[%s165 + $0x30] sm:$0xff]
      %v177 = vld [vmem:[%s165 + $0x38] sm:$0xff]
      %v178 = vld [vmem:[%s165 + $0x48] sm:$0xff]
      %v179 = vld [vmem:[%s165 + $0x50] sm:$0xff]
      %v180 = vld [vmem:[%s165 + $0x60] sm:$0xff]
      %v181 = vld [vmem:[%s165 + $0x68] sm:$0xff]
      %v182 = vld [vmem:[%s165 + $0x78] sm:$0xff]
      %v183 = vld [vmem:[%s165 + $0x80] sm:$0xff]
      %v184 = vld [vmem:[%s165 + $0x90] sm:$0xff]
      %v185 = vld [vmem:[%s165 + $0x98] sm:$0xff]
      %v186 = vld [vmem:[%s165 + $0xa8] sm:$0xff]
      %v187 = vld [vmem:[%s165 + $0xb0] sm:$0xff]
      %v188 = vld [vmem:[%s165 + $0xc0] sm:$0xff]
      %v189 = vld [vmem:[%s165 + $0xc8] sm:$0xff]
      %v190 = vld [vmem:[%s165 + $0xd8] sm:$0xff]
      %v191 = vld [vmem:[%s165 + $0xe0] sm:$0xff]
      %v192 = vld [vmem:[%s165 + $0xf0] sm:$0xff]
      %v193 = vld [vmem:[%s165 + $0xf8] sm:$0xff]
      %v194 = vld [vmem:[%s165 + $0x108] sm:$0xff]
      %v195 = vld [vmem:[%s165 + $0x110] sm:$0xff]
      %v196 = vld [vmem:[%s165 + $0x120] sm:$0xff]
      %v197 = vld [vmem:[%s165 + $0x128] sm:$0xff]
      %v198 = vld [vmem:[%s165 + $0x138] sm:$0xff]
      %v199 = vld [vmem:[%s165 + $0x140] sm:$0xff]
      %v200 = vld [vmem:[%s165 + $0x150] sm:$0xff]
      %v201 = vld [vmem:[%s165 + $0x158] sm:$0xff]
      %v202 = vld [vmem:[%s165 + $0x168] sm:$0xff]
      %v203 = vld [vmem:[%s165 + $0x170] sm:$0xff]
      %v204 = vld [vmem:[%s165 + $0x1] sm:$0xff]
      %v205 = vld [vmem:[%s165 + $0x9] sm:$0xff]
      %v206 = vld [vmem:[%s165 + $0x19] sm:$0xff]
      %v207 = vld [vmem:[%s165 + $0x21] sm:$0xff]
      %v208 = vld [vmem:[%s165 + $0x31] sm:$0xff]
      %v209 = vld [vmem:[%s165 + $0x39] sm:$0xff]
      %v210 = vld [vmem:[%s165 + $0x49] sm:$0xff]
      %v211 = vld [vmem:[%s165 + $0x51] sm:$0xff]
      %v212 = vld [vmem:[%s165 + $0x61] sm:$0xff]
      %v213 = vld [vmem:[%s165 + $0x69] sm:$0xff]
      %v214 = vld [vmem:[%s165 + $0x79] sm:$0xff]
      %v215 = vld [vmem:[%s165 + $0x81] sm:$0xff]
      %v216 = vld [vmem:[%s165 + $0x91] sm:$0xff]
      %v217 = vld [vmem:[%s165 + $0x99] sm:$0xff]
      %v218 = vld [vmem:[%s165 + $0xa9] sm:$0xff]
      %v219 = vld [vmem:[%s165 + $0xb1] sm:$0xff]
      %v220 = vld [vmem:[%s165 + $0xc1] sm:$0xff]
      %v221 = vld [vmem:[%s165 + $0xc9] sm:$0xff]
      %v222 = vld [vmem:[%s165 + $0xd9] sm:$0xff]
      %v223 = vld [vmem:[%s165 + $0xe1] sm:$0xff]
      %v224 = vld [vmem:[%s165 + $0xf1] sm:$0xff]
      %v225 = vld [vmem:[%s165 + $0xf9] sm:$0xff]
      %v226 = vld [vmem:[%s165 + $0x109] sm:$0xff]
      %v227 = vld [vmem:[%s165 + $0x111] sm:$0xff]
      %v228 = vld [vmem:[%s165 + $0x121] sm:$0xff]
      %v229 = vld [vmem:[%s165 + $0x129] sm:$0xff]
      %v230 = vld [vmem:[%s165 + $0x139] sm:$0xff]
      %v231 = vld [vmem:[%s165 + $0x141] sm:$0xff]
      %v232 = vld [vmem:[%s165 + $0x151] sm:$0xff]
      %v233 = vld [vmem:[%s165 + $0x159] sm:$0xff]
      %v234 = vld [vmem:[%s165 + $0x169] sm:$0xff]
      %v235 = vld [vmem:[%s165 + $0x171] sm:$0xff]
      %v236 = vld [vmem:[%s165 + $0x2] sm:$0xff]
      %v237 = vld [vmem:[%s165 + $0xa] sm:$0xff]
      %v238 = vld [vmem:[%s165 + $0x1a] sm:$0xff]
      %v239 = vld [vmem:[%s165 + $0x22] sm:$0xff]
      %v240 = vld [vmem:[%s165 + $0x32] sm:$0xff]
      %v241 = vld [vmem:[%s165 + $0x3a] sm:$0xff]
      %v242 = vld [vmem:[%s165 + $0x4a] sm:$0xff]
      %v243 = vld [vmem:[%s165 + $0x52] sm:$0xff]
      %v244 = vld [vmem:[%s165 + $0x62] sm:$0xff]
      %v245 = vld [vmem:[%s165 + $0x6a] sm:$0xff]
      %v246 = vld [vmem:[%s165 + $0x7a] sm:$0xff]
      %v247 = vld [vmem:[%s165 + $0x82] sm:$0xff]
      %v248 = vld [vmem:[%s165 + $0x92] sm:$0xff]
      %v249 = vld [vmem:[%s165 + $0x9a] sm:$0xff]
      %v250 = vld [vmem:[%s165 + $0xaa] sm:$0xff]
      %v251 = vld [vmem:[%s165 + $0xb2] sm:$0xff]
      %v252 = vld [vmem:[%s165 + $0xc2] sm:$0xff]
      %v253 = vld [vmem:[%s165 + $0xca] sm:$0xff]
      %v254 = vld [vmem:[%s165 + $0xda] sm:$0xff]
      %v255 = vld [vmem:[%s165 + $0xe2] sm:$0xff]
      %v256 = vld [vmem:[%s165 + $0xf2] sm:$0xff]
      %v257 = vld [vmem:[%s165 + $0xfa] sm:$0xff]
      %v258 = vld [vmem:[%s165 + $0x10a] sm:$0xff]
      %v259 = vld [vmem:[%s165 + $0x112] sm:$0xff]
      %v260 = vld [vmem:[%s165 + $0x122] sm:$0xff]
      %v261 = vld [vmem:[%s165 + $0x12a] sm:$0xff]
      %v262 = vld [vmem:[%s165 + $0x13a] sm:$0xff]
      %v263 = vld [vmem:[%s165 + $0x142] sm:$0xff]
      %v264 = vld [vmem:[%s165 + $0x152] sm:$0xff]
      %v265 = vld [vmem:[%s165 + $0x15a] sm:$0xff]
      %v266 = vld [vmem:[%s165 + $0x16a] sm:$0xff]
      %v267 = vld [vmem:[%s165 + $0x172] sm:$0xff]
      %300 = vrot.lane.b32.xlu0 %v204, 32
      %v301 = vpop.permute.xlu0 %300
      %302 = vrot.lane.b32.xlu0 %v205, 32
      %v303 = vpop.permute.xlu0 %302
      %304 = vrot.lane.b32.xlu0 %v206, 32
      %v305 = vpop.permute.xlu0 %304
      %306 = vrot.lane.b32.xlu0 %v207, 32
      %v307 = vpop.permute.xlu0 %306
      %308 = vrot.lane.b32.xlu0 %v208, 32
      %v309 = vpop.permute.xlu0 %308
      %310 = vrot.lane.b32.xlu0 %v209, 32
      %v311 = vpop.permute.xlu0 %310
      %312 = vrot.lane.b32.xlu0 %v210, 32
      %v313 = vpop.permute.xlu0 %312
      %314 = vrot.lane.b32.xlu0 %v211, 32
      %v315 = vpop.permute.xlu0 %314
      %316 = vrot.lane.b32.xlu0 %v212, 32
      %v317 = vpop.permute.xlu0 %316
      %318 = vrot.lane.b32.xlu0 %v213, 32
      %v319 = vpop.permute.xlu0 %318
      %320 = vrot.lane.b32.xlu0 %v214, 32
      %v321 = vpop.permute.xlu0 %320
      %322 = vrot.lane.b32.xlu0 %v215, 32
      %v323 = vpop.permute.xlu0 %322
      %324 = vrot.lane.b32.xlu0 %v216, 32
      %v325 = vpop.permute.xlu0 %324
      %326 = vrot.lane.b32.xlu0 %v217, 32
      %v327 = vpop.permute.xlu0 %326
      %328 = vrot.lane.b32.xlu0 %v218, 32
      %v329 = vpop.permute.xlu0 %328
      %330 = vrot.lane.b32.xlu0 %v219, 32
      %v331 = vpop.permute.xlu0 %330
      %332 = vrot.lane.b32.xlu0 %v220, 32
      %v333 = vpop.permute.xlu0 %332
      %334 = vrot.lane.b32.xlu0 %v221, 32
      %v335 = vpop.permute.xlu0 %334
      %336 = vrot.lane.b32.xlu0 %v222, 32
      %v337 = vpop.permute.xlu0 %336
      %338 = vrot.lane.b32.xlu0 %v223, 32
      %v339 = vpop.permute.xlu0 %338
      %340 = vrot.lane.b32.xlu0 %v224, 32
      %v341 = vpop.permute.xlu0 %340
      %342 = vrot.lane.b32.xlu0 %v225, 32
      %v343 = vpop.permute.xlu0 %342
      %344 = vrot.lane.b32.xlu0 %v226, 32
      %v345 = vpop.permute.xlu0 %344
      %346 = vrot.lane.b32.xlu0 %v227, 32
      %v347 = vpop.permute.xlu0 %346
      %348 = vrot.lane.b32.xlu0 %v228, 32
      %v349 = vpop.permute.xlu0 %348
      %350 = vrot.lane.b32.xlu0 %v229, 32
      %v351 = vpop.permute.xlu0 %350
      %352 = vrot.lane.b32.xlu0 %v230, 32
      %v353 = vpop.permute.xlu0 %352
      %354 = vrot.lane.b32.xlu0 %v231, 32
      %v355 = vpop.permute.xlu0 %354
      %356 = vrot.lane.b32.xlu0 %v232, 32
      %v357 = vpop.permute.xlu0 %356
      %358 = vrot.lane.b32.xlu0 %v233, 32
      %v359 = vpop.permute.xlu0 %358
      %360 = vrot.lane.b32.xlu0 %v234, 32
      %v361 = vpop.permute.xlu0 %360
      %362 = vrot.lane.b32.xlu0 %v235, 32
      %v363 = vpop.permute.xlu0 %362
      %428 = vrot.lane.b32.xlu0 %v236, 64
      %v429 = vpop.permute.xlu0 %428
      %430 = vrot.lane.b32.xlu0 %v237, 64
      %v431 = vpop.permute.xlu0 %430
      %432 = vrot.lane.b32.xlu0 %v238, 64
      %v433 = vpop.permute.xlu0 %432
      %434 = vrot.lane.b32.xlu0 %v239, 64
      %v435 = vpop.permute.xlu0 %434
      %436 = vrot.lane.b32.xlu0 %v240, 64
      %v437 = vpop.permute.xlu0 %436
      %438 = vrot.lane.b32.xlu0 %v241, 64
      %v439 = vpop.permute.xlu0 %438
      %440 = vrot.lane.b32.xlu0 %v242, 64
      %v441 = vpop.permute.xlu0 %440
      %442 = vrot.lane.b32.xlu0 %v243, 64
      %v443 = vpop.permute.xlu0 %442
      %444 = vrot.lane.b32.xlu0 %v244, 64
      %v445 = vpop.permute.xlu0 %444
      %446 = vrot.lane.b32.xlu0 %v245, 64
      %v447 = vpop.permute.xlu0 %446
      %448 = vrot.lane.b32.xlu0 %v246, 64
      %v449 = vpop.permute.xlu0 %448
      %450 = vrot.lane.b32.xlu0 %v247, 64
      %v451 = vpop.permute.xlu0 %450
      %452 = vrot.lane.b32.xlu0 %v248, 64
      %v453 = vpop.permute.xlu0 %452
      %454 = vrot.lane.b32.xlu0 %v249, 64
      %v455 = vpop.permute.xlu0 %454
      %456 = vrot.lane.b32.xlu0 %v250, 64
      %v457 = vpop.permute.xlu0 %456
      %458 = vrot.lane.b32.xlu0 %v251, 64
      %v459 = vpop.permute.xlu0 %458
      %460 = vrot.lane.b32.xlu0 %v252, 64
      %v461 = vpop.permute.xlu0 %460
      %462 = vrot.lane.b32.xlu0 %v253, 64
      %v463 = vpop.permute.xlu0 %462
      %464 = vrot.lane.b32.xlu0 %v254, 64
      %v465 = vpop.permute.xlu0 %464
      %466 = vrot.lane.b32.xlu0 %v255, 64
      %v467 = vpop.permute.xlu0 %466
      %468 = vrot.lane.b32.xlu0 %v256, 64
      %v469 = vpop.permute.xlu0 %468
      %470 = vrot.lane.b32.xlu0 %v257, 64
      %v471 = vpop.permute.xlu0 %470
      %472 = vrot.lane.b32.xlu0 %v258, 64
      %v473 = vpop.permute.xlu0 %472
      %474 = vrot.lane.b32.xlu0 %v259, 64
      %v475 = vpop.permute.xlu0 %474
      %476 = vrot.lane.b32.xlu0 %v260, 64
      %v477 = vpop.permute.xlu0 %476
      %478 = vrot.lane.b32.xlu0 %v261, 64
      %v479 = vpop.permute.xlu0 %478
      %480 = vrot.lane.b32.xlu0 %v262, 64
      %v481 = vpop.permute.xlu0 %480
      %482 = vrot.lane.b32.xlu0 %v263, 64
      %v483 = vpop.permute.xlu0 %482
      %484 = vrot.lane.b32.xlu0 %v264, 64
      %v485 = vpop.permute.xlu0 %484
      %486 = vrot.lane.b32.xlu0 %v265, 64
      %v487 = vpop.permute.xlu0 %486
      %488 = vrot.lane.b32.xlu0 %v266, 64
      %v489 = vpop.permute.xlu0 %488
      %490 = vrot.lane.b32.xlu0 %v267, 64
      %v491 = vpop.permute.xlu0 %490
      %vm524 = vcmask 261120
      %v525 = vsel %vm524, %v172, %v301
      %v526 = vsel %vm524, %v173, %v303
      %v527 = vsel %vm524, %v174, %v305
      %v528 = vsel %vm524, %v175, %v307
      %v529 = vsel %vm524, %v176, %v309
      %v530 = vsel %vm524, %v177, %v311
      %v531 = vsel %vm524, %v178, %v313
      %v532 = vsel %vm524, %v179, %v315
      %v533 = vsel %vm524, %v180, %v317
      %v534 = vsel %vm524, %v181, %v319
      %v535 = vsel %vm524, %v182, %v321
      %v536 = vsel %vm524, %v183, %v323
      %v537 = vsel %vm524, %v184, %v325
      %v538 = vsel %vm524, %v185, %v327
      %v539 = vsel %vm524, %v186, %v329
      %v540 = vsel %vm524, %v187, %v331
      %v541 = vsel %vm524, %v188, %v333
      %v542 = vsel %vm524, %v189, %v335
      %v543 = vsel %vm524, %v190, %v337
      %v544 = vsel %vm524, %v191, %v339
      %v545 = vsel %vm524, %v192, %v341
      %v546 = vsel %vm524, %v193, %v343
      %v547 = vsel %vm524, %v194, %v345
      %v548 = vsel %vm524, %v195, %v347
      %v549 = vsel %vm524, %v196, %v349
      %v550 = vsel %vm524, %v197, %v351
      %v551 = vsel %vm524, %v198, %v353
      %v552 = vsel %vm524, %v199, %v355
      %v553 = vsel %vm524, %v200, %v357
      %v554 = vsel %vm524, %v201, %v359
      %v555 = vsel %vm524, %v202, %v361
      %v556 = vsel %vm524, %v203, %v363
      %vm557 = vcmask 523264
      %v558 = vsel %vm557, %v525, %v429
      %v559 = vsel %vm557, %v526, %v431
      %v560 = vsel %vm557, %v527, %v433
      %v561 = vsel %vm557, %v528, %v435
      %v562 = vsel %vm557, %v529, %v437
      %v563 = vsel %vm557, %v530, %v439
      %v564 = vsel %vm557, %v531, %v441
      %v565 = vsel %vm557, %v532, %v443
      %v566 = vsel %vm557, %v533, %v445
      %v567 = vsel %vm557, %v534, %v447
      %v568 = vsel %vm557, %v535, %v449
      %v569 = vsel %vm557, %v536, %v451
      %v570 = vsel %vm557, %v537, %v453
      %v571 = vsel %vm557, %v538, %v455
      %v572 = vsel %vm557, %v539, %v457
      %v573 = vsel %vm557, %v540, %v459
      %v574 = vsel %vm557, %v541, %v461
      %v575 = vsel %vm557, %v542, %v463
      %v576 = vsel %vm557, %v543, %v465
      %v577 = vsel %vm557, %v544, %v467
      %v578 = vsel %vm557, %v545, %v469
      %v579 = vsel %vm557, %v546, %v471
      %v580 = vsel %vm557, %v547, %v473
      %v581 = vsel %vm557, %v548, %v475
      %v582 = vsel %vm557, %v549, %v477
      %v583 = vsel %vm557, %v550, %v479
      %v584 = vsel %vm557, %v551, %v481
      %v585 = vsel %vm557, %v552, %v483
      %v586 = vsel %vm557, %v553, %v485
      %v587 = vsel %vm557, %v554, %v487
      %v588 = vsel %vm557, %v555, %v489
      %v589 = vsel %vm557, %v556, %v491
      %v590 = vpack.c.bf16 %v559, %v558
      %v591 = vpack.c.bf16 %v561, %v560
      %v592 = vpack.c.bf16 %v563, %v562
      %v593 = vpack.c.bf16 %v565, %v564
      %v594 = vpack.c.bf16 %v567, %v566
      %v595 = vpack.c.bf16 %v569, %v568
      %v596 = vpack.c.bf16 %v571, %v570
      %v597 = vpack.c.bf16 %v573, %v572
      %v598 = vpack.c.bf16 %v575, %v574
      %v599 = vpack.c.bf16 %v577, %v576
      %v600 = vpack.c.bf16 %v579, %v578
      %v601 = vpack.c.bf16 %v581, %v580
      %v602 = vpack.c.bf16 %v583, %v582
      %v603 = vpack.c.bf16 %v585, %v584
      %v604 = vpack.c.bf16 %v587, %v586
      %v605 = vpack.c.bf16 %v589, %v588
      %v606 = vld [vmem:[%s1] sm:$0xf]
      %v607 = vld [vmem:[%s1 + $0x4] sm:$0xf]
      %v608 = vld [vmem:[%s1 + $0x8] sm:$0xf]
      %v609 = vld [vmem:[%s1 + $0xc] sm:$0xf]
      %v610 = vld [vmem:[%s1 + $0x10] sm:$0xf]
      %v611 = vld [vmem:[%s1 + $0x14] sm:$0xf]
      %v612 = vld [vmem:[%s1 + $0x18] sm:$0xf]
      %v613 = vld [vmem:[%s1 + $0x1c] sm:$0xf]
      %v614 = vld [vmem:[%s1 + $0x20] sm:$0xf]
      %v615 = vld [vmem:[%s1 + $0x24] sm:$0xf]
      %v616 = vld [vmem:[%s1 + $0x28] sm:$0xf]
      %v617 = vld [vmem:[%s1 + $0x2c] sm:$0xf]
      %s618 = scalar_lea.vmem %s165, 24
      %v619 = vld [vmem:[%s618] sm:$0xff]
      %v620 = vld [vmem:[%s618 + $0x8] sm:$0xff]
      %v621 = vld [vmem:[%s618 + $0x18] sm:$0xff]
      %v622 = vld [vmem:[%s618 + $0x20] sm:$0xff]
      %v623 = vld [vmem:[%s618 + $0x30] sm:$0xff]
      %v624 = vld [vmem:[%s618 + $0x38] sm:$0xff]
      %v625 = vld [vmem:[%s618 + $0x48] sm:$0xff]
      %v626 = vld [vmem:[%s618 + $0x50] sm:$0xff]
      %v627 = vld [vmem:[%s618 + $0x60] sm:$0xff]
      %v628 = vld [vmem:[%s618 + $0x68] sm:$0xff]
      %v629 = vld [vmem:[%s618 + $0x78] sm:$0xff]
      %v630 = vld [vmem:[%s618 + $0x80] sm:$0xff]
      %v631 = vld [vmem:[%s618 + $0x90] sm:$0xff]
      %v632 = vld [vmem:[%s618 + $0x98] sm:$0xff]
      %v633 = vld [vmem:[%s618 + $0xa8] sm:$0xff]
      %v634 = vld [vmem:[%s618 + $0xb0] sm:$0xff]
      %v635 = vld [vmem:[%s618 + $0xc0] sm:$0xff]
      %v636 = vld [vmem:[%s618 + $0xc8] sm:$0xff]
      %v637 = vld [vmem:[%s618 + $0xd8] sm:$0xff]
      %v638 = vld [vmem:[%s618 + $0xe0] sm:$0xff]
      %v639 = vld [vmem:[%s618 + $0xf0] sm:$0xff]
      %v640 = vld [vmem:[%s618 + $0xf8] sm:$0xff]
      %v641 = vld [vmem:[%s618 + $0x108] sm:$0xff]
      %v642 = vld [vmem:[%s618 + $0x110] sm:$0xff]
      %v643 = vld [vmem:[%s618 + $0x120] sm:$0xff]
      %v644 = vld [vmem:[%s618 + $0x128] sm:$0xff]
      %v645 = vld [vmem:[%s618 + $0x138] sm:$0xff]
      %v646 = vld [vmem:[%s618 + $0x140] sm:$0xff]
      %v647 = vld [vmem:[%s618 + $0x150] sm:$0xff]
      %v648 = vld [vmem:[%s618 + $0x158] sm:$0xff]
      %v649 = vld [vmem:[%s618 + $0x168] sm:$0xff]
      %v650 = vld [vmem:[%s618 + $0x170] sm:$0xff]
      %v651 = vld [vmem:[%s618 + $0x1] sm:$0xff]
      %v652 = vld [vmem:[%s618 + $0x9] sm:$0xff]
      %v653 = vld [vmem:[%s618 + $0x19] sm:$0xff]
      %v654 = vld [vmem:[%s618 + $0x21] sm:$0xff]
      %v655 = vld [vmem:[%s618 + $0x31] sm:$0xff]
      %v656 = vld [vmem:[%s618 + $0x39] sm:$0xff]
      %v657 = vld [vmem:[%s618 + $0x49] sm:$0xff]
      %v658 = vld [vmem:[%s618 + $0x51] sm:$0xff]
      %v659 = vld [vmem:[%s618 + $0x61] sm:$0xff]
      %v660 = vld [vmem:[%s618 + $0x69] sm:$0xff]
      %v661 = vld [vmem:[%s618 + $0x79] sm:$0xff]
      %v662 = vld [vmem:[%s618 + $0x81] sm:$0xff]
      %v663 = vld [vmem:[%s618 + $0x91] sm:$0xff]
      %v664 = vld [vmem:[%s618 + $0x99] sm:$0xff]
      %v665 = vld [vmem:[%s618 + $0xa9] sm:$0xff]
      %v666 = vld [vmem:[%s618 + $0xb1] sm:$0xff]
      %v667 = vld [vmem:[%s618 + $0xc1] sm:$0xff]
      %v668 = vld [vmem:[%s618 + $0xc9] sm:$0xff]
      %v669 = vld [vmem:[%s618 + $0xd9] sm:$0xff]
      %v670 = vld [vmem:[%s618 + $0xe1] sm:$0xff]
      %v671 = vld [vmem:[%s618 + $0xf1] sm:$0xff]
      %v672 = vld [vmem:[%s618 + $0xf9] sm:$0xff]
      %v673 = vld [vmem:[%s618 + $0x109] sm:$0xff]
      %v674 = vld [vmem:[%s618 + $0x111] sm:$0xff]
      %v675 = vld [vmem:[%s618 + $0x121] sm:$0xff]
      %v676 = vld [vmem:[%s618 + $0x129] sm:$0xff]
      %v677 = vld [vmem:[%s618 + $0x139] sm:$0xff]
      %v678 = vld [vmem:[%s618 + $0x141] sm:$0xff]
      %v679 = vld [vmem:[%s618 + $0x151] sm:$0xff]
      %v680 = vld [vmem:[%s618 + $0x159] sm:$0xff]
      %v681 = vld [vmem:[%s618 + $0x169] sm:$0xff]
      %v682 = vld [vmem:[%s618 + $0x171] sm:$0xff]
      %v683 = vld [vmem:[%s618 + $0x2] sm:$0xff]
      %v684 = vld [vmem:[%s618 + $0xa] sm:$0xff]
      %v685 = vld [vmem:[%s618 + $0x1a] sm:$0xff]
      %v686 = vld [vmem:[%s618 + $0x22] sm:$0xff]
      %v687 = vld [vmem:[%s618 + $0x32] sm:$0xff]
      %v688 = vld [vmem:[%s618 + $0x3a] sm:$0xff]
      %v689 = vld [vmem:[%s618 + $0x4a] sm:$0xff]
      %v690 = vld [vmem:[%s618 + $0x52] sm:$0xff]
      %v691 = vld [vmem:[%s618 + $0x62] sm:$0xff]
      %v692 = vld [vmem:[%s618 + $0x6a] sm:$0xff]
      %v693 = vld [vmem:[%s618 + $0x7a] sm:$0xff]
      %v694 = vld [vmem:[%s618 + $0x82] sm:$0xff]
      %v695 = vld [vmem:[%s618 + $0x92] sm:$0xff]
      %v696 = vld [vmem:[%s618 + $0x9a] sm:$0xff]
      %v697 = vld [vmem:[%s618 + $0xaa] sm:$0xff]
      %v698 = vld [vmem:[%s618 + $0xb2] sm:$0xff]
      %v699 = vld [vmem:[%s618 + $0xc2] sm:$0xff]
      %v700 = vld [vmem:[%s618 + $0xca] sm:$0xff]
      %v701 = vld [vmem:[%s618 + $0xda] sm:$0xff]
      %v702 = vld [vmem:[%s618 + $0xe2] sm:$0xff]
      %v703 = vld [vmem:[%s618 + $0xf2] sm:$0xff]
      %v704 = vld [vmem:[%s618 + $0xfa] sm:$0xff]
      %v705 = vld [vmem:[%s618 + $0x10a] sm:$0xff]
      %v706 = vld [vmem:[%s618 + $0x112] sm:$0xff]
      %v707 = vld [vmem:[%s618 + $0x122] sm:$0xff]
      %v708 = vld [vmem:[%s618 + $0x12a] sm:$0xff]
      %v709 = vld [vmem:[%s618 + $0x13a] sm:$0xff]
      %v710 = vld [vmem:[%s618 + $0x142] sm:$0xff]
      %v711 = vld [vmem:[%s618 + $0x152] sm:$0xff]
      %v712 = vld [vmem:[%s618 + $0x15a] sm:$0xff]
      %v713 = vld [vmem:[%s618 + $0x16a] sm:$0xff]
      %v714 = vld [vmem:[%s618 + $0x172] sm:$0xff]
      %747 = vrot.lane.b32.xlu0 %v651, 32
      %v748 = vpop.permute.xlu0 %747
      %749 = vrot.lane.b32.xlu0 %v652, 32
      %v750 = vpop.permute.xlu0 %749
      %751 = vrot.lane.b32.xlu0 %v653, 32
      %v752 = vpop.permute.xlu0 %751
      %753 = vrot.lane.b32.xlu0 %v654, 32
      %v754 = vpop.permute.xlu0 %753
      %755 = vrot.lane.b32.xlu0 %v655, 32
      %v756 = vpop.permute.xlu0 %755
      %757 = vrot.lane.b32.xlu0 %v656, 32
      %v758 = vpop.permute.xlu0 %757
      %759 = vrot.lane.b32.xlu0 %v657, 32
      %v760 = vpop.permute.xlu0 %759
      %761 = vrot.lane.b32.xlu0 %v658, 32
      %v762 = vpop.permute.xlu0 %761
      %763 = vrot.lane.b32.xlu0 %v659, 32
      %v764 = vpop.permute.xlu0 %763
      %765 = vrot.lane.b32.xlu0 %v660, 32
      %v766 = vpop.permute.xlu0 %765
      %767 = vrot.lane.b32.xlu0 %v661, 32
      %v768 = vpop.permute.xlu0 %767
      %769 = vrot.lane.b32.xlu0 %v662, 32
      %v770 = vpop.permute.xlu0 %769
      %771 = vrot.lane.b32.xlu0 %v663, 32
      %v772 = vpop.permute.xlu0 %771
      %773 = vrot.lane.b32.xlu0 %v664, 32
      %v774 = vpop.permute.xlu0 %773
      %775 = vrot.lane.b32.xlu0 %v665, 32
      %v776 = vpop.permute.xlu0 %775
      %777 = vrot.lane.b32.xlu0 %v666, 32
      %v778 = vpop.permute.xlu0 %777
      %779 = vrot.lane.b32.xlu0 %v667, 32
      %v780 = vpop.permute.xlu0 %779
      %781 = vrot.lane.b32.xlu0 %v668, 32
      %v782 = vpop.permute.xlu0 %781
      %783 = vrot.lane.b32.xlu0 %v669, 32
      %v784 = vpop.permute.xlu0 %783
      %785 = vrot.lane.b32.xlu0 %v670, 32
      %v786 = vpop.permute.xlu0 %785
      %787 = vrot.lane.b32.xlu0 %v671, 32
      %v788 = vpop.permute.xlu0 %787
      %789 = vrot.lane.b32.xlu0 %v672, 32
      %v790 = vpop.permute.xlu0 %789
      %791 = vrot.lane.b32.xlu0 %v673, 32
      %v792 = vpop.permute.xlu0 %791
      %793 = vrot.lane.b32.xlu0 %v674, 32
      %v794 = vpop.permute.xlu0 %793
      %795 = vrot.lane.b32.xlu0 %v675, 32
      %v796 = vpop.permute.xlu0 %795
      %797 = vrot.lane.b32.xlu0 %v676, 32
      %v798 = vpop.permute.xlu0 %797
      %799 = vrot.lane.b32.xlu0 %v677, 32
      %v800 = vpop.permute.xlu0 %799
      %801 = vrot.lane.b32.xlu0 %v678, 32
      %v802 = vpop.permute.xlu0 %801
      %803 = vrot.lane.b32.xlu0 %v679, 32
      %v804 = vpop.permute.xlu0 %803
      %805 = vrot.lane.b32.xlu0 %v680, 32
      %v806 = vpop.permute.xlu0 %805
      %807 = vrot.lane.b32.xlu0 %v681, 32
      %v808 = vpop.permute.xlu0 %807
      %809 = vrot.lane.b32.xlu0 %v682, 32
      %v810 = vpop.permute.xlu0 %809
      %875 = vrot.lane.b32.xlu0 %v683, 64
      %v876 = vpop.permute.xlu0 %875
      %877 = vrot.lane.b32.xlu0 %v684, 64
      %v878 = vpop.permute.xlu0 %877
      %879 = vrot.lane.b32.xlu0 %v685, 64
      %v880 = vpop.permute.xlu0 %879
      %881 = vrot.lane.b32.xlu0 %v686, 64
      %v882 = vpop.permute.xlu0 %881
      %883 = vrot.lane.b32.xlu0 %v687, 64
      %v884 = vpop.permute.xlu0 %883
      %885 = vrot.lane.b32.xlu0 %v688, 64
      %v886 = vpop.permute.xlu0 %885
      %887 = vrot.lane.b32.xlu0 %v689, 64
      %v888 = vpop.permute.xlu0 %887
      %889 = vrot.lane.b32.xlu0 %v690, 64
      %v890 = vpop.permute.xlu0 %889
      %891 = vrot.lane.b32.xlu0 %v691, 64
      %v892 = vpop.permute.xlu0 %891
      %893 = vrot.lane.b32.xlu0 %v692, 64
      %v894 = vpop.permute.xlu0 %893
      %895 = vrot.lane.b32.xlu0 %v693, 64
      %v896 = vpop.permute.xlu0 %895
      %897 = vrot.lane.b32.xlu0 %v694, 64
      %v898 = vpop.permute.xlu0 %897
      %899 = vrot.lane.b32.xlu0 %v695, 64
      %v900 = vpop.permute.xlu0 %899
      %901 = vrot.lane.b32.xlu0 %v696, 64
      %v902 = vpop.permute.xlu0 %901
      %903 = vrot.lane.b32.xlu0 %v697, 64
      %v904 = vpop.permute.xlu0 %903
      %905 = vrot.lane.b32.xlu0 %v698, 64
      %v906 = vpop.permute.xlu0 %905
      %907 = vrot.lane.b32.xlu0 %v699, 64
      %v908 = vpop.permute.xlu0 %907
      %909 = vrot.lane.b32.xlu0 %v700, 64
      %v910 = vpop.permute.xlu0 %909
      %911 = vrot.lane.b32.xlu0 %v701, 64
      %v912 = vpop.permute.xlu0 %911
      %913 = vrot.lane.b32.xlu0 %v702, 64
      %v914 = vpop.permute.xlu0 %913
      %915 = vrot.lane.b32.xlu0 %v703, 64
      %v916 = vpop.permute.xlu0 %915
      %917 = vrot.lane.b32.xlu0 %v704, 64
      %v918 = vpop.permute.xlu0 %917
      %919 = vrot.lane.b32.xlu0 %v705, 64
      %v920 = vpop.permute.xlu0 %919
      %921 = vrot.lane.b32.xlu0 %v706, 64
      %v922 = vpop.permute.xlu0 %921
      %923 = vrot.lane.b32.xlu0 %v707, 64
      %v924 = vpop.permute.xlu0 %923
      %925 = vrot.lane.b32.xlu0 %v708, 64
      %v926 = vpop.permute.xlu0 %925
      %927 = vrot.lane.b32.xlu0 %v709, 64
      %v928 = vpop.permute.xlu0 %927
      %929 = vrot.lane.b32.xlu0 %v710, 64
      %v930 = vpop.permute.xlu0 %929
      %931 = vrot.lane.b32.xlu0 %v711, 64
      %v932 = vpop.permute.xlu0 %931
      %933 = vrot.lane.b32.xlu0 %v712, 64
      %v934 = vpop.permute.xlu0 %933
      %935 = vrot.lane.b32.xlu0 %v713, 64
      %v936 = vpop.permute.xlu0 %935
      %937 = vrot.lane.b32.xlu0 %v714, 64
      %v938 = vpop.permute.xlu0 %937
      %v971 = vsel %vm524, %v619, %v748
      %v972 = vsel %vm524, %v620, %v750
      %v973 = vsel %vm524, %v621, %v752
      %v974 = vsel %vm524, %v622, %v754
      %v975 = vsel %vm524, %v623, %v756
      %v976 = vsel %vm524, %v624, %v758
      %v977 = vsel %vm524, %v625, %v760
      %v978 = vsel %vm524, %v626, %v762
      %v979 = vsel %vm524, %v627, %v764
      %v980 = vsel %vm524, %v628, %v766
      %v981 = vsel %vm524, %v629, %v768
      %v982 = vsel %vm524, %v630, %v770
      %v983 = vsel %vm524, %v631, %v772
      %v984 = vsel %vm524, %v632, %v774
      %v985 = vsel %vm524, %v633, %v776
      %v986 = vsel %vm524, %v634, %v778
      %v987 = vsel %vm524, %v635, %v780
      %v988 = vsel %vm524, %v636, %v782
      %v989 = vsel %vm524, %v637, %v784
      %v990 = vsel %vm524, %v638, %v786
      %v991 = vsel %vm524, %v639, %v788
      %v992 = vsel %vm524, %v640, %v790
      %v993 = vsel %vm524, %v641, %v792
      %v994 = vsel %vm524, %v642, %v794
      %v995 = vsel %vm524, %v643, %v796
      %v996 = vsel %vm524, %v644, %v798
      %v997 = vsel %vm524, %v645, %v800
      %v998 = vsel %vm524, %v646, %v802
      %v999 = vsel %vm524, %v647, %v804
      %v1000 = vsel %vm524, %v648, %v806
      %v1001 = vsel %vm524, %v649, %v808
      %v1002 = vsel %vm524, %v650, %v810
      %v1003 = vsel %vm557, %v971, %v876
      %v1004 = vsel %vm557, %v972, %v878
      %v1005 = vsel %vm557, %v973, %v880
      %v1006 = vsel %vm557, %v974, %v882
      %v1007 = vsel %vm557, %v975, %v884
      %v1008 = vsel %vm557, %v976, %v886
      %v1009 = vsel %vm557, %v977, %v888
      %v1010 = vsel %vm557, %v978, %v890
      %v1011 = vsel %vm557, %v979, %v892
      %v1012 = vsel %vm557, %v980, %v894
      %v1013 = vsel %vm557, %v981, %v896
      %v1014 = vsel %vm557, %v982, %v898
      %v1015 = vsel %vm557, %v983, %v900
      %v1016 = vsel %vm557, %v984, %v902
      %v1017 = vsel %vm557, %v985, %v904
      %v1018 = vsel %vm557, %v986, %v906
      %v1019 = vsel %vm557, %v987, %v908
      %v1020 = vsel %vm557, %v988, %v910
      %v1021 = vsel %vm557, %v989, %v912
      %v1022 = vsel %vm557, %v990, %v914
      %v1023 = vsel %vm557, %v991, %v916
      %v1024 = vsel %vm557, %v992, %v918
      %v1025 = vsel %vm557, %v993, %v920
      %v1026 = vsel %vm557, %v994, %v922
      %v1027 = vsel %vm557, %v995, %v924
      %v1028 = vsel %vm557, %v996, %v926
      %v1029 = vsel %vm557, %v997, %v928
      %v1030 = vsel %vm557, %v998, %v930
      %v1031 = vsel %vm557, %v999, %v932
      %v1032 = vsel %vm557, %v1000, %v934
      %v1033 = vsel %vm557, %v1001, %v936
      %v1034 = vsel %vm557, %v1002, %v938
      %v1035 = vpack.c.bf16 %v1004, %v1003
      %v1036 = vpack.c.bf16 %v1006, %v1005
      %v1037 = vpack.c.bf16 %v1008, %v1007
      %v1038 = vpack.c.bf16 %v1010, %v1009
      %v1039 = vpack.c.bf16 %v1012, %v1011
      %v1040 = vpack.c.bf16 %v1014, %v1013
      %v1041 = vpack.c.bf16 %v1016, %v1015
      %v1042 = vpack.c.bf16 %v1018, %v1017
      %v1043 = vpack.c.bf16 %v1020, %v1019
      %v1044 = vpack.c.bf16 %v1022, %v1021
      %v1045 = vpack.c.bf16 %v1024, %v1023
      %v1046 = vpack.c.bf16 %v1026, %v1025
      %v1047 = vpack.c.bf16 %v1028, %v1027
      %v1048 = vpack.c.bf16 %v1030, %v1029
      %v1049 = vpack.c.bf16 %v1032, %v1031
      %v1050 = vpack.c.bf16 %v1034, %v1033
      %s1051 = scalar_lea.vmem %s1, 48
      %v1052 = vld [vmem:[%s1051] sm:$0xf]
      %v1053 = vld [vmem:[%s1051 + $0x4] sm:$0xf]
      %v1054 = vld [vmem:[%s1051 + $0x8] sm:$0xf]
      %v1055 = vld [vmem:[%s1051 + $0xc] sm:$0xf]
      %v1056 = vld [vmem:[%s1051 + $0x10] sm:$0xf]
      %v1057 = vld [vmem:[%s1051 + $0x14] sm:$0xf]
      %v1058 = vld [vmem:[%s1051 + $0x18] sm:$0xf]
      %v1059 = vld [vmem:[%s1051 + $0x1c] sm:$0xf]
      %v1060 = vld [vmem:[%s1051 + $0x20] sm:$0xf]
      %v1061 = vld [vmem:[%s1051 + $0x24] sm:$0xf]
      %v1062 = vld [vmem:[%s1051 + $0x28] sm:$0xf]
      %v1063 = vld [vmem:[%s1051 + $0x2c] sm:$0xf]
      %v1076 = vunpack.c.l.b16 %v1052
      %v1077 = vunpack.c.l.b16 %v1053
      %v1078 = vunpack.c.l.b16 %v1054
      %v1079 = vunpack.c.l.b16 %v1055
      %v1080 = vunpack.c.l.b16 %v1056
      %v1081 = vunpack.c.l.b16 %v1057
      %v1082 = vunpack.c.l.b16 %v1058
      %v1083 = vunpack.c.l.b16 %v1059
      %v1084 = vunpack.c.l.b16 %v1060
      %v1085 = vunpack.c.l.b16 %v1061
      %v1086 = vunpack.c.l.b16 %v1062
      %v1087 = vunpack.c.l.b16 %v1063
      %v1088 = vpack.c.b16 %v1077, %v1076
      %v1089 = vpack.c.b16 %v1079, %v1078
      %v1090 = vpack.c.b16 %v1081, %v1080
      %v1091 = vpack.c.b16 %v1083, %v1082
      %v1092 = vpack.c.b16 %v1085, %v1084
      %v1093 = vpack.c.b16 %v1087, %v1086
      %vm1100 = vcmask 785408
      %v1102 = vsel %vm1100, %v1035, 0
      %v1105 = vsel %vm1100, %v1036, 0
      %v1108 = vsel %vm1100, %v1037, 0
      %v1111 = vsel %vm1100, %v1038, 0
      %v1114 = vsel %vm1100, %v1039, 0
      %v1117 = vsel %vm1100, %v1040, 0
      %v1120 = vsel %vm1100, %v1041, 0
      %v1123 = vsel %vm1100, %v1042, 0
      %v1126 = vsel %vm1100, %v1043, 0
      %v1129 = vsel %vm1100, %v1044, 0
      %v1132 = vsel %vm1100, %v1045, 0
      %v1135 = vsel %vm1100, %v1046, 0
      %v1138 = vsel %vm1100, %v1047, 0
      %v1141 = vsel %vm1100, %v1048, 0
      %v1144 = vsel %vm1100, %v1049, 0
      %v1147 = vsel %vm1100, %v1050, 0
      %1149 = vmatprep.subr.bf16.mxu0 0
      %1150 = vmatpush1.bf16.msra.mxu0 %v1088
      %1151 = vmatprep.subr.bf16.mxu0 0
      %1152 = vmatpush1.bf16.msra.mxu0 %v1089
      %1153 = vmatprep.subr.bf16.mxu0 0
      %1154 = vmatpush1.bf16.msra.mxu0 %v1090
      %1155 = vmatprep.subr.bf16.mxu0 0
      %1156 = vmatpush1.bf16.msra.mxu0 %v1091
      %1157 = vmatprep.subr.bf16.mxu0 0
      %1158 = vmatpush1.bf16.msra.mxu0 %v1092
      %1159 = vmatprep.subr.bf16.mxu0 0
      %1160 = vmatpush1.bf16.msra.mxu0 %v1093
      %1161 = vmatprep.subr.bf16.mxu0 0
      %1162 = vmatpush1.bf16.msra.mxu0 0
      %1163 = vmatprep.subr.bf16.mxu0 0
      %1164 = vmatpush1.bf16.msra.mxu0 0
      %1165 = vmatprep.subr.bf16.mxu0 0
      %1166 = vmatpush1.bf16.msra.mxu0 0
      %1167 = vmatprep.subr.bf16.mxu0 0
      %1168 = vmatpush1.bf16.msra.mxu0 0
      %1169 = vmatprep.subr.bf16.mxu0 0
      %1170 = vmatpush1.bf16.msra.mxu0 0
      %1171 = vmatprep.subr.bf16.mxu0 0
      %1172 = vmatpush1.bf16.msra.mxu0 0
      %1173 = vmatprep.subr.bf16.mxu0 0
      %1174 = vmatpush1.bf16.msra.mxu0 0
      %1175 = vmatprep.subr.bf16.mxu0 0
      %1176 = vmatpush1.bf16.msra.mxu0 0
      %1177 = vmatprep.subr.bf16.mxu0 0
      %1178 = vmatpush1.bf16.msra.mxu0 0
      %1179 = vmatprep.subr.bf16.mxu0 0
      %1180 = vmatpush1.bf16.msra.mxu0 0
      %1181 = vmatprep.mubr.bf16.mxu0 0
      %1182 = vmatmul.mubr.bf16.gmra.mrb[0].mxu0 %v1102
      %v1183 = vpop.f32.mrb[0].mxu0
      %v1184 = vadd.f32 0.0, %v1183
      %v1185 = vpop.f32.mrb[0].mxu0
      %v1186 = vpop.f32.mrb[0].mxu0
      %v1187 = vadd.f32 0.0, %v1186
      %v1188 = vpop.f32.mrb[0].mxu0
      %1189 = vmatprep.mubr.bf16.mxu0 0
      %1190 = vmatmul.mubr.bf16.gmra.mrb[0].mxu0 %v1105
      %v1191 = vpop.f32.mrb[0].mxu0
      %v1192 = vadd.f32 0.0, %v1191
      %v1193 = vpop.f32.mrb[0].mxu0
      %v1194 = vpop.f32.mrb[0].mxu0
      %v1195 = vadd.f32 0.0, %v1194
      %v1196 = vpop.f32.mrb[0].mxu0
      %1197 = vmatprep.mubr.bf16.mxu0 0
      %1198 = vmatmul.mubr.bf16.gmra.mrb[0].mxu0 %v1108
      %v1199 = vpop.f32.mrb[0].mxu0
      %v1200 = vadd.f32 0.0, %v1199
      %v1201 = vpop.f32.mrb[0].mxu0
      %v1202 = vpop.f32.mrb[0].mxu0
      %v1203 = vadd.f32 0.0, %v1202
      %v1204 = vpop.f32.mrb[0].mxu0
      %1205 = vmatprep.mubr.bf16.mxu0 0
      %1206 = vmatmul.mubr.bf16.gmra.mrb[0].mxu0 %v1111
      %v1207 = vpop.f32.mrb[0].mxu0
      %v1208 = vadd.f32 0.0, %v1207
      %v1209 = vpop.f32.mrb[0].mxu0
      %v1210 = vpop.f32.mrb[0].mxu0
      %v1211 = vadd.f32 0.0, %v1210
      %v1212 = vpop.f32.mrb[0].mxu0
      %1213 = vmatprep.mubr.bf16.mxu0 0
      %1214 = vmatmul.mubr.bf16.gmra.mrb[0].mxu0 %v1114
      %v1215 = vpop.f32.mrb[0].mxu0
      %v1216 = vadd.f32 0.0, %v1215
      %v1217 = vpop.f32.mrb[0].mxu0
      %v1218 = vpop.f32.mrb[0].mxu0
      %v1219 = vadd.f32 0.0, %v1218
      %v1220 = vpop.f32.mrb[0].mxu0
      %1221 = vmatprep.mubr.bf16.mxu0 0
      %1222 = vmatmul.mubr.bf16.gmra.mrb[0].mxu0 %v1117
      %v1223 = vpop.f32.mrb[0].mxu0
      %v1224 = vadd.f32 0.0, %v1223
      %v1225 = vpop.f32.mrb[0].mxu0
      %v1226 = vpop.f32.mrb[0].mxu0
      %v1227 = vadd.f32 0.0, %v1226
      %v1228 = vpop.f32.mrb[0].mxu0
      %1229 = vmatprep.mubr.bf16.mxu0 0
      %1230 = vmatmul.mubr.bf16.gmra.mrb[0].mxu0 %v1120
      %v1231 = vpop.f32.mrb[0].mxu0
      %v1232 = vadd.f32 0.0, %v1231
      %v1233 = vpop.f32.mrb[0].mxu0
      %v1234 = vpop.f32.mrb[0].mxu0
      %v1235 = vadd.f32 0.0, %v1234
      %v1236 = vpop.f32.mrb[0].mxu0
      %1237 = vmatprep.mubr.bf16.mxu0 0
      %1238 = vmatmul.mubr.bf16.gmra.mrb[0].mxu0 %v1123
      %v1239 = vpop.f32.mrb[0].mxu0
      %v1240 = vadd.f32 0.0, %v1239
      %v1241 = vpop.f32.mrb[0].mxu0
      %v1242 = vpop.f32.mrb[0].mxu0
      %v1243 = vadd.f32 0.0, %v1242
      %v1244 = vpop.f32.mrb[0].mxu0
      %1245 = vmatprep.mubr.bf16.mxu0 0
      %1246 = vmatmul.mubr.bf16.gmra.mrb[0].mxu0 %v1126
      %v1247 = vpop.f32.mrb[0].mxu0
      %v1248 = vadd.f32 0.0, %v1247
      %v1249 = vpop.f32.mrb[0].mxu0
      %v1250 = vpop.f32.mrb[0].mxu0
      %v1251 = vadd.f32 0.0, %v1250
      %v1252 = vpop.f32.mrb[0].mxu0
      %1253 = vmatprep.mubr.bf16.mxu0 0
      %1254 = vmatmul.mubr.bf16.gmra.mrb[0].mxu0 %v1129
      %v1255 = vpop.f32.mrb[0].mxu0
      %v1256 = vadd.f32 0.0, %v1255
      %v1257 = vpop.f32.mrb[0].mxu0
      %v1258 = vpop.f32.mrb[0].mxu0
      %v1259 = vadd.f32 0.0, %v1258
      %v1260 = vpop.f32.mrb[0].mxu0
      %1261 = vmatprep.mubr.bf16.mxu0 0
      %1262 = vmatmul.mubr.bf16.gmra.mrb[0].mxu0 %v1132
      %v1263 = vpop.f32.mrb[0].mxu0
      %v1264 = vadd.f32 0.0, %v1263
      %v1265 = vpop.f32.mrb[0].mxu0
      %v1266 = vpop.f32.mrb[0].mxu0
      %v1267 = vadd.f32 0.0, %v1266
      %v1268 = vpop.f32.mrb[0].mxu0
      %1269 = vmatprep.mubr.bf16.mxu0 0
      %1270 = vmatmul.mubr.bf16.gmra.mrb[0].mxu0 %v1135
      %v1271 = vpop.f32.mrb[0].mxu0
      %v1272 = vadd.f32 0.0, %v1271
      %v1273 = vpop.f32.mrb[0].mxu0
      %v1274 = vpop.f32.mrb[0].mxu0
      %v1275 = vadd.f32 0.0, %v1274
      %v1276 = vpop.f32.mrb[0].mxu0
      %1277 = vmatprep.mubr.bf16.mxu0 0
      %1278 = vmatmul.mubr.bf16.gmra.mrb[0].mxu0 %v1138
      %v1279 = vpop.f32.mrb[0].mxu0
      %v1280 = vadd.f32 0.0, %v1279
      %v1281 = vpop.f32.mrb[0].mxu0
      %v1282 = vpop.f32.mrb[0].mxu0
      %v1283 = vadd.f32 0.0, %v1282
      %v1284 = vpop.f32.mrb[0].mxu0
      %1285 = vmatprep.mubr.bf16.mxu0 0
      %1286 = vmatmul.mubr.bf16.gmra.mrb[0].mxu0 %v1141
      %v1287 = vpop.f32.mrb[0].mxu0
      %v1288 = vadd.f32 0.0, %v1287
      %v1289 = vpop.f32.mrb[0].mxu0
      %v1290 = vpop.f32.mrb[0].mxu0
      %v1291 = vadd.f32 0.0, %v1290
      %v1292 = vpop.f32.mrb[0].mxu0
      %1293 = vmatprep.mubr.bf16.mxu0 0
      %1294 = vmatmul.mubr.bf16.gmra.mrb[0].mxu0 %v1144
      %v1295 = vpop.f32.mrb[0].mxu0
      %v1296 = vadd.f32 0.0, %v1295
      %v1297 = vpop.f32.mrb[0].mxu0
      %v1298 = vpop.f32.mrb[0].mxu0
      %v1299 = vadd.f32 0.0, %v1298
      %v1300 = vpop.f32.mrb[0].mxu0
      %1301 = vmatprep.mubr.bf16.mxu0 0
      %1302 = vmatmul.mubr.bf16.gmra.mrb[0].mxu0 %v1147
      %v1303 = vpop.f32.mrb[0].mxu0
      %v1304 = vadd.f32 0.0, %v1303
      %v1305 = vpop.f32.mrb[0].mxu0
      %v1306 = vpop.f32.mrb[0].mxu0
      %v1307 = vadd.f32 0.0, %v1306
      %v1308 = vpop.f32.mrb[0].mxu0
      %1309 = vdwg.mxu0
      %v1322 = vunpack.c.l.b16 %v606
      %v1323 = vunpack.c.l.b16 %v607
      %v1324 = vunpack.c.l.b16 %v608
      %v1325 = vunpack.c.l.b16 %v609
      %v1326 = vunpack.c.l.b16 %v610
      %v1327 = vunpack.c.l.b16 %v611
      %v1328 = vunpack.c.l.b16 %v612
      %v1329 = vunpack.c.l.b16 %v613
      %v1330 = vunpack.c.l.b16 %v614
      %v1331 = vunpack.c.l.b16 %v615
      %v1332 = vunpack.c.l.b16 %v616
      %v1333 = vunpack.c.l.b16 %v617
      %v1334 = vpack.c.b16 %v1323, %v1322
      %v1335 = vpack.c.b16 %v1325, %v1324
      %v1336 = vpack.c.b16 %v1327, %v1326
      %v1337 = vpack.c.b16 %v1329, %v1328
      %v1338 = vpack.c.b16 %v1331, %v1330
      %v1339 = vpack.c.b16 %v1333, %v1332
      %v1347 = vsel %vm1100, %v590, 0
      %v1350 = vsel %vm1100, %v591, 0
      %v1353 = vsel %vm1100, %v592, 0
      %v1356 = vsel %vm1100, %v593, 0
      %v1359 = vsel %vm1100, %v594, 0
      %v1362 = vsel %vm1100, %v595, 0
      %v1365 = vsel %vm1100, %v596, 0
      %v1368 = vsel %vm1100, %v597, 0
      %v1371 = vsel %vm1100, %v598, 0
      %v1374 = vsel %vm1100, %v599, 0
      %v1377 = vsel %vm1100, %v600, 0
      %v1380 = vsel %vm1100, %v601, 0
      %v1383 = vsel %vm1100, %v602, 0
      %v1386 = vsel %vm1100, %v603, 0
      %v1389 = vsel %vm1100, %v604, 0
      %v1392 = vsel %vm1100, %v605, 0
      %1394 = vmatprep.subr.bf16.mxu0 0
      %1395 = vmatpush1.bf16.msra.mxu0 %v1334
      %1396 = vmatprep.subr.bf16.mxu0 0
      %1397 = vmatpush1.bf16.msra.mxu0 %v1335
      %1398 = vmatprep.subr.bf16.mxu0 0
      %1399 = vmatpush1.bf16.msra.mxu0 %v1336
      %1400 = vmatprep.subr.bf16.mxu0 0
      %1401 = vmatpush1.bf16.msra.mxu0 %v1337
      %1402 = vmatprep.subr.bf16.mxu0 0
      %1403 = vmatpush1.bf16.msra.mxu0 %v1338
      %1404 = vmatprep.subr.bf16.mxu0 0
      %1405 = vmatpush1.bf16.msra.mxu0 %v1339
      %1406 = vmatprep.subr.bf16.mxu0 0
      %1407 = vmatpush1.bf16.msra.mxu0 0
      %1408 = vmatprep.subr.bf16.mxu0 0
      %1409 = vmatpush1.bf16.msra.mxu0 0
      %1410 = vmatprep.subr.bf16.mxu0 0
      %1411 = vmatpush1.bf16.msra.mxu0 0
      %1412 = vmatprep.subr.bf16.mxu0 0
      %1413 = vmatpush1.bf16.msra.mxu0 0
      %1414 = vmatprep.subr.bf16.mxu0 0
      %1415 = vmatpush1.bf16.msra.mxu0 0
      %1416 = vmatprep.subr.bf16.mxu0 0
      %1417 = vmatpush1.bf16.msra.mxu0 0
      %1418 = vmatprep.subr.bf16.mxu0 0
      %1419 = vmatpush1.bf16.msra.mxu0 0
      %1420 = vmatprep.subr.bf16.mxu0 0
      %1421 = vmatpush1.bf16.msra.mxu0 0
      %1422 = vmatprep.subr.bf16.mxu0 0
      %1423 = vmatpush1.bf16.msra.mxu0 0
      %1424 = vmatprep.subr.bf16.mxu0 0
      %1425 = vmatpush1.bf16.msra.mxu0 0
      %1426 = vmatprep.mubr.bf16.mxu0 0
      %1427 = vmatmul.mubr.bf16.gmra.mrb[0].mxu0 %v1347
      %v1428 = vpop.f32.mrb[0].mxu0
      %v1429 = vadd.f32 %v1184, %v1428
      %v1430 = vpop.f32.mrb[0].mxu0
      %v1431 = vpop.f32.mrb[0].mxu0
      %v1432 = vadd.f32 %v1187, %v1431
      %v1433 = vpop.f32.mrb[0].mxu0
      %1434 = vmatprep.mubr.bf16.mxu0 0
      %1435 = vmatmul.mubr.bf16.gmra.mrb[0].mxu0 %v1350
      %v1436 = vpop.f32.mrb[0].mxu0
      %v1437 = vadd.f32 %v1192, %v1436
      %v1438 = vpop.f32.mrb[0].mxu0
      %v1439 = vpop.f32.mrb[0].mxu0
      %v1440 = vadd.f32 %v1195, %v1439
      %v1441 = vpop.f32.mrb[0].mxu0
      %1442 = vmatprep.mubr.bf16.mxu0 0
      %1443 = vmatmul.mubr.bf16.gmra.mrb[0].mxu0 %v1353
      %v1444 = vpop.f32.mrb[0].mxu0
      %v1445 = vadd.f32 %v1200, %v1444
      %v1446 = vpop.f32.mrb[0].mxu0
      %v1447 = vpop.f32.mrb[0].mxu0
      %v1448 = vadd.f32 %v1203, %v1447
      %v1449 = vpop.f32.mrb[0].mxu0
      %1450 = vmatprep.mubr.bf16.mxu0 0
      %1451 = vmatmul.mubr.bf16.gmra.mrb[0].mxu0 %v1356
      %v1452 = vpop.f32.mrb[0].mxu0
      %v1453 = vadd.f32 %v1208, %v1452
      %v1454 = vpop.f32.mrb[0].mxu0
      %v1455 = vpop.f32.mrb[0].mxu0
      %v1456 = vadd.f32 %v1211, %v1455
      %v1457 = vpop.f32.mrb[0].mxu0
      %1458 = vmatprep.mubr.bf16.mxu0 0
      %1459 = vmatmul.mubr.bf16.gmra.mrb[0].mxu0 %v1359
      %v1460 = vpop.f32.mrb[0].mxu0
      %v1461 = vadd.f32 %v1216, %v1460
      %v1462 = vpop.f32.mrb[0].mxu0
      %v1463 = vpop.f32.mrb[0].mxu0
      %v1464 = vadd.f32 %v1219, %v1463
      %v1465 = vpop.f32.mrb[0].mxu0
      %1466 = vmatprep.mubr.bf16.mxu0 0
      %1467 = vmatmul.mubr.bf16.gmra.mrb[0].mxu0 %v1362
      %v1468 = vpop.f32.mrb[0].mxu0
      %v1469 = vadd.f32 %v1224, %v1468
      %v1470 = vpop.f32.mrb[0].mxu0
      %v1471 = vpop.f32.mrb[0].mxu0
      %v1472 = vadd.f32 %v1227, %v1471
      %v1473 = vpop.f32.mrb[0].mxu0
      %1474 = vmatprep.mubr.bf16.mxu0 0
      %1475 = vmatmul.mubr.bf16.gmra.mrb[0].mxu0 %v1365
      %v1476 = vpop.f32.mrb[0].mxu0
      %v1477 = vadd.f32 %v1232, %v1476
      %v1478 = vpop.f32.mrb[0].mxu0
      %v1479 = vpop.f32.mrb[0].mxu0
      %v1480 = vadd.f32 %v1235, %v1479
      %v1481 = vpop.f32.mrb[0].mxu0
      %1482 = vmatprep.mubr.bf16.mxu0 0
      %1483 = vmatmul.mubr.bf16.gmra.mrb[0].mxu0 %v1368
      %v1484 = vpop.f32.mrb[0].mxu0
      %v1485 = vadd.f32 %v1240, %v1484
      %v1486 = vpop.f32.mrb[0].mxu0
      %v1487 = vpop.f32.mrb[0].mxu0
      %v1488 = vadd.f32 %v1243, %v1487
      %v1489 = vpop.f32.mrb[0].mxu0
      %1490 = vmatprep.mubr.bf16.mxu0 0
      %1491 = vmatmul.mubr.bf16.gmra.mrb[0].mxu0 %v1371
      %v1492 = vpop.f32.mrb[0].mxu0
      %v1493 = vadd.f32 %v1248, %v1492
      %v1494 = vpop.f32.mrb[0].mxu0
      %v1495 = vpop.f32.mrb[0].mxu0
      %v1496 = vadd.f32 %v1251, %v1495
      %v1497 = vpop.f32.mrb[0].mxu0
      %1498 = vmatprep.mubr.bf16.mxu0 0
      %1499 = vmatmul.mubr.bf16.gmra.mrb[0].mxu0 %v1374
      %v1500 = vpop.f32.mrb[0].mxu0
      %v1501 = vadd.f32 %v1256, %v1500
      %v1502 = vpop.f32.mrb[0].mxu0
      %v1503 = vpop.f32.mrb[0].mxu0
      %v1504 = vadd.f32 %v1259, %v1503
      %v1505 = vpop.f32.mrb[0].mxu0
      %1506 = vmatprep.mubr.bf16.mxu0 0
      %1507 = vmatmul.mubr.bf16.gmra.mrb[0].mxu0 %v1377
      %v1508 = vpop.f32.mrb[0].mxu0
      %v1509 = vadd.f32 %v1264, %v1508
      %v1510 = vpop.f32.mrb[0].mxu0
      %v1511 = vpop.f32.mrb[0].mxu0
      %v1512 = vadd.f32 %v1267, %v1511
      %v1513 = vpop.f32.mrb[0].mxu0
      %1514 = vmatprep.mubr.bf16.mxu0 0
      %1515 = vmatmul.mubr.bf16.gmra.mrb[0].mxu0 %v1380
      %v1516 = vpop.f32.mrb[0].mxu0
      %v1517 = vadd.f32 %v1272, %v1516
      %v1518 = vpop.f32.mrb[0].mxu0
      %v1519 = vpop.f32.mrb[0].mxu0
      %v1520 = vadd.f32 %v1275, %v1519
      %v1521 = vpop.f32.mrb[0].mxu0
      %1522 = vmatprep.mubr.bf16.mxu0 0
      %1523 = vmatmul.mubr.bf16.gmra.mrb[0].mxu0 %v1383
      %v1524 = vpop.f32.mrb[0].mxu0
      %v1525 = vadd.f32 %v1280, %v1524
      %v1526 = vpop.f32.mrb[0].mxu0
      %v1527 = vpop.f32.mrb[0].mxu0
      %v1528 = vadd.f32 %v1283, %v1527
      %v1529 = vpop.f32.mrb[0].mxu0
      %1530 = vmatprep.mubr.bf16.mxu0 0
      %1531 = vmatmul.mubr.bf16.gmra.mrb[0].mxu0 %v1386
      %v1532 = vpop.f32.mrb[0].mxu0
      %v1533 = vadd.f32 %v1288, %v1532
      %v1534 = vpop.f32.mrb[0].mxu0
      %v1535 = vpop.f32.mrb[0].mxu0
      %v1536 = vadd.f32 %v1291, %v1535
      %v1537 = vpop.f32.mrb[0].mxu0
      %1538 = vmatprep.mubr.bf16.mxu0 0
      %1539 = vmatmul.mubr.bf16.gmra.mrb[0].mxu0 %v1389
      %v1540 = vpop.f32.mrb[0].mxu0
      %v1541 = vadd.f32 %v1296, %v1540
      %v1542 = vpop.f32.mrb[0].mxu0
      %v1543 = vpop.f32.mrb[0].mxu0
      %v1544 = vadd.f32 %v1299, %v1543
      %v1545 = vpop.f32.mrb[0].mxu0
      %1546 = vmatprep.mubr.bf16.mxu0 0
      %1547 = vmatmul.mubr.bf16.gmra.mrb[0].mxu0 %v1392
      %v1548 = vpop.f32.mrb[0].mxu0
      %v1549 = vadd.f32 %v1304, %v1548
      %v1550 = vpop.f32.mrb[0].mxu0
      %v1551 = vpop.f32.mrb[0].mxu0
      %v1552 = vadd.f32 %v1307, %v1551
      %v1553 = vpop.f32.mrb[0].mxu0
      %1554 = vdwg.mxu0
      %s1555 = scalar_lea.vmem %s165, 48
      %v1556 = vld [vmem:[%s1555] sm:$0xff]
      %v1557 = vld [vmem:[%s1555 + $0x8] sm:$0xff]
      %v1558 = vld [vmem:[%s1555 + $0x18] sm:$0xff]
      %v1559 = vld [vmem:[%s1555 + $0x20] sm:$0xff]
      %v1560 = vld [vmem:[%s1555 + $0x30] sm:$0xff]
      %v1561 = vld [vmem:[%s1555 + $0x38] sm:$0xff]
      %v1562 = vld [vmem:[%s1555 + $0x48] sm:$0xff]
      %v1563 = vld [vmem:[%s1555 + $0x50] sm:$0xff]
      %v1564 = vld [vmem:[%s1555 + $0x60] sm:$0xff]
      %v1565 = vld [vmem:[%s1555 + $0x68] sm:$0xff]
      %v1566 = vld [vmem:[%s1555 + $0x78] sm:$0xff]
      %v1567 = vld [vmem:[%s1555 + $0x80] sm:$0xff]
      %v1568 = vld [vmem:[%s1555 + $0x90] sm:$0xff]
      %v1569 = vld [vmem:[%s1555 + $0x98] sm:$0xff]
      %v1570 = vld [vmem:[%s1555 + $0xa8] sm:$0xff]
      %v1571 = vld [vmem:[%s1555 + $0xb0] sm:$0xff]
      %v1572 = vld [vmem:[%s1555 + $0xc0] sm:$0xff]
      %v1573 = vld [vmem:[%s1555 + $0xc8] sm:$0xff]
      %v1574 = vld [vmem:[%s1555 + $0xd8] sm:$0xff]
      %v1575 = vld [vmem:[%s1555 + $0xe0] sm:$0xff]
      %v1576 = vld [vmem:[%s1555 + $0xf0] sm:$0xff]
      %v1577 = vld [vmem:[%s1555 + $0xf8] sm:$0xff]
      %v1578 = vld [vmem:[%s1555 + $0x108] sm:$0xff]
      %v1579 = vld [vmem:[%s1555 + $0x110] sm:$0xff]
      %v1580 = vld [vmem:[%s1555 + $0x120] sm:$0xff]
      %v1581 = vld [vmem:[%s1555 + $0x128] sm:$0xff]
      %v1582 = vld [vmem:[%s1555 + $0x138] sm:$0xff]
      %v1583 = vld [vmem:[%s1555 + $0x140] sm:$0xff]
      %v1584 = vld [vmem:[%s1555 + $0x150] sm:$0xff]
      %v1585 = vld [vmem:[%s1555 + $0x158] sm:$0xff]
      %v1586 = vld [vmem:[%s1555 + $0x168] sm:$0xff]
      %v1587 = vld [vmem:[%s1555 + $0x170] sm:$0xff]
      %v1588 = vld [vmem:[%s1555 + $0x1] sm:$0xff]
      %v1589 = vld [vmem:[%s1555 + $0x9] sm:$0xff]
      %v1590 = vld [vmem:[%s1555 + $0x19] sm:$0xff]
      %v1591 = vld [vmem:[%s1555 + $0x21] sm:$0xff]
      %v1592 = vld [vmem:[%s1555 + $0x31] sm:$0xff]
      %v1593 = vld [vmem:[%s1555 + $0x39] sm:$0xff]
      %v1594 = vld [vmem:[%s1555 + $0x49] sm:$0xff]
      %v1595 = vld [vmem:[%s1555 + $0x51] sm:$0xff]
      %v1596 = vld [vmem:[%s1555 + $0x61] sm:$0xff]
      %v1597 = vld [vmem:[%s1555 + $0x69] sm:$0xff]
      %v1598 = vld [vmem:[%s1555 + $0x79] sm:$0xff]
      %v1599 = vld [vmem:[%s1555 + $0x81] sm:$0xff]
      %v1600 = vld [vmem:[%s1555 + $0x91] sm:$0xff]
      %v1601 = vld [vmem:[%s1555 + $0x99] sm:$0xff]
      %v1602 = vld [vmem:[%s1555 + $0xa9] sm:$0xff]
      %v1603 = vld [vmem:[%s1555 + $0xb1] sm:$0xff]
      %v1604 = vld [vmem:[%s1555 + $0xc1] sm:$0xff]
      %v1605 = vld [vmem:[%s1555 + $0xc9] sm:$0xff]
      %v1606 = vld [vmem:[%s1555 + $0xd9] sm:$0xff]
      %v1607 = vld [vmem:[%s1555 + $0xe1] sm:$0xff]
      %v1608 = vld [vmem:[%s1555 + $0xf1] sm:$0xff]
      %v1609 = vld [vmem:[%s1555 + $0xf9] sm:$0xff]
      %v1610 = vld [vmem:[%s1555 + $0x109] sm:$0xff]
      %v1611 = vld [vmem:[%s1555 + $0x111] sm:$0xff]
      %v1612 = vld [vmem:[%s1555 + $0x121] sm:$0xff]
      %v1613 = vld [vmem:[%s1555 + $0x129] sm:$0xff]
      %v1614 = vld [vmem:[%s1555 + $0x139] sm:$0xff]
      %v1615 = vld [vmem:[%s1555 + $0x141] sm:$0xff]
      %v1616 = vld [vmem:[%s1555 + $0x151] sm:$0xff]
      %v1617 = vld [vmem:[%s1555 + $0x159] sm:$0xff]
      %v1618 = vld [vmem:[%s1555 + $0x169] sm:$0xff]
      %v1619 = vld [vmem:[%s1555 + $0x171] sm:$0xff]
      %v1620 = vld [vmem:[%s1555 + $0x2] sm:$0xff]
      %v1621 = vld [vmem:[%s1555 + $0xa] sm:$0xff]
      %v1622 = vld [vmem:[%s1555 + $0x1a] sm:$0xff]
      %v1623 = vld [vmem:[%s1555 + $0x22] sm:$0xff]
      %v1624 = vld [vmem:[%s1555 + $0x32] sm:$0xff]
      %v1625 = vld [vmem:[%s1555 + $0x3a] sm:$0xff]
      %v1626 = vld [vmem:[%s1555 + $0x4a] sm:$0xff]
      %v1627 = vld [vmem:[%s1555 + $0x52] sm:$0xff]
      %v1628 = vld [vmem:[%s1555 + $0x62] sm:$0xff]
      %v1629 = vld [vmem:[%s1555 + $0x6a] sm:$0xff]
      %v1630 = vld [vmem:[%s1555 + $0x7a] sm:$0xff]
      %v1631 = vld [vmem:[%s1555 + $0x82] sm:$0xff]
      %v1632 = vld [vmem:[%s1555 + $0x92] sm:$0xff]
      %v1633 = vld [vmem:[%s1555 + $0x9a] sm:$0xff]
      %v1634 = vld [vmem:[%s1555 + $0xaa] sm:$0xff]
      %v1635 = vld [vmem:[%s1555 + $0xb2] sm:$0xff]
      %v1636 = vld [vmem:[%s1555 + $0xc2] sm:$0xff]
      %v1637 = vld [vmem:[%s1555 + $0xca] sm:$0xff]
      %v1638 = vld [vmem:[%s1555 + $0xda] sm:$0xff]
      %v1639 = vld [vmem:[%s1555 + $0xe2] sm:$0xff]
      %v1640 = vld [vmem:[%s1555 + $0xf2] sm:$0xff]
      %v1641 = vld [vmem:[%s1555 + $0xfa] sm:$0xff]
      %v1642 = vld [vmem:[%s1555 + $0x10a] sm:$0xff]
      %v1643 = vld [vmem:[%s1555 + $0x112] sm:$0xff]
      %v1644 = vld [vmem:[%s1555 + $0x122] sm:$0xff]
      %v1645 = vld [vmem:[%s1555 + $0x12a] sm:$0xff]
      %v1646 = vld [vmem:[%s1555 + $0x13a] sm:$0xff]
      %v1647 = vld [vmem:[%s1555 + $0x142] sm:$0xff]
      %v1648 = vld [vmem:[%s1555 + $0x152] sm:$0xff]
      %v1649 = vld [vmem:[%s1555 + $0x15a] sm:$0xff]
      %v1650 = vld [vmem:[%s1555 + $0x16a] sm:$0xff]
      %v1651 = vld [vmem:[%s1555 + $0x172] sm:$0xff]
      %1684 = vrot.lane.b32.xlu0 %v1588, 32
      %v1685 = vpop.permute.xlu0 %1684
      %1686 = vrot.lane.b32.xlu0 %v1589, 32
      %v1687 = vpop.permute.xlu0 %1686
      %1688 = vrot.lane.b32.xlu0 %v1590, 32
      %v1689 = vpop.permute.xlu0 %1688
      %1690 = vrot.lane.b32.xlu0 %v1591, 32
      %v1691 = vpop.permute.xlu0 %1690
      %1692 = vrot.lane.b32.xlu0 %v1592, 32
      %v1693 = vpop.permute.xlu0 %1692
      %1694 = vrot.lane.b32.xlu0 %v1593, 32
      %v1695 = vpop.permute.xlu0 %1694
      %1696 = vrot.lane.b32.xlu0 %v1594, 32
      %v1697 = vpop.permute.xlu0 %1696
      %1698 = vrot.lane.b32.xlu0 %v1595, 32
      %v1699 = vpop.permute.xlu0 %1698
      %1700 = vrot.lane.b32.xlu0 %v1596, 32
      %v1701 = vpop.permute.xlu0 %1700
      %1702 = vrot.lane.b32.xlu0 %v1597, 32
      %v1703 = vpop.permute.xlu0 %1702
      %1704 = vrot.lane.b32.xlu0 %v1598, 32
      %v1705 = vpop.permute.xlu0 %1704
      %1706 = vrot.lane.b32.xlu0 %v1599, 32
      %v1707 = vpop.permute.xlu0 %1706
      %1708 = vrot.lane.b32.xlu0 %v1600, 32
      %v1709 = vpop.permute.xlu0 %1708
      %1710 = vrot.lane.b32.xlu0 %v1601, 32
      %v1711 = vpop.permute.xlu0 %1710
      %1712 = vrot.lane.b32.xlu0 %v1602, 32
      %v1713 = vpop.permute.xlu0 %1712
      %1714 = vrot.lane.b32.xlu0 %v1603, 32
      %v1715 = vpop.permute.xlu0 %1714
      %1716 = vrot.lane.b32.xlu0 %v1604, 32
      %v1717 = vpop.permute.xlu0 %1716
      %1718 = vrot.lane.b32.xlu0 %v1605, 32
      %v1719 = vpop.permute.xlu0 %1718
      %1720 = vrot.lane.b32.xlu0 %v1606, 32
      %v1721 = vpop.permute.xlu0 %1720
      %1722 = vrot.lane.b32.xlu0 %v1607, 32
      %v1723 = vpop.permute.xlu0 %1722
      %1724 = vrot.lane.b32.xlu0 %v1608, 32
      %v1725 = vpop.permute.xlu0 %1724
      %1726 = vrot.lane.b32.xlu0 %v1609, 32
      %v1727 = vpop.permute.xlu0 %1726
      %1728 = vrot.lane.b32.xlu0 %v1610, 32
      %v1729 = vpop.permute.xlu0 %1728
      %1730 = vrot.lane.b32.xlu0 %v1611, 32
      %v1731 = vpop.permute.xlu0 %1730
      %1732 = vrot.lane.b32.xlu0 %v1612, 32
      %v1733 = vpop.permute.xlu0 %1732
      %1734 = vrot.lane.b32.xlu0 %v1613, 32
      %v1735 = vpop.permute.xlu0 %1734
      %1736 = vrot.lane.b32.xlu0 %v1614, 32
      %v1737 = vpop.permute.xlu0 %1736
      %1738 = vrot.lane.b32.xlu0 %v1615, 32
      %v1739 = vpop.permute.xlu0 %1738
      %1740 = vrot.lane.b32.xlu0 %v1616, 32
      %v1741 = vpop.permute.xlu0 %1740
      %1742 = vrot.lane.b32.xlu0 %v1617, 32
      %v1743 = vpop.permute.xlu0 %1742
      %1744 = vrot.lane.b32.xlu0 %v1618, 32
      %v1745 = vpop.permute.xlu0 %1744
      %1746 = vrot.lane.b32.xlu0 %v1619, 32
      %v1747 = vpop.permute.xlu0 %1746
      %1812 = vrot.lane.b32.xlu0 %v1620, 64
      %v1813 = vpop.permute.xlu0 %1812
      %1814 = vrot.lane.b32.xlu0 %v1621, 64
      %v1815 = vpop.permute.xlu0 %1814
      %1816 = vrot.lane.b32.xlu0 %v1622, 64
      %v1817 = vpop.permute.xlu0 %1816
      %1818 = vrot.lane.b32.xlu0 %v1623, 64
      %v1819 = vpop.permute.xlu0 %1818
      %1820 = vrot.lane.b32.xlu0 %v1624, 64
      %v1821 = vpop.permute.xlu0 %1820
      %1822 = vrot.lane.b32.xlu0 %v1625, 64
      %v1823 = vpop.permute.xlu0 %1822
      %1824 = vrot.lane.b32.xlu0 %v1626, 64
      %v1825 = vpop.permute.xlu0 %1824
      %1826 = vrot.lane.b32.xlu0 %v1627, 64
      %v1827 = vpop.permute.xlu0 %1826
      %1828 = vrot.lane.b32.xlu0 %v1628, 64
      %v1829 = vpop.permute.xlu0 %1828
      %1830 = vrot.lane.b32.xlu0 %v1629, 64
      %v1831 = vpop.permute.xlu0 %1830
      %1832 = vrot.lane.b32.xlu0 %v1630, 64
      %v1833 = vpop.permute.xlu0 %1832
      %1834 = vrot.lane.b32.xlu0 %v1631, 64
      %v1835 = vpop.permute.xlu0 %1834
      %1836 = vrot.lane.b32.xlu0 %v1632, 64
      %v1837 = vpop.permute.xlu0 %1836
      %1838 = vrot.lane.b32.xlu0 %v1633, 64
      %v1839 = vpop.permute.xlu0 %1838
      %1840 = vrot.lane.b32.xlu0 %v1634, 64
      %v1841 = vpop.permute.xlu0 %1840
      %1842 = vrot.lane.b32.xlu0 %v1635, 64
      %v1843 = vpop.permute.xlu0 %1842
      %1844 = vrot.lane.b32.xlu0 %v1636, 64
      %v1845 = vpop.permute.xlu0 %1844
      %1846 = vrot.lane.b32.xlu0 %v1637, 64
      %v1847 = vpop.permute.xlu0 %1846
      %1848 = vrot.lane.b32.xlu0 %v1638, 64
      %v1849 = vpop.permute.xlu0 %1848
      %1850 = vrot.lane.b32.xlu0 %v1639, 64
      %v1851 = vpop.permute.xlu0 %1850
      %1852 = vrot.lane.b32.xlu0 %v1640, 64
      %v1853 = vpop.permute.xlu0 %1852
      %1854 = vrot.lane.b32.xlu0 %v1641, 64
      %v1855 = vpop.permute.xlu0 %1854
      %1856 = vrot.lane.b32.xlu0 %v1642, 64
      %v1857 = vpop.permute.xlu0 %1856
      %1858 = vrot.lane.b32.xlu0 %v1643, 64
      %v1859 = vpop.permute.xlu0 %1858
      %1860 = vrot.lane.b32.xlu0 %v1644, 64
      %v1861 = vpop.permute.xlu0 %1860
      %1862 = vrot.lane.b32.xlu0 %v1645, 64
      %v1863 = vpop.permute.xlu0 %1862
      %1864 = vrot.lane.b32.xlu0 %v1646, 64
      %v1865 = vpop.permute.xlu0 %1864
      %1866 = vrot.lane.b32.xlu0 %v1647, 64
      %v1867 = vpop.permute.xlu0 %1866
      %1868 = vrot.lane.b32.xlu0 %v1648, 64
      %v1869 = vpop.permute.xlu0 %1868
      %1870 = vrot.lane.b32.xlu0 %v1649, 64
      %v1871 = vpop.permute.xlu0 %1870
      %1872 = vrot.lane.b32.xlu0 %v1650, 64
      %v1873 = vpop.permute.xlu0 %1872
      %1874 = vrot.lane.b32.xlu0 %v1651, 64
      %v1875 = vpop.permute.xlu0 %1874
      %v1908 = vsel %vm524, %v1556, %v1685
      %v1909 = vsel %vm524, %v1557, %v1687
      %v1910 = vsel %vm524, %v1558, %v1689
      %v1911 = vsel %vm524, %v1559, %v1691
      %v1912 = vsel %vm524, %v1560, %v1693
      %v1913 = vsel %vm524, %v1561, %v1695
      %v1914 = vsel %vm524, %v1562, %v1697
      %v1915 = vsel %vm524, %v1563, %v1699
      %v1916 = vsel %vm524, %v1564, %v1701
      %v1917 = vsel %vm524, %v1565, %v1703
      %v1918 = vsel %vm524, %v1566, %v1705
      %v1919 = vsel %vm524, %v1567, %v1707
      %v1920 = vsel %vm524, %v1568, %v1709
      %v1921 = vsel %vm524, %v1569, %v1711
      %v1922 = vsel %vm524, %v1570, %v1713
      %v1923 = vsel %vm524, %v1571, %v1715
      %v1924 = vsel %vm524, %v1572, %v1717
      %v1925 = vsel %vm524, %v1573, %v1719
      %v1926 = vsel %vm524, %v1574, %v1721
      %v1927 = vsel %vm524, %v1575, %v1723
      %v1928 = vsel %vm524, %v1576, %v1725
      %v1929 = vsel %vm524, %v1577, %v1727
      %v1930 = vsel %vm524, %v1578, %v1729
      %v1931 = vsel %vm524, %v1579, %v1731
      %v1932 = vsel %vm524, %v1580, %v1733
      %v1933 = vsel %vm524, %v1581, %v1735
      %v1934 = vsel %vm524, %v1582, %v1737
      %v1935 = vsel %vm524, %v1583, %v1739
      %v1936 = vsel %vm524, %v1584, %v1741
      %v1937 = vsel %vm524, %v1585, %v1743
      %v1938 = vsel %vm524, %v1586, %v1745
      %v1939 = vsel %vm524, %v1587, %v1747
      %v1940 = vsel %vm557, %v1908, %v1813
      %v1941 = vsel %vm557, %v1909, %v1815
      %v1942 = vsel %vm557, %v1910, %v1817
      %v1943 = vsel %vm557, %v1911, %v1819
      %v1944 = vsel %vm557, %v1912, %v1821
      %v1945 = vsel %vm557, %v1913, %v1823
      %v1946 = vsel %vm557, %v1914, %v1825
      %v1947 = vsel %vm557, %v1915, %v1827
      %v1948 = vsel %vm557, %v1916, %v1829
      %v1949 = vsel %vm557, %v1917, %v1831
      %v1950 = vsel %vm557, %v1918, %v1833
      %v1951 = vsel %vm557, %v1919, %v1835
      %v1952 = vsel %vm557, %v1920, %v1837
      %v1953 = vsel %vm557, %v1921, %v1839
      %v1954 = vsel %vm557, %v1922, %v1841
      %v1955 = vsel %vm557, %v1923, %v1843
      %v1956 = vsel %vm557, %v1924, %v1845
      %v1957 = vsel %vm557, %v1925, %v1847
      %v1958 = vsel %vm557, %v1926, %v1849
      %v1959 = vsel %vm557, %v1927, %v1851
      %v1960 = vsel %vm557, %v1928, %v1853
      %v1961 = vsel %vm557, %v1929, %v1855
      %v1962 = vsel %vm557, %v1930, %v1857
      %v1963 = vsel %vm557, %v1931, %v1859
      %v1964 = vsel %vm557, %v1932, %v1861
      %v1965 = vsel %vm557, %v1933, %v1863
      %v1966 = vsel %vm557, %v1934, %v1865
      %v1967 = vsel %vm557, %v1935, %v1867
      %v1968 = vsel %vm557, %v1936, %v1869
      %v1969 = vsel %vm557, %v1937, %v1871
      %v1970 = vsel %vm557, %v1938, %v1873
      %v1971 = vsel %vm557, %v1939, %v1875
      %v1972 = vpack.c.bf16 %v1941, %v1940
      %v1973 = vpack.c.bf16 %v1943, %v1942
      %v1974 = vpack.c.bf16 %v1945, %v1944
      %v1975 = vpack.c.bf16 %v1947, %v1946
      %v1976 = vpack.c.bf16 %v1949, %v1948
      %v1977 = vpack.c.bf16 %v1951, %v1950
      %v1978 = vpack.c.bf16 %v1953, %v1952
      %v1979 = vpack.c.bf16 %v1955, %v1954
      %v1980 = vpack.c.bf16 %v1957, %v1956
      %v1981 = vpack.c.bf16 %v1959, %v1958
      %v1982 = vpack.c.bf16 %v1961, %v1960
      %v1983 = vpack.c.bf16 %v1963, %v1962
      %v1984 = vpack.c.bf16 %v1965, %v1964
      %v1985 = vpack.c.bf16 %v1967, %v1966
      %v1986 = vpack.c.bf16 %v1969, %v1968
      %v1987 = vpack.c.bf16 %v1971, %v1970
      %s1988 = scalar_lea.vmem %s1, 96
      %v1989 = vld [vmem:[%s1988] sm:$0xf]
      %v1990 = vld [vmem:[%s1988 + $0x4] sm:$0xf]
      %v1991 = vld [vmem:[%s1988 + $0x8] sm:$0xf]
      %v1992 = vld [vmem:[%s1988 + $0xc] sm:$0xf]
      %v1993 = vld [vmem:[%s1988 + $0x10] sm:$0xf]
      %v1994 = vld [vmem:[%s1988 + $0x14] sm:$0xf]
      %v1995 = vld [vmem:[%s1988 + $0x18] sm:$0xf]
      %v1996 = vld [vmem:[%s1988 + $0x1c] sm:$0xf]
      %v1997 = vld [vmem:[%s1988 + $0x20] sm:$0xf]
      %v1998 = vld [vmem:[%s1988 + $0x24] sm:$0xf]
      %v1999 = vld [vmem:[%s1988 + $0x28] sm:$0xf]
      %v2000 = vld [vmem:[%s1988 + $0x2c] sm:$0xf]
      %v2013 = vunpack.c.l.b16 %v1989
      %v2014 = vunpack.c.l.b16 %v1990
      %v2015 = vunpack.c.l.b16 %v1991
      %v2016 = vunpack.c.l.b16 %v1992
      %v2017 = vunpack.c.l.b16 %v1993
      %v2018 = vunpack.c.l.b16 %v1994
      %v2019 = vunpack.c.l.b16 %v1995
      %v2020 = vunpack.c.l.b16 %v1996
      %v2021 = vunpack.c.l.b16 %v1997
      %v2022 = vunpack.c.l.b16 %v1998
      %v2023 = vunpack.c.l.b16 %v1999
      %v2024 = vunpack.c.l.b16 %v2000
      %v2025 = vpack.c.b16 %v2014, %v2013
      %v2026 = vpack.c.b16 %v2016, %v2015
      %v2027 = vpack.c.b16 %v2018, %v2017
      %v2028 = vpack.c.b16 %v2020, %v2019
      %v2029 = vpack.c.b16 %v2022, %v2021
      %v2030 = vpack.c.b16 %v2024, %v2023
      %v2038 = vsel %vm1100, %v1972, 0
      %v2041 = vsel %vm1100, %v1973, 0
      %v2044 = vsel %vm1100, %v1974, 0
      %v2047 = vsel %vm1100, %v1975, 0
      %v2050 = vsel %vm1100, %v1976, 0
      %v2053 = vsel %vm1100, %v1977, 0
      %v2056 = vsel %vm1100, %v1978, 0
      %v2059 = vsel %vm1100, %v1979, 0
      %v2062 = vsel %vm1100, %v1980, 0
      %v2065 = vsel %vm1100, %v1981, 0
      %v2068 = vsel %vm1100, %v1982, 0
      %v2071 = vsel %vm1100, %v1983, 0
      %v2074 = vsel %vm1100, %v1984, 0
      %v2077 = vsel %vm1100, %v1985, 0
      %v2080 = vsel %vm1100, %v1986, 0
      %v2083 = vsel %vm1100, %v1987, 0
      %2085 = vmatprep.subr.bf16.mxu0 0
      %2086 = vmatpush1.bf16.msra.mxu0 %v2025
      %2087 = vmatprep.subr.bf16.mxu0 0
      %2088 = vmatpush1.bf16.msra.mxu0 %v2026
      %2089 = vmatprep.subr.bf16.mxu0 0
      %2090 = vmatpush1.bf16.msra.mxu0 %v2027
      %2091 = vmatprep.subr.bf16.mxu0 0
      %2092 = vmatpush1.bf16.msra.mxu0 %v2028
      %2093 = vmatprep.subr.bf16.mxu0 0
      %2094 = vmatpush1.bf16.msra.mxu0 %v2029
      %2095 = vmatprep.subr.bf16.mxu0 0
      %2096 = vmatpush1.bf16.msra.mxu0 %v2030
      %2097 = vmatprep.subr.bf16.mxu0 0
      %2098 = vmatpush1.bf16.msra.mxu0 0
      %2099 = vmatprep.subr.bf16.mxu0 0
      %2100 = vmatpush1.bf16.msra.mxu0 0
      %2101 = vmatprep.subr.bf16.mxu0 0
      %2102 = vmatpush1.bf16.msra.mxu0 0
      %2103 = vmatprep.subr.bf16.mxu0 0
      %2104 = vmatpush1.bf16.msra.mxu0 0
      %2105 = vmatprep.subr.bf16.mxu0 0
      %2106 = vmatpush1.bf16.msra.mxu0 0
      %2107 = vmatprep.subr.bf16.mxu0 0
      %2108 = vmatpush1.bf16.msra.mxu0 0
      %2109 = vmatprep.subr.bf16.mxu0 0
      %2110 = vmatpush1.bf16.msra.mxu0 0
      %2111 = vmatprep.subr.bf16.mxu0 0
      %2112 = vmatpush1.bf16.msra.mxu0 0
      %2113 = vmatprep.subr.bf16.mxu0 0
      %2114 = vmatpush1.bf16.msra.mxu0 0
      %2115 = vmatprep.subr.bf16.mxu0 0
      %2116 = vmatpush1.bf16.msra.mxu0 0
      %2117 = vmatprep.mubr.bf16.mxu0 0
      %2118 = vmatmul.mubr.bf16.gmra.mrb[0].mxu0 %v2038
      %v2119 = vpop.f32.mrb[0].mxu0
      %v2120 = vadd.f32 0.0, %v2119
      %v2121 = vpop.f32.mrb[0].mxu0
      %v2122 = vpop.f32.mrb[0].mxu0
      %v2123 = vadd.f32 0.0, %v2122
      %v2124 = vpop.f32.mrb[0].mxu0
      %2125 = vmatprep.mubr.bf16.mxu0 0
      %2126 = vmatmul.mubr.bf16.gmra.mrb[0].mxu0 %v2041
      %v2127 = vpop.f32.mrb[0].mxu0
      %v2128 = vadd.f32 0.0, %v2127
      %v2129 = vpop.f32.mrb[0].mxu0
      %v2130 = vpop.f32.mrb[0].mxu0
      %v2131 = vadd.f32 0.0, %v2130
      %v2132 = vpop.f32.mrb[0].mxu0
      %2133 = vmatprep.mubr.bf16.mxu0 0
      %2134 = vmatmul.mubr.bf16.gmra.mrb[0].mxu0 %v2044
      %v2135 = vpop.f32.mrb[0].mxu0
      %v2136 = vadd.f32 0.0, %v2135
      %v2137 = vpop.f32.mrb[0].mxu0
      %v2138 = vpop.f32.mrb[0].mxu0
      %v2139 = vadd.f32 0.0, %v2138
      %v2140 = vpop.f32.mrb[0].mxu0
      %2141 = vmatprep.mubr.bf16.mxu0 0
      %2142 = vmatmul.mubr.bf16.gmra.mrb[0].mxu0 %v2047
      %v2143 = vpop.f32.mrb[0].mxu0
      %v2144 = vadd.f32 0.0, %v2143
      %v2145 = vpop.f32.mrb[0].mxu0
      %v2146 = vpop.f32.mrb[0].mxu0
      %v2147 = vadd.f32 0.0, %v2146
      %v2148 = vpop.f32.mrb[0].mxu0
      %2149 = vmatprep.mubr.bf16.mxu0 0
      %2150 = vmatmul.mubr.bf16.gmra.mrb[0].mxu0 %v2050
      %v2151 = vpop.f32.mrb[0].mxu0
      %v2152 = vadd.f32 0.0, %v2151
      %v2153 = vpop.f32.mrb[0].mxu0
      %v2154 = vpop.f32.mrb[0].mxu0
      %v2155 = vadd.f32 0.0, %v2154
      %v2156 = vpop.f32.mrb[0].mxu0
      %2157 = vmatprep.mubr.bf16.mxu0 0
      %2158 = vmatmul.mubr.bf16.gmra.mrb[0].mxu0 %v2053
      %v2159 = vpop.f32.mrb[0].mxu0
      %v2160 = vadd.f32 0.0, %v2159
      %v2161 = vpop.f32.mrb[0].mxu0
      %v2162 = vpop.f32.mrb[0].mxu0
      %v2163 = vadd.f32 0.0, %v2162
      %v2164 = vpop.f32.mrb[0].mxu0
      %2165 = vmatprep.mubr.bf16.mxu0 0
      %2166 = vmatmul.mubr.bf16.gmra.mrb[0].mxu0 %v2056
      %v2167 = vpop.f32.mrb[0].mxu0
      %v2168 = vadd.f32 0.0, %v2167
      %v2169 = vpop.f32.mrb[0].mxu0
      %v2170 = vpop.f32.mrb[0].mxu0
      %v2171 = vadd.f32 0.0, %v2170
      %v2172 = vpop.f32.mrb[0].mxu0
      %2173 = vmatprep.mubr.bf16.mxu0 0
      %2174 = vmatmul.mubr.bf16.gmra.mrb[0].mxu0 %v2059
      %v2175 = vpop.f32.mrb[0].mxu0
      %v2176 = vadd.f32 0.0, %v2175
      %v2177 = vpop.f32.mrb[0].mxu0
      %v2178 = vpop.f32.mrb[0].mxu0
      %v2179 = vadd.f32 0.0, %v2178
      %v2180 = vpop.f32.mrb[0].mxu0
      %2181 = vmatprep.mubr.bf16.mxu0 0
      %2182 = vmatmul.mubr.bf16.gmra.mrb[0].mxu0 %v2062
      %v2183 = vpop.f32.mrb[0].mxu0
      %v2184 = vadd.f32 0.0, %v2183
      %v2185 = vpop.f32.mrb[0].mxu0
      %v2186 = vpop.f32.mrb[0].mxu0
      %v2187 = vadd.f32 0.0, %v2186
      %v2188 = vpop.f32.mrb[0].mxu0
      %2189 = vmatprep.mubr.bf16.mxu0 0
      %2190 = vmatmul.mubr.bf16.gmra.mrb[0].mxu0 %v2065
      %v2191 = vpop.f32.mrb[0].mxu0
      %v2192 = vadd.f32 0.0, %v2191
      %v2193 = vpop.f32.mrb[0].mxu0
      %v2194 = vpop.f32.mrb[0].mxu0
      %v2195 = vadd.f32 0.0, %v2194
      %v2196 = vpop.f32.mrb[0].mxu0
      %2197 = vmatprep.mubr.bf16.mxu0 0
      %2198 = vmatmul.mubr.bf16.gmra.mrb[0].mxu0 %v2068
      %v2199 = vpop.f32.mrb[0].mxu0
      %v2200 = vadd.f32 0.0, %v2199
      %v2201 = vpop.f32.mrb[0].mxu0
      %v2202 = vpop.f32.mrb[0].mxu0
      %v2203 = vadd.f32 0.0, %v2202
      %v2204 = vpop.f32.mrb[0].mxu0
      %2205 = vmatprep.mubr.bf16.mxu0 0
      %2206 = vmatmul.mubr.bf16.gmra.mrb[0].mxu0 %v2071
      %v2207 = vpop.f32.mrb[0].mxu0
      %v2208 = vadd.f32 0.0, %v2207
      %v2209 = vpop.f32.mrb[0].mxu0
      %v2210 = vpop.f32.mrb[0].mxu0
      %v2211 = vadd.f32 0.0, %v2210
      %v2212 = vpop.f32.mrb[0].mxu0
      %2213 = vmatprep.mubr.bf16.mxu0 0
      %2214 = vmatmul.mubr.bf16.gmra.mrb[0].mxu0 %v2074
      %v2215 = vpop.f32.mrb[0].mxu0
      %v2216 = vadd.f32 0.0, %v2215
      %v2217 = vpop.f32.mrb[0].mxu0
      %v2218 = vpop.f32.mrb[0].mxu0
      %v2219 = vadd.f32 0.0, %v2218
      %v2220 = vpop.f32.mrb[0].mxu0
      %2221 = vmatprep.mubr.bf16.mxu0 0
      %2222 = vmatmul.mubr.bf16.gmra.mrb[0].mxu0 %v2077
      %v2223 = vpop.f32.mrb[0].mxu0
      %v2224 = vadd.f32 0.0, %v2223
      %v2225 = vpop.f32.mrb[0].mxu0
      %v2226 = vpop.f32.mrb[0].mxu0
      %v2227 = vadd.f32 0.0, %v2226
      %v2228 = vpop.f32.mrb[0].mxu0
      %2229 = vmatprep.mubr.bf16.mxu0 0
      %2230 = vmatmul.mubr.bf16.gmra.mrb[0].mxu0 %v2080
      %v2231 = vpop.f32.mrb[0].mxu0
      %v2232 = vadd.f32 0.0, %v2231
      %v2233 = vpop.f32.mrb[0].mxu0
      %v2234 = vpop.f32.mrb[0].mxu0
      %v2235 = vadd.f32 0.0, %v2234
      %v2236 = vpop.f32.mrb[0].mxu0
      %2237 = vmatprep.mubr.bf16.mxu0 0
      %2238 = vmatmul.mubr.bf16.gmra.mrb[0].mxu0 %v2083
      %v2239 = vpop.f32.mrb[0].mxu0
      %v2240 = vadd.f32 0.0, %v2239
      %v2241 = vpop.f32.mrb[0].mxu0
      %v2242 = vpop.f32.mrb[0].mxu0
      %v2243 = vadd.f32 0.0, %v2242
      %v2244 = vpop.f32.mrb[0].mxu0
      %2245 = vdwg.mxu0
      %v2246 = vadd.f32 %v1429, %v2120
      %v2247 = vadd.f32 %v1432, %v2123
      %v2248 = vadd.f32 %v1437, %v2128
      %v2249 = vadd.f32 %v1440, %v2131
      %v2250 = vadd.f32 %v1445, %v2136
      %v2251 = vadd.f32 %v1448, %v2139
      %v2252 = vadd.f32 %v1453, %v2144
      %v2253 = vadd.f32 %v1456, %v2147
      %v2254 = vadd.f32 %v1461, %v2152
      %v2255 = vadd.f32 %v1464, %v2155
      %v2256 = vadd.f32 %v1469, %v2160
      %v2257 = vadd.f32 %v1472, %v2163
      %v2258 = vadd.f32 %v1477, %v2168
      %v2259 = vadd.f32 %v1480, %v2171
      %v2260 = vadd.f32 %v1485, %v2176
      %v2261 = vadd.f32 %v1488, %v2179
      %v2262 = vadd.f32 %v1493, %v2184
      %v2263 = vadd.f32 %v1496, %v2187
      %v2264 = vadd.f32 %v1501, %v2192
      %v2265 = vadd.f32 %v1504, %v2195
      %v2266 = vadd.f32 %v1509, %v2200
      %v2267 = vadd.f32 %v1512, %v2203
      %v2268 = vadd.f32 %v1517, %v2208
      %v2269 = vadd.f32 %v1520, %v2211
      %v2270 = vadd.f32 %v1525, %v2216
      %v2271 = vadd.f32 %v1528, %v2219
      %v2272 = vadd.f32 %v1533, %v2224
      %v2273 = vadd.f32 %v1536, %v2227
      %v2274 = vadd.f32 %v1541, %v2232
      %v2275 = vadd.f32 %v1544, %v2235
      %v2276 = vadd.f32 %v1549, %v2240
      %v2277 = vadd.f32 %v1552, %v2243
      %v2278 = vld [vmem:[%s2] sm:$0x1]
      %v2280 = vlaneseq
      %v2281 = vshrl.u32 %v2280, 7
      %v2282 = vsub.s32 0, %v2281
      %v2283 = vrot.slane %v2278, %v2282
      %v2285 = vadd.f32 %v2246, %v2283
      %v2286 = vadd.f32 %v2247, %v2283
      %v2287 = vadd.f32 %v2248, %v2283
      %v2288 = vadd.f32 %v2249, %v2283
      %v2289 = vadd.f32 %v2250, %v2283
      %v2290 = vadd.f32 %v2251, %v2283
      %v2291 = vadd.f32 %v2252, %v2283
      %v2292 = vadd.f32 %v2253, %v2283
      %v2293 = vadd.f32 %v2254, %v2283
      %v2294 = vadd.f32 %v2255, %v2283
      %v2295 = vadd.f32 %v2256, %v2283
      %v2296 = vadd.f32 %v2257, %v2283
      %v2297 = vadd.f32 %v2258, %v2283
      %v2298 = vadd.f32 %v2259, %v2283
      %v2299 = vadd.f32 %v2260, %v2283
      %v2300 = vadd.f32 %v2261, %v2283
      %v2301 = vadd.f32 %v2262, %v2283
      %v2302 = vadd.f32 %v2263, %v2283
      %v2303 = vadd.f32 %v2264, %v2283
      %v2304 = vadd.f32 %v2265, %v2283
      %v2305 = vadd.f32 %v2266, %v2283
      %v2306 = vadd.f32 %v2267, %v2283
      %v2307 = vadd.f32 %v2268, %v2283
      %v2308 = vadd.f32 %v2269, %v2283
      %v2309 = vadd.f32 %v2270, %v2283
      %v2310 = vadd.f32 %v2271, %v2283
      %v2311 = vadd.f32 %v2272, %v2283
      %v2312 = vadd.f32 %v2273, %v2283
      %v2313 = vadd.f32 %v2274, %v2283
      %v2314 = vadd.f32 %v2275, %v2283
      %v2315 = vadd.f32 %v2276, %v2283
      %v2316 = vadd.f32 %v2277, %v2283
      %v2317 = vmax.f32 %v2285, 0.0
      %v2318 = vmax.f32 %v2286, 0.0
      %v2319 = vmax.f32 %v2287, 0.0
      %v2320 = vmax.f32 %v2288, 0.0
      %v2321 = vmax.f32 %v2289, 0.0
      %v2322 = vmax.f32 %v2290, 0.0
      %v2323 = vmax.f32 %v2291, 0.0
      %v2324 = vmax.f32 %v2292, 0.0
      %v2325 = vmax.f32 %v2293, 0.0
      %v2326 = vmax.f32 %v2294, 0.0
      %v2327 = vmax.f32 %v2295, 0.0
      %v2328 = vmax.f32 %v2296, 0.0
      %v2329 = vmax.f32 %v2297, 0.0
      %v2330 = vmax.f32 %v2298, 0.0
      %v2331 = vmax.f32 %v2299, 0.0
      %v2332 = vmax.f32 %v2300, 0.0
      %v2333 = vmax.f32 %v2301, 0.0
      %v2334 = vmax.f32 %v2302, 0.0
      %v2335 = vmax.f32 %v2303, 0.0
      %v2336 = vmax.f32 %v2304, 0.0
      %v2337 = vmax.f32 %v2305, 0.0
      %v2338 = vmax.f32 %v2306, 0.0
      %v2339 = vmax.f32 %v2307, 0.0
      %v2340 = vmax.f32 %v2308, 0.0
      %v2341 = vmax.f32 %v2309, 0.0
      %v2342 = vmax.f32 %v2310, 0.0
      %v2343 = vmax.f32 %v2311, 0.0
      %v2344 = vmax.f32 %v2312, 0.0
      %v2345 = vmax.f32 %v2313, 0.0
      %v2346 = vmax.f32 %v2314, 0.0
      %v2347 = vmax.f32 %v2315, 0.0
      %v2348 = vmax.f32 %v2316, 0.0
      %2349 = vst.msk [vmem:[%s170] sm:$0xff] %vm524, %v2317
      %2350 = vst.msk [vmem:[%s170 + $0x8] sm:$0xff] %vm524, %v2318
      %2351 = vst.msk [vmem:[%s170 + $0x10] sm:$0xff] %vm524, %v2319
      %2352 = vst.msk [vmem:[%s170 + $0x18] sm:$0xff] %vm524, %v2320
      %2353 = vst.msk [vmem:[%s170 + $0x20] sm:$0xff] %vm524, %v2321
      %2354 = vst.msk [vmem:[%s170 + $0x28] sm:$0xff] %vm524, %v2322
      %2355 = vst.msk [vmem:[%s170 + $0x30] sm:$0xff] %vm524, %v2323
      %2356 = vst.msk [vmem:[%s170 + $0x38] sm:$0xff] %vm524, %v2324
      %2357 = vst.msk [vmem:[%s170 + $0x40] sm:$0xff] %vm524, %v2325
      %2358 = vst.msk [vmem:[%s170 + $0x48] sm:$0xff] %vm524, %v2326
      %2359 = vst.msk [vmem:[%s170 + $0x50] sm:$0xff] %vm524, %v2327
      %2360 = vst.msk [vmem:[%s170 + $0x58] sm:$0xff] %vm524, %v2328
      %2361 = vst.msk [vmem:[%s170 + $0x60] sm:$0xff] %vm524, %v2329
      %2362 = vst.msk [vmem:[%s170 + $0x68] sm:$0xff] %vm524, %v2330
      %2363 = vst.msk [vmem:[%s170 + $0x70] sm:$0xff] %vm524, %v2331
      %2364 = vst.msk [vmem:[%s170 + $0x78] sm:$0xff] %vm524, %v2332
      %2365 = vst.msk [vmem:[%s170 + $0x80] sm:$0xff] %vm524, %v2333
      %2366 = vst.msk [vmem:[%s170 + $0x88] sm:$0xff] %vm524, %v2334
      %2367 = vst.msk [vmem:[%s170 + $0x90] sm:$0xff] %vm524, %v2335
      %2368 = vst.msk [vmem:[%s170 + $0x98] sm:$0xff] %vm524, %v2336
      %2369 = vst.msk [vmem:[%s170 + $0xa0] sm:$0xff] %vm524, %v2337
      %2370 = vst.msk [vmem:[%s170 + $0xa8] sm:$0xff] %vm524, %v2338
      %2371 = vst.msk [vmem:[%s170 + $0xb0] sm:$0xff] %vm524, %v2339
      %2372 = vst.msk [vmem:[%s170 + $0xb8] sm:$0xff] %vm524, %v2340
      %2373 = vst.msk [vmem:[%s170 + $0xc0] sm:$0xff] %vm524, %v2341
      %2374 = vst.msk [vmem:[%s170 + $0xc8] sm:$0xff] %vm524, %v2342
      %2375 = vst.msk [vmem:[%s170 + $0xd0] sm:$0xff] %vm524, %v2343
      %2376 = vst.msk [vmem:[%s170 + $0xd8] sm:$0xff] %vm524, %v2344
      %2377 = vst.msk [vmem:[%s170 + $0xe0] sm:$0xff] %vm524, %v2345
      %2378 = vst.msk [vmem:[%s170 + $0xe8] sm:$0xff] %vm524, %v2346
      %2379 = vst.msk [vmem:[%s170 + $0xf0] sm:$0xff] %vm524, %v2347
      %2380 = vst.msk [vmem:[%s170 + $0xf8] sm:$0xff] %vm524, %v2348
      %p2381 = scmp.lt.s32.totalorder %s14, 1
      %s2382 = scalar_select %p2381, %s14, 1
      %s2383 = smul.addr %s2382, 32
      %s2384 = smul.addr %s2383, 8
      %s2385 = scalar_lea.vmem %s3, %s2384
      // Predicated region
      $region33: #{bottleneck_forward.4} parent=31 // pred_check
        %p2386 = pneg %p100
      $region34: #{bottleneck_forward.4} parent=31 // pred_check_branch
        %2388 = sbr.rel (%p2386) target = $region36
      $region35: #{bottleneck_forward.4} parent=31 // pred_region
        _
      $region36: #{bottleneck_forward.4} parent=31 // pred_fallthru
        _
    $region32: #{bottleneck_forward.4} parent=5 // pred_fallthru
      _
    %p2389 = scmp.le.s32.totalorder 2, %s9
    // Predicated region
    $region37: #{bottleneck_forward.4} parent=5 // pred_check
      %p2390 = pneg %p2389
    $region38: #{bottleneck_forward.4} parent=5 // pred_check_branch
      %2392 = sbr.rel (%p2390) target = $region40
    $region39: #{bottleneck_forward.4} parent=5 // pred_region
      %s2393 = ssub.s32 %s9, 2
      // Predicated region
      $region41: #{bottleneck_forward.4} parent=39 // pred_check
        %p2394 = pneg %p106
      $region42: #{bottleneck_forward.4} parent=39 // pred_check_branch
        %2396 = sbr.rel (%p2394) target = $region44
      $region43: #{bottleneck_forward.4} parent=39 // pred_region
        %p2397 = scmp.lt.s32.totalorder %s15, 1
        %s2398 = scalar_select %p2397, %s15, 1
        %s2399 = smul.addr %s2398, 32
        %s2400 = smul.addr %s2399, 8
        %s2401 = scalar_lea.vmem %s3, %s2400
      $region44: #{bottleneck_forward.4} parent=39 // pred_fallthru
        _
    $region40: #{bottleneck_forward.4} parent=5 // pred_fallthru
      _
  $region6: #{bottleneck_forward.4} parent=0 // loop_footer
    %s13 = sadd.s32 1, %s9
  $region7: #{bottleneck_forward.4} parent=0 // loop_footer_branch
    %8 = sbr.rel target = $region3
  $region8: #{bottleneck_forward.4} parent=0 // loop_exit
    _

</llo_original>
